<compile_context>
chip_gen: v7x
topology: tpu7x:2x2x1
jax: 0.10.0
libtpu: 0.0.40
codegen_flags: <defaults>
</compile_context>

<pallas_src>
import jax
import jax.numpy as jnp
from jax.experimental import pallas as pl
from jax.experimental.pallas import tpu as pltpu


def _round_up(v, m):
    return ((v + m - 1) // m) * m


def make_lstm_fc_kernel(num_layers, seq_len, batch, in_size, hidden_p, classes_p):
    """Kernel body. Layer/time structure is static → wavefront fully unrolled.

    TODO(synk): for large T replace the Python unroll with lax.fori_loop over time
    (unroll window 4-8) to bound vreg live ranges / compile time; add a leading
    batch-parallel grid axis (dimension_semantics=("parallel",)) once B grows, to
    use v7x's two TensorCores.
    """
    L, T, B, I, Hp, Cp = num_layers, seq_len, batch, in_size, hidden_p, classes_p

    def kernel(x_ref, w_ref, b_ref, out_ref):
        # Biases (tiny) loaded once; per-layer rows are (1, 4Hp) broadcasts.
        b_all = b_ref[...]                                   # (L+1, 4Hp) f32
        b_l = [b_all[l:l + 1, :] for l in range(L)]
        b_fc = b_all[L:L + 1, :Cp]                           # (1, Cp)

        # Hoisted layer-0 input projection for ALL timesteps: one big matmul.
        # Rows are time-major: row t*B + n  <->  (t, n).  Layer-0 bias folded in.
        gx0 = (jnp.dot(x_ref[...], w_ref[0, :I, :],
                       preferred_element_type=jnp.float32) + b_l[0])   # (T*B, 4Hp)

        # Recurrent state: h bf16 (MXU operand), c f32.
        # TODO(synk): for long sequences keep an f32 shadow of h to bound the
        # accumulated bf16 rounding of the recurrent state.
        h = [jnp.zeros((B, Hp), jnp.bfloat16) for _ in range(L)]
        c = [jnp.zeros((B, Hp), jnp.float32) for _ in range(L)]

        # Wavefront over diagonals d = t + l.  Within a diagonal, every active
        # layer reads only state produced at diagonal d-1, so the active layers
        # are independent and their EUP work is batched into one sigmoid + one
        # tanh push per diagonal.
        for d in range(T + L - 1):
            active = [l for l in range(L) if 0 <= d - l < T]
            pres = []
            for l in active:
                t = d - l
                if l == 0:
                    pre = gx0[t * B:(t + 1) * B, :]
                    if t > 0:                                 # h[0] == 0 at t == 0
                        pre = pre + jnp.dot(h[0], w_ref[0, Hp:2 * Hp, :],
                                            preferred_element_type=jnp.float32)
                elif t == 0:                                  # h[l], c[l] == 0
                    pre = (jnp.dot(h[l - 1], w_ref[l, :Hp, :],
                                   preferred_element_type=jnp.float32) + b_l[l])
                else:
                    # Single merged dot: [wih_l; whh_l] was concatenated host-side.
                    hin = jnp.concatenate([h[l - 1], h[l]], axis=1)   # (B, 2Hp)
                    pre = (jnp.dot(hin, w_ref[l],
                                   preferred_element_type=jnp.float32) + b_l[l])
                pres.append(pre)

            n = len(active)
            z = pres[0] if n == 1 else jnp.concatenate(pres, axis=0)  # (n*B, 4Hp)
            # One lane-dense sigmoid over all gates of all active layers.
            # g-gate columns were pre-scaled by 2, so tanh(z) = 2*sigmoid(2z) - 1.
            s = jax.nn.sigmoid(z)
            i_g = s[:, 0:Hp]
            f_g = s[:, Hp:2 * Hp]
            g_g = 2.0 * s[:, 2 * Hp:3 * Hp] - 1.0
            o_g = s[:, 3 * Hp:4 * Hp]

            c_st = (c[active[0]] if n == 1
                    else jnp.concatenate([c[l] for l in active], axis=0))
            c_new = f_g * c_st + i_g * g_g
            h_new = o_g * jnp.tanh(c_new)                    # one batched tanh
            for j, l in enumerate(active):
                c[l] = c_new[j * B:(j + 1) * B, :]
                h[l] = h_new[j * B:(j + 1) * B, :].astype(jnp.bfloat16)

        # fc(out[:, -1, :]) -> last timestep of the last layer.  Output is padded
        # to Cp lanes (unmasked vst); the wrapper slices back to num_classes.
        out_ref[...] = (jnp.dot(h[L - 1], w_ref[L, :Hp, :Cp],
                                preferred_element_type=jnp.float32) + b_fc)

    return kernel


def init_params(key, input_size, hidden_size, num_layers, num_classes):
    """Deterministic PyTorch-style init. LSTM weights stored pre-transposed as
    (in_features, 4H), gate order [i, f, g, o]; FC weight as (H, C)."""
    k_lstm = 1.0 / jnp.sqrt(hidden_size)
    layers = []
    for layer in range(num_layers):
        in_l = input_size if layer == 0 else hidden_size
        key, k1, k2, k3, k4 = jax.random.split(key, 5)
        wih = jax.random.uniform(k1, (in_l, 4 * hidden_size), jnp.float32,
                                 -k_lstm, k_lstm)
        whh = jax.random.uniform(k2, (hidden_size, 4 * hidden_size), jnp.float32,
                                 -k_lstm, k_lstm)
        b_ih = jax.random.uniform(k3, (1, 4 * hidden_size), jnp.float32,
                                  -k_lstm, k_lstm)
        b_hh = jax.random.uniform(k4, (1, 4 * hidden_size), jnp.float32,
                                  -k_lstm, k_lstm)
        layers.append((wih, whh, b_ih + b_hh))

    k_fc = 1.0 / jnp.sqrt(hidden_size)
    key, k5, k6 = jax.random.split(key, 3)
    wfc = jax.random.uniform(k5, (hidden_size, num_classes), jnp.float32,
                             -k_fc, k_fc)
    bfc = jax.random.uniform(k6, (1, num_classes), jnp.float32, -k_fc, k_fc)
    return {"layers": layers, "wfc": wfc, "bfc": bfc}


def pack_params(params, input_size, hidden_size, num_classes):
    """One-time host-side packing (hoisted out of the per-call path):
       - pad hidden/class dims to 128-lane multiples (gate blocks vreg-aligned)
       - scale g-gate columns by 2 (single-sigmoid trick)
       - merge wih/whh per layer into one (2Hp, 4Hp) block
       - pack everything into one bf16 weight slab + one f32 bias slab (3 DMAs)."""
    H, C, I = hidden_size, num_classes, input_size
    L = len(params["layers"])
    Hp = _round_up(H, 128)
    Cp = _round_up(C, 128)
    # Layer-0 input rows live above the whh block inside slab entry 0.
    assert I <= Hp, "pack_params assumes input_size <= padded hidden size"

    gscale = jnp.concatenate(
        [jnp.ones((1, 2 * H), jnp.float32),
         2.0 * jnp.ones((1, H), jnp.float32),
         jnp.ones((1, H), jnp.float32)], axis=1)

    def scatter_gates(m):
        # (rows, 4H) -> (rows, 4Hp): gate k occupies cols [k*Hp, k*Hp + H).
        rows = m.shape[0]
        out = jnp.zeros((rows, 4 * Hp), jnp.float32)
        for k in range(4):
            out = out.at[:, k * Hp:k * Hp + H].set(m[:, k * H:(k + 1) * H])
        return out

    w_slab = jnp.zeros((L + 1, 2 * Hp, 4 * Hp), jnp.float32)
    b_slab = jnp.zeros((L + 1, 4 * Hp), jnp.float32)
    for l, (wih, whh, bias) in enumerate(params["layers"]):
        in_l = wih.shape[0]
        w_slab = w_slab.at[l, :in_l, :].set(scatter_gates(wih * gscale))
        w_slab = w_slab.at[l, Hp:Hp + H, :].set(scatter_gates(whh * gscale))
        b_slab = b_slab.at[l, :].set(scatter_gates(bias * gscale)[0])
    # FC head packed into slab entry L (rows beyond H / cols beyond C are zero;
    # padded h units are exactly 0 so they contribute nothing).
    w_slab = w_slab.at[L, :H, :C].set(params["wfc"])
    b_slab = b_slab.at[L, :C].set(params["bfc"][0])

    meta = dict(L=L, I=I, H=H, Hp=Hp, C=C, Cp=Cp)
    return w_slab.astype(jnp.bfloat16), b_slab, meta


def make_rnn_forward(w_slab, b_slab, meta):
    """Returns a jitted forward(x) with all weight preprocessing done once."""
    L, I, Hp, C, Cp = meta["L"], meta["I"], meta["Hp"], meta["C"], meta["Cp"]

    @jax.jit
    def forward(x):  # x: (B, T, I) float32, batch_first — same as the nn.Module
        B, T, _ = x.shape
        # Time-major, flattened to 2D (row t*B + n) so the layer-0 input
        # projection is one (T*B, I) @ (I, 4Hp) matmul inside the kernel.
        x2d = jnp.transpose(x, (1, 0, 2)).reshape(T * B, I).astype(jnp.bfloat16)
        kernel = make_lstm_fc_kernel(L, T, B, I, Hp, Cp)
        out = pl.pallas_call(
            kernel,
            out_shape=jax.ShapeDtypeStruct((B, Cp), jnp.float32),
            in_specs=[pl.BlockSpec(memory_space=pltpu.MemorySpace.VMEM)] * 3,
            out_specs=pl.BlockSpec(memory_space=pltpu.MemorySpace.VMEM),
            # TODO(synk): at larger T*B*Hp (esp. v7x's 64 MiB VMEM) switch to a
            # T-grid with BlockSpec pipelining, keep gx0 in bf16, and set
            # pltpu.CompilerParams(vmem_limit_bytes=...) explicitly.
        )(x2d, w_slab, b_slab)
        return out[:, :C]

    return forward


def rnn_reference(x, params, hidden_size):
    """Pure-JAX f32 reference (same math as nn.LSTM batch_first + nn.Linear)."""
    B, T, _ = x.shape
    H = hidden_size
    seq = x
    h = None
    for (wih, whh, b) in params["layers"]:
        h = jnp.zeros((B, H), jnp.float32)
        c = jnp.zeros((B, H), jnp.float32)
        outs = []
        for t in range(T):
            gates = seq[:, t, :] @ wih + h @ whh + b
            i_g = jax.nn.sigmoid(gates[:, 0 * H:1 * H])
            f_g = jax.nn.sigmoid(gates[:, 1 * H:2 * H])
            g_g = jnp.tanh(gates[:, 2 * H:3 * H])
            o_g = jax.nn.sigmoid(gates[:, 3 * H:4 * H])
            c = f_g * c + i_g * g_g
            h = o_g * jnp.tanh(c)
            outs.append(h)
        seq = jnp.stack(outs, axis=1)
    return h @ params["wfc"] + params["bfc"]


if __name__ == "__main__":
    # Small shapes: batch=2, seq=8, input_size=16, hidden=32, layers=2, classes=10
    B, T, I = 2, 8, 16
    H, L, C = 32, 2, 10

    key = jax.random.PRNGKey(0)
    key, kx, kp = jax.random.split(key, 3)
    x = jax.random.normal(kx, (B, T, I), jnp.float32)
    params = init_params(kp, I, H, L, C)

    w_slab, b_slab, meta = pack_params(params, I, H, C)   # one-time packing
    forward = make_rnn_forward(w_slab, b_slab, meta)

    out = forward(x)
    out = jax.block_until_ready(out)

    ref = rnn_reference(x, params, H)
    assert out.shape == (B, C)
    # bf16 matmul operands (f32 accumulation) → loosened tolerance vs f32 ref.
    assert jnp.allclose(out, ref, rtol=5e-2, atol=5e-2), "mismatch vs reference"

    print("KERNEL_OK")
</pallas_src>

<mosaic_0001>
module attributes {stable_mosaic.version = 11 : i64} {
  func.func @kernel(%arg0: memref<16x16xbf16, #tpu.memory_space<vmem>>, %arg1: memref<3x256x512xbf16, #tpu.memory_space<vmem>>, %arg2: memref<3x512xf32, #tpu.memory_space<vmem>>, %arg3: memref<2x128xf32, #tpu.memory_space<vmem>>) attributes {dimension_semantics = [], scalar_prefetch = 0 : i64, scratch_operands = 0 : i64, tpu.core_type = #tpu.core_type<tc>} {
    %c0 = arith.constant 0 : index
    %c0_0 = arith.constant 0 : index
    %0 = vector.load %arg2[%c0, %c0_0] : memref<3x512xf32, #tpu.memory_space<vmem>>, vector<3x512xf32>
    %1 = vector.extract_strided_slice %0 {offsets = [0, 0], sizes = [1, 512], strides = [1, 1]} : vector<3x512xf32> to vector<1x512xf32>
    %2 = vector.extract_strided_slice %0 {offsets = [1, 0], sizes = [1, 512], strides = [1, 1]} : vector<3x512xf32> to vector<1x512xf32>
    %3 = vector.extract_strided_slice %0 {offsets = [2, 0], sizes = [1, 128], strides = [1, 1]} : vector<3x512xf32> to vector<1x128xf32>
    %c0_1 = arith.constant 0 : index
    %c0_2 = arith.constant 0 : index
    %4 = vector.load %arg0[%c0_1, %c0_2] : memref<16x16xbf16, #tpu.memory_space<vmem>>, vector<16x16xbf16>
    %c0_3 = arith.constant 0 : index
    %c0_4 = arith.constant 0 : index
    %c0_5 = arith.constant 0 : index
    %5 = vector.load %arg1[%c0_3, %c0_4, %c0_5] : memref<3x256x512xbf16, #tpu.memory_space<vmem>>, vector<1x16x512xbf16>
    %6 = vector.shape_cast %5 : vector<1x16x512xbf16> to vector<16x512xbf16>
    %cst = arith.constant dense<0.000000e+00> : vector<16x512xf32>
    %7 = tpu.matmul %4, %6, %cst {dimension_numbers = #tpu.dot_dimension_numbers<[1], [0], [0], [1], [0, 0, 1, 1], [], []>} : vector<16x16xbf16>, vector<16x512xbf16>, vector<16x512xf32> -> vector<16x512xf32>
    %8 = vector.broadcast %1 : vector<1x512xf32> to vector<16x512xf32>
    %9 = arith.addf %7, %8 : vector<16x512xf32>
    %cst_6 = arith.constant 0.000000e+00 : f32
    %10 = vector.broadcast %cst_6 : f32 to vector<2x128xf32>
    %cst_7 = arith.constant 0.000000e+00 : f32
    %11 = vector.broadcast %cst_7 : f32 to vector<2x128xf32>
    %12 = vector.extract_strided_slice %9 {offsets = [0, 0], sizes = [2, 512], strides = [1, 1]} : vector<16x512xf32> to vector<2x512xf32>
    %13 = arith.negf %12 : vector<2x512xf32>
    %14 = math.exp %13 : vector<2x512xf32>
    %cst_8 = arith.constant 1.000000e+00 : f32
    %15 = vector.broadcast %cst_8 : f32 to vector<2x512xf32>
    %16 = arith.addf %15, %14 : vector<2x512xf32>
    %17 = arith.divf %15, %16 : vector<2x512xf32>
    %18 = vector.extract_strided_slice %17 {offsets = [0, 0], sizes = [2, 128], strides = [1, 1]} : vector<2x512xf32> to vector<2x128xf32>
    %19 = vector.extract_strided_slice %17 {offsets = [0, 128], sizes = [2, 128], strides = [1, 1]} : vector<2x512xf32> to vector<2x128xf32>
    %20 = vector.extract_strided_slice %17 {offsets = [0, 256], sizes = [2, 128], strides = [1, 1]} : vector<2x512xf32> to vector<2x128xf32>
    %cst_9 = arith.constant 2.000000e+00 : f32
    %21 = vector.broadcast %cst_9 : f32 to vector<2x128xf32>
    %22 = arith.mulf %21, %20 : vector<2x128xf32>
    %cst_10 = arith.constant 1.000000e+00 : f32
    %23 = vector.broadcast %cst_10 : f32 to vector<2x128xf32>
    %24 = arith.subf %22, %23 : vector<2x128xf32>
    %25 = vector.extract_strided_slice %17 {offsets = [0, 384], sizes = [2, 128], strides = [1, 1]} : vector<2x512xf32> to vector<2x128xf32>
    %26 = arith.mulf %19, %10 : vector<2x128xf32>
    %27 = arith.mulf %18, %24 : vector<2x128xf32>
    %28 = arith.addf %26, %27 : vector<2x128xf32>
    %29 = math.tanh %28 : vector<2x128xf32>
    %30 = arith.mulf %25, %29 : vector<2x128xf32>
    %31 = arith.truncf %30 : vector<2x128xf32> to vector<2x128xbf16>
    %32 = vector.extract_strided_slice %9 {offsets = [2, 0], sizes = [2, 512], strides = [1, 1]} : vector<16x512xf32> to vector<2x512xf32>
    %c0_11 = arith.constant 0 : index
    %c128 = arith.constant 128 : index
    %c0_12 = arith.constant 0 : index
    %33 = vector.load %arg1[%c0_11, %c128, %c0_12] : memref<3x256x512xbf16, #tpu.memory_space<vmem>>, vector<1x128x512xbf16>
    %34 = vector.shape_cast %33 : vector<1x128x512xbf16> to vector<128x512xbf16>
    %cst_13 = arith.constant dense<0.000000e+00> : vector<2x512xf32>
    %35 = tpu.matmul %31, %34, %cst_13 {dimension_numbers = #tpu.dot_dimension_numbers<[1], [0], [0], [1], [0, 0, 1, 1], [], []>} : vector<2x128xbf16>, vector<128x512xbf16>, vector<2x512xf32> -> vector<2x512xf32>
    %36 = arith.addf %32, %35 : vector<2x512xf32>
    %c1 = arith.constant 1 : index
    %c0_14 = arith.constant 0 : index
    %c0_15 = arith.constant 0 : index
    %37 = vector.load %arg1[%c1, %c0_14, %c0_15] : memref<3x256x512xbf16, #tpu.memory_space<vmem>>, vector<1x128x512xbf16>
    %38 = vector.shape_cast %37 : vector<1x128x512xbf16> to vector<128x512xbf16>
    %cst_16 = arith.constant dense<0.000000e+00> : vector<2x512xf32>
    %39 = tpu.matmul %31, %38, %cst_16 {dimension_numbers = #tpu.dot_dimension_numbers<[1], [0], [0], [1], [0, 0, 1, 1], [], []>} : vector<2x128xbf16>, vector<128x512xbf16>, vector<2x512xf32> -> vector<2x512xf32>
    %40 = vector.broadcast %2 : vector<1x512xf32> to vector<2x512xf32>
    %41 = arith.addf %39, %40 : vector<2x512xf32>
    %42 = tpu.concatenate %36, %41 in 0 : vector<2x512xf32>, vector<2x512xf32> -> vector<4x512xf32>
    %43 = arith.negf %42 : vector<4x512xf32>
    %44 = math.exp %43 : vector<4x512xf32>
    %cst_17 = arith.constant 1.000000e+00 : f32
    %45 = vector.broadcast %cst_17 : f32 to vector<4x512xf32>
    %46 = arith.addf %45, %44 : vector<4x512xf32>
    %47 = arith.divf %45, %46 : vector<4x512xf32>
    %48 = vector.extract_strided_slice %47 {offsets = [0, 0], sizes = [4, 128], strides = [1, 1]} : vector<4x512xf32> to vector<4x128xf32>
    %49 = vector.extract_strided_slice %47 {offsets = [0, 128], sizes = [4, 128], strides = [1, 1]} : vector<4x512xf32> to vector<4x128xf32>
    %50 = vector.extract_strided_slice %47 {offsets = [0, 256], sizes = [4, 128], strides = [1, 1]} : vector<4x512xf32> to vector<4x128xf32>
    %cst_18 = arith.constant 2.000000e+00 : f32
    %51 = vector.broadcast %cst_18 : f32 to vector<4x128xf32>
    %52 = arith.mulf %51, %50 : vector<4x128xf32>
    %cst_19 = arith.constant 1.000000e+00 : f32
    %53 = vector.broadcast %cst_19 : f32 to vector<4x128xf32>
    %54 = arith.subf %52, %53 : vector<4x128xf32>
    %55 = vector.extract_strided_slice %47 {offsets = [0, 384], sizes = [4, 128], strides = [1, 1]} : vector<4x512xf32> to vector<4x128xf32>
    %56 = tpu.concatenate %28, %11 in 0 : vector<2x128xf32>, vector<2x128xf32> -> vector<4x128xf32>
    %57 = arith.mulf %49, %56 : vector<4x128xf32>
    %58 = arith.mulf %48, %54 : vector<4x128xf32>
    %59 = arith.addf %57, %58 : vector<4x128xf32>
    %60 = math.tanh %59 : vector<4x128xf32>
    %61 = arith.mulf %55, %60 : vector<4x128xf32>
    %62 = vector.extract_strided_slice %59 {offsets = [0, 0], sizes = [2, 128], strides = [1, 1]} : vector<4x128xf32> to vector<2x128xf32>
    %63 = vector.extract_strided_slice %61 {offsets = [0, 0], sizes = [2, 128], strides = [1, 1]} : vector<4x128xf32> to vector<2x128xf32>
    %64 = arith.truncf %63 : vector<2x128xf32> to vector<2x128xbf16>
    %65 = vector.extract_strided_slice %59 {offsets = [2, 0], sizes = [2, 128], strides = [1, 1]} : vector<4x128xf32> to vector<2x128xf32>
    %66 = vector.extract_strided_slice %61 {offsets = [2, 0], sizes = [2, 128], strides = [1, 1]} : vector<4x128xf32> to vector<2x128xf32>
    %67 = arith.truncf %66 : vector<2x128xf32> to vector<2x128xbf16>
    %68 = vector.extract_strided_slice %9 {offsets = [4, 0], sizes = [2, 512], strides = [1, 1]} : vector<16x512xf32> to vector<2x512xf32>
    %c0_20 = arith.constant 0 : index
    %c128_21 = arith.constant 128 : index
    %c0_22 = arith.constant 0 : index
    %69 = vector.load %arg1[%c0_20, %c128_21, %c0_22] : memref<3x256x512xbf16, #tpu.memory_space<vmem>>, vector<1x128x512xbf16>
    %70 = vector.shape_cast %69 : vector<1x128x512xbf16> to vector<128x512xbf16>
    %cst_23 = arith.constant dense<0.000000e+00> : vector<2x512xf32>
    %71 = tpu.matmul %64, %70, %cst_23 {dimension_numbers = #tpu.dot_dimension_numbers<[1], [0], [0], [1], [0, 0, 1, 1], [], []>} : vector<2x128xbf16>, vector<128x512xbf16>, vector<2x512xf32> -> vector<2x512xf32>
    %72 = arith.addf %68, %71 : vector<2x512xf32>
    %73 = tpu.concatenate %64, %67 in 1 : vector<2x128xbf16>, vector<2x128xbf16> -> vector<2x256xbf16>
    %c1_24 = arith.constant 1 : index
    %c0_25 = arith.constant 0 : index
    %c0_26 = arith.constant 0 : index
    %74 = vector.load %arg1[%c1_24, %c0_25, %c0_26] : memref<3x256x512xbf16, #tpu.memory_space<vmem>>, vector<1x256x512xbf16>
    %75 = vector.shape_cast %74 : vector<1x256x512xbf16> to vector<256x512xbf16>
    %cst_27 = arith.constant dense<0.000000e+00> : vector<2x512xf32>
    %76 = tpu.matmul %73, %75, %cst_27 {dimension_numbers = #tpu.dot_dimension_numbers<[1], [0], [0], [1], [0, 0, 1, 1], [], []>} : vector<2x256xbf16>, vector<256x512xbf16>, vector<2x512xf32> -> vector<2x512xf32>
    %77 = vector.broadcast %2 : vector<1x512xf32> to vector<2x512xf32>
    %78 = arith.addf %76, %77 : vector<2x512xf32>
    %79 = tpu.concatenate %72, %78 in 0 : vector<2x512xf32>, vector<2x512xf32> -> vector<4x512xf32>
    %80 = arith.negf %79 : vector<4x512xf32>
    %81 = math.exp %80 : vector<4x512xf32>
    %cst_28 = arith.constant 1.000000e+00 : f32
    %82 = vector.broadcast %cst_28 : f32 to vector<4x512xf32>
    %83 = arith.addf %82, %81 : vector<4x512xf32>
    %84 = arith.divf %82, %83 : vector<4x512xf32>
    %85 = vector.extract_strided_slice %84 {offsets = [0, 0], sizes = [4, 128], strides = [1, 1]} : vector<4x512xf32> to vector<4x128xf32>
    %86 = vector.extract_strided_slice %84 {offsets = [0, 128], sizes = [4, 128], strides = [1, 1]} : vector<4x512xf32> to vector<4x128xf32>
    %87 = vector.extract_strided_slice %84 {offsets = [0, 256], sizes = [4, 128], strides = [1, 1]} : vector<4x512xf32> to vector<4x128xf32>
    %cst_29 = arith.constant 2.000000e+00 : f32
    %88 = vector.broadcast %cst_29 : f32 to vector<4x128xf32>
    %89 = arith.mulf %88, %87 : vector<4x128xf32>
    %cst_30 = arith.constant 1.000000e+00 : f32
    %90 = vector.broadcast %cst_30 : f32 to vector<4x128xf32>
    %91 = arith.subf %89, %90 : vector<4x128xf32>
    %92 = vector.extract_strided_slice %84 {offsets = [0, 384], sizes = [4, 128], strides = [1, 1]} : vector<4x512xf32> to vector<4x128xf32>
    %93 = tpu.concatenate %62, %65 in 0 : vector<2x128xf32>, vector<2x128xf32> -> vector<4x128xf32>
    %94 = arith.mulf %86, %93 : vector<4x128xf32>
    %95 = arith.mulf %85, %91 : vector<4x128xf32>
    %96 = arith.addf %94, %95 : vector<4x128xf32>
    %97 = math.tanh %96 : vector<4x128xf32>
    %98 = arith.mulf %92, %97 : vector<4x128xf32>
    %99 = vector.extract_strided_slice %96 {offsets = [0, 0], sizes = [2, 128], strides = [1, 1]} : vector<4x128xf32> to vector<2x128xf32>
    %100 = vector.extract_strided_slice %98 {offsets = [0, 0], sizes = [2, 128], strides = [1, 1]} : vector<4x128xf32> to vector<2x128xf32>
    %101 = arith.truncf %100 : vector<2x128xf32> to vector<2x128xbf16>
    %102 = vector.extract_strided_slice %96 {offsets = [2, 0], sizes = [2, 128], strides = [1, 1]} : vector<4x128xf32> to vector<2x128xf32>
    %103 = vector.extract_strided_slice %98 {offsets = [2, 0], sizes = [2, 128], strides = [1, 1]} : vector<4x128xf32> to vector<2x128xf32>
    %104 = arith.truncf %103 : vector<2x128xf32> to vector<2x128xbf16>
    %105 = vector.extract_strided_slice %9 {offsets = [6, 0], sizes = [2, 512], strides = [1, 1]} : vector<16x512xf32> to vector<2x512xf32>
    %c0_31 = arith.constant 0 : index
    %c128_32 = arith.constant 128 : index
    %c0_33 = arith.constant 0 : index
    %106 = vector.load %arg1[%c0_31, %c128_32, %c0_33] : memref<3x256x512xbf16, #tpu.memory_space<vmem>>, vector<1x128x512xbf16>
    %107 = vector.shape_cast %106 : vector<1x128x512xbf16> to vector<128x512xbf16>
    %cst_34 = arith.constant dense<0.000000e+00> : vector<2x512xf32>
    %108 = tpu.matmul %101, %107, %cst_34 {dimension_numbers = #tpu.dot_dimension_numbers<[1], [0], [0], [1], [0, 0, 1, 1], [], []>} : vector<2x128xbf16>, vector<128x512xbf16>, vector<2x512xf32> -> vector<2x512xf32>
    %109 = arith.addf %105, %108 : vector<2x512xf32>
    %110 = tpu.concatenate %101, %104 in 1 : vector<2x128xbf16>, vector<2x128xbf16> -> vector<2x256xbf16>
    %c1_35 = arith.constant 1 : index
    %c0_36 = arith.constant 0 : index
    %c0_37 = arith.constant 0 : index
    %111 = vector.load %arg1[%c1_35, %c0_36, %c0_37] : memref<3x256x512xbf16, #tpu.memory_space<vmem>>, vector<1x256x512xbf16>
    %112 = vector.shape_cast %111 : vector<1x256x512xbf16> to vector<256x512xbf16>
    %cst_38 = arith.constant dense<0.000000e+00> : vector<2x512xf32>
    %113 = tpu.matmul %110, %112, %cst_38 {dimension_numbers = #tpu.dot_dimension_numbers<[1], [0], [0], [1], [0, 0, 1, 1], [], []>} : vector<2x256xbf16>, vector<256x512xbf16>, vector<2x512xf32> -> vector<2x512xf32>
    %114 = vector.broadcast %2 : vector<1x512xf32> to vector<2x512xf32>
    %115 = arith.addf %113, %114 : vector<2x512xf32>
    %116 = tpu.concatenate %109, %115 in 0 : vector<2x512xf32>, vector<2x512xf32> -> vector<4x512xf32>
    %117 = arith.negf %116 : vector<4x512xf32>
    %118 = math.exp %117 : vector<4x512xf32>
    %cst_39 = arith.constant 1.000000e+00 : f32
    %119 = vector.broadcast %cst_39 : f32 to vector<4x512xf32>
    %120 = arith.addf %119, %118 : vector<4x512xf32>
    %121 = arith.divf %119, %120 : vector<4x512xf32>
    %122 = vector.extract_strided_slice %121 {offsets = [0, 0], sizes = [4, 128], strides = [1, 1]} : vector<4x512xf32> to vector<4x128xf32>
    %123 = vector.extract_strided_slice %121 {offsets = [0, 128], sizes = [4, 128], strides = [1, 1]} : vector<4x512xf32> to vector<4x128xf32>
    %124 = vector.extract_strided_slice %121 {offsets = [0, 256], sizes = [4, 128], strides = [1, 1]} : vector<4x512xf32> to vector<4x128xf32>
    %cst_40 = arith.constant 2.000000e+00 : f32
    %125 = vector.broadcast %cst_40 : f32 to vector<4x128xf32>
    %126 = arith.mulf %125, %124 : vector<4x128xf32>
    %cst_41 = arith.constant 1.000000e+00 : f32
    %127 = vector.broadcast %cst_41 : f32 to vector<4x128xf32>
    %128 = arith.subf %126, %127 : vector<4x128xf32>
    %129 = vector.extract_strided_slice %121 {offsets = [0, 384], sizes = [4, 128], strides = [1, 1]} : vector<4x512xf32> to vector<4x128xf32>
    %130 = tpu.concatenate %99, %102 in 0 : vector<2x128xf32>, vector<2x128xf32> -> vector<4x128xf32>
    %131 = arith.mulf %123, %130 : vector<4x128xf32>
    %132 = arith.mulf %122, %128 : vector<4x128xf32>
    %133 = arith.addf %131, %132 : vector<4x128xf32>
    %134 = math.tanh %133 : vector<4x128xf32>
    %135 = arith.mulf %129, %134 : vector<4x128xf32>
    %136 = vector.extract_strided_slice %133 {offsets = [0, 0], sizes = [2, 128], strides = [1, 1]} : vector<4x128xf32> to vector<2x128xf32>
    %137 = vector.extract_strided_slice %135 {offsets = [0, 0], sizes = [2, 128], strides = [1, 1]} : vector<4x128xf32> to vector<2x128xf32>
    %138 = arith.truncf %137 : vector<2x128xf32> to vector<2x128xbf16>
    %139 = vector.extract_strided_slice %133 {offsets = [2, 0], sizes = [2, 128], strides = [1, 1]} : vector<4x128xf32> to vector<2x128xf32>
    %140 = vector.extract_strided_slice %135 {offsets = [2, 0], sizes = [2, 128], strides = [1, 1]} : vector<4x128xf32> to vector<2x128xf32>
    %141 = arith.truncf %140 : vector<2x128xf32> to vector<2x128xbf16>
    %142 = vector.extract_strided_slice %9 {offsets = [8, 0], sizes = [2, 512], strides = [1, 1]} : vector<16x512xf32> to vector<2x512xf32>
    %c0_42 = arith.constant 0 : index
    %c128_43 = arith.constant 128 : index
    %c0_44 = arith.constant 0 : index
    %143 = vector.load %arg1[%c0_42, %c128_43, %c0_44] : memref<3x256x512xbf16, #tpu.memory_space<vmem>>, vector<1x128x512xbf16>
    %144 = vector.shape_cast %143 : vector<1x128x512xbf16> to vector<128x512xbf16>
    %cst_45 = arith.constant dense<0.000000e+00> : vector<2x512xf32>
    %145 = tpu.matmul %138, %144, %cst_45 {dimension_numbers = #tpu.dot_dimension_numbers<[1], [0], [0], [1], [0, 0, 1, 1], [], []>} : vector<2x128xbf16>, vector<128x512xbf16>, vector<2x512xf32> -> vector<2x512xf32>
    %146 = arith.addf %142, %145 : vector<2x512xf32>
    %147 = tpu.concatenate %138, %141 in 1 : vector<2x128xbf16>, vector<2x128xbf16> -> vector<2x256xbf16>
    %c1_46 = arith.constant 1 : index
    %c0_47 = arith.constant 0 : index
    %c0_48 = arith.constant 0 : index
    %148 = vector.load %arg1[%c1_46, %c0_47, %c0_48] : memref<3x256x512xbf16, #tpu.memory_space<vmem>>, vector<1x256x512xbf16>
    %149 = vector.shape_cast %148 : vector<1x256x512xbf16> to vector<256x512xbf16>
    %cst_49 = arith.constant dense<0.000000e+00> : vector<2x512xf32>
    %150 = tpu.matmul %147, %149, %cst_49 {dimension_numbers = #tpu.dot_dimension_numbers<[1], [0], [0], [1], [0, 0, 1, 1], [], []>} : vector<2x256xbf16>, vector<256x512xbf16>, vector<2x512xf32> -> vector<2x512xf32>
    %151 = vector.broadcast %2 : vector<1x512xf32> to vector<2x512xf32>
    %152 = arith.addf %150, %151 : vector<2x512xf32>
    %153 = tpu.concatenate %146, %152 in 0 : vector<2x512xf32>, vector<2x512xf32> -> vector<4x512xf32>
    %154 = arith.negf %153 : vector<4x512xf32>
    %155 = math.exp %154 : vector<4x512xf32>
    %cst_50 = arith.constant 1.000000e+00 : f32
    %156 = vector.broadcast %cst_50 : f32 to vector<4x512xf32>
    %157 = arith.addf %156, %155 : vector<4x512xf32>
    %158 = arith.divf %156, %157 : vector<4x512xf32>
    %159 = vector.extract_strided_slice %158 {offsets = [0, 0], sizes = [4, 128], strides = [1, 1]} : vector<4x512xf32> to vector<4x128xf32>
    %160 = vector.extract_strided_slice %158 {offsets = [0, 128], sizes = [4, 128], strides = [1, 1]} : vector<4x512xf32> to vector<4x128xf32>
    %161 = vector.extract_strided_slice %158 {offsets = [0, 256], sizes = [4, 128], strides = [1, 1]} : vector<4x512xf32> to vector<4x128xf32>
    %cst_51 = arith.constant 2.000000e+00 : f32
    %162 = vector.broadcast %cst_51 : f32 to vector<4x128xf32>
    %163 = arith.mulf %162, %161 : vector<4x128xf32>
    %cst_52 = arith.constant 1.000000e+00 : f32
    %164 = vector.broadcast %cst_52 : f32 to vector<4x128xf32>
    %165 = arith.subf %163, %164 : vector<4x128xf32>
    %166 = vector.extract_strided_slice %158 {offsets = [0, 384], sizes = [4, 128], strides = [1, 1]} : vector<4x512xf32> to vector<4x128xf32>
    %167 = tpu.concatenate %136, %139 in 0 : vector<2x128xf32>, vector<2x128xf32> -> vector<4x128xf32>
    %168 = arith.mulf %160, %167 : vector<4x128xf32>
    %169 = arith.mulf %159, %165 : vector<4x128xf32>
    %170 = arith.addf %168, %169 : vector<4x128xf32>
    %171 = math.tanh %170 : vector<4x128xf32>
    %172 = arith.mulf %166, %171 : vector<4x128xf32>
    %173 = vector.extract_strided_slice %170 {offsets = [0, 0], sizes = [2, 128], strides = [1, 1]} : vector<4x128xf32> to vector<2x128xf32>
    %174 = vector.extract_strided_slice %172 {offsets = [0, 0], sizes = [2, 128], strides = [1, 1]} : vector<4x128xf32> to vector<2x128xf32>
    %175 = arith.truncf %174 : vector<2x128xf32> to vector<2x128xbf16>
    %176 = vector.extract_strided_slice %170 {offsets = [2, 0], sizes = [2, 128], strides = [1, 1]} : vector<4x128xf32> to vector<2x128xf32>
    %177 = vector.extract_strided_slice %172 {offsets = [2, 0], sizes = [2, 128], strides = [1, 1]} : vector<4x128xf32> to vector<2x128xf32>
    %178 = arith.truncf %177 : vector<2x128xf32> to vector<2x128xbf16>
    %179 = vector.extract_strided_slice %9 {offsets = [10, 0], sizes = [2, 512], strides = [1, 1]} : vector<16x512xf32> to vector<2x512xf32>
    %c0_53 = arith.constant 0 : index
    %c128_54 = arith.constant 128 : index
    %c0_55 = arith.constant 0 : index
    %180 = vector.load %arg1[%c0_53, %c128_54, %c0_55] : memref<3x256x512xbf16, #tpu.memory_space<vmem>>, vector<1x128x512xbf16>
    %181 = vector.shape_cast %180 : vector<1x128x512xbf16> to vector<128x512xbf16>
    %cst_56 = arith.constant dense<0.000000e+00> : vector<2x512xf32>
    %182 = tpu.matmul %175, %181, %cst_56 {dimension_numbers = #tpu.dot_dimension_numbers<[1], [0], [0], [1], [0, 0, 1, 1], [], []>} : vector<2x128xbf16>, vector<128x512xbf16>, vector<2x512xf32> -> vector<2x512xf32>
    %183 = arith.addf %179, %182 : vector<2x512xf32>
    %184 = tpu.concatenate %175, %178 in 1 : vector<2x128xbf16>, vector<2x128xbf16> -> vector<2x256xbf16>
    %c1_57 = arith.constant 1 : index
    %c0_58 = arith.constant 0 : index
    %c0_59 = arith.constant 0 : index
    %185 = vector.load %arg1[%c1_57, %c0_58, %c0_59] : memref<3x256x512xbf16, #tpu.memory_space<vmem>>, vector<1x256x512xbf16>
    %186 = vector.shape_cast %185 : vector<1x256x512xbf16> to vector<256x512xbf16>
    %cst_60 = arith.constant dense<0.000000e+00> : vector<2x512xf32>
    %187 = tpu.matmul %184, %186, %cst_60 {dimension_numbers = #tpu.dot_dimension_numbers<[1], [0], [0], [1], [0, 0, 1, 1], [], []>} : vector<2x256xbf16>, vector<256x512xbf16>, vector<2x512xf32> -> vector<2x512xf32>
    %188 = vector.broadcast %2 : vector<1x512xf32> to vector<2x512xf32>
    %189 = arith.addf %187, %188 : vector<2x512xf32>
    %190 = tpu.concatenate %183, %189 in 0 : vector<2x512xf32>, vector<2x512xf32> -> vector<4x512xf32>
    %191 = arith.negf %190 : vector<4x512xf32>
    %192 = math.exp %191 : vector<4x512xf32>
    %cst_61 = arith.constant 1.000000e+00 : f32
    %193 = vector.broadcast %cst_61 : f32 to vector<4x512xf32>
    %194 = arith.addf %193, %192 : vector<4x512xf32>
    %195 = arith.divf %193, %194 : vector<4x512xf32>
    %196 = vector.extract_strided_slice %195 {offsets = [0, 0], sizes = [4, 128], strides = [1, 1]} : vector<4x512xf32> to vector<4x128xf32>
    %197 = vector.extract_strided_slice %195 {offsets = [0, 128], sizes = [4, 128], strides = [1, 1]} : vector<4x512xf32> to vector<4x128xf32>
    %198 = vector.extract_strided_slice %195 {offsets = [0, 256], sizes = [4, 128], strides = [1, 1]} : vector<4x512xf32> to vector<4x128xf32>
    %cst_62 = arith.constant 2.000000e+00 : f32
    %199 = vector.broadcast %cst_62 : f32 to vector<4x128xf32>
    %200 = arith.mulf %199, %198 : vector<4x128xf32>
    %cst_63 = arith.constant 1.000000e+00 : f32
    %201 = vector.broadcast %cst_63 : f32 to vector<4x128xf32>
    %202 = arith.subf %200, %201 : vector<4x128xf32>
    %203 = vector.extract_strided_slice %195 {offsets = [0, 384], sizes = [4, 128], strides = [1, 1]} : vector<4x512xf32> to vector<4x128xf32>
    %204 = tpu.concatenate %173, %176 in 0 : vector<2x128xf32>, vector<2x128xf32> -> vector<4x128xf32>
    %205 = arith.mulf %197, %204 : vector<4x128xf32>
    %206 = arith.mulf %196, %202 : vector<4x128xf32>
    %207 = arith.addf %205, %206 : vector<4x128xf32>
    %208 = math.tanh %207 : vector<4x128xf32>
    %209 = arith.mulf %203, %208 : vector<4x128xf32>
    %210 = vector.extract_strided_slice %207 {offsets = [0, 0], sizes = [2, 128], strides = [1, 1]} : vector<4x128xf32> to vector<2x128xf32>
    %211 = vector.extract_strided_slice %209 {offsets = [0, 0], sizes = [2, 128], strides = [1, 1]} : vector<4x128xf32> to vector<2x128xf32>
    %212 = arith.truncf %211 : vector<2x128xf32> to vector<2x128xbf16>
    %213 = vector.extract_strided_slice %207 {offsets = [2, 0], sizes = [2, 128], strides = [1, 1]} : vector<4x128xf32> to vector<2x128xf32>
    %214 = vector.extract_strided_slice %209 {offsets = [2, 0], sizes = [2, 128], strides = [1, 1]} : vector<4x128xf32> to vector<2x128xf32>
    %215 = arith.truncf %214 : vector<2x128xf32> to vector<2x128xbf16>
    %216 = vector.extract_strided_slice %9 {offsets = [12, 0], sizes = [2, 512], strides = [1, 1]} : vector<16x512xf32> to vector<2x512xf32>
    %c0_64 = arith.constant 0 : index
    %c128_65 = arith.constant 128 : index
    %c0_66 = arith.constant 0 : index
    %217 = vector.load %arg1[%c0_64, %c128_65, %c0_66] : memref<3x256x512xbf16, #tpu.memory_space<vmem>>, vector<1x128x512xbf16>
    %218 = vector.shape_cast %217 : vector<1x128x512xbf16> to vector<128x512xbf16>
    %cst_67 = arith.constant dense<0.000000e+00> : vector<2x512xf32>
    %219 = tpu.matmul %212, %218, %cst_67 {dimension_numbers = #tpu.dot_dimension_numbers<[1], [0], [0], [1], [0, 0, 1, 1], [], []>} : vector<2x128xbf16>, vector<128x512xbf16>, vector<2x512xf32> -> vector<2x512xf32>
    %220 = arith.addf %216, %219 : vector<2x512xf32>
    %221 = tpu.concatenate %212, %215 in 1 : vector<2x128xbf16>, vector<2x128xbf16> -> vector<2x256xbf16>
    %c1_68 = arith.constant 1 : index
    %c0_69 = arith.constant 0 : index
    %c0_70 = arith.constant 0 : index
    %222 = vector.load %arg1[%c1_68, %c0_69, %c0_70] : memref<3x256x512xbf16, #tpu.memory_space<vmem>>, vector<1x256x512xbf16>
    %223 = vector.shape_cast %222 : vector<1x256x512xbf16> to vector<256x512xbf16>
    %cst_71 = arith.constant dense<0.000000e+00> : vector<2x512xf32>
    %224 = tpu.matmul %221, %223, %cst_71 {dimension_numbers = #tpu.dot_dimension_numbers<[1], [0], [0], [1], [0, 0, 1, 1], [], []>} : vector<2x256xbf16>, vector<256x512xbf16>, vector<2x512xf32> -> vector<2x512xf32>
    %225 = vector.broadcast %2 : vector<1x512xf32> to vector<2x512xf32>
    %226 = arith.addf %224, %225 : vector<2x512xf32>
    %227 = tpu.concatenate %220, %226 in 0 : vector<2x512xf32>, vector<2x512xf32> -> vector<4x512xf32>
    %228 = arith.negf %227 : vector<4x512xf32>
    %229 = math.exp %228 : vector<4x512xf32>
    %cst_72 = arith.constant 1.000000e+00 : f32
    %230 = vector.broadcast %cst_72 : f32 to vector<4x512xf32>
    %231 = arith.addf %230, %229 : vector<4x512xf32>
    %232 = arith.divf %230, %231 : vector<4x512xf32>
    %233 = vector.extract_strided_slice %232 {offsets = [0, 0], sizes = [4, 128], strides = [1, 1]} : vector<4x512xf32> to vector<4x128xf32>
    %234 = vector.extract_strided_slice %232 {offsets = [0, 128], sizes = [4, 128], strides = [1, 1]} : vector<4x512xf32> to vector<4x128xf32>
    %235 = vector.extract_strided_slice %232 {offsets = [0, 256], sizes = [4, 128], strides = [1, 1]} : vector<4x512xf32> to vector<4x128xf32>
    %cst_73 = arith.constant 2.000000e+00 : f32
    %236 = vector.broadcast %cst_73 : f32 to vector<4x128xf32>
    %237 = arith.mulf %236, %235 : vector<4x128xf32>
    %cst_74 = arith.constant 1.000000e+00 : f32
    %238 = vector.broadcast %cst_74 : f32 to vector<4x128xf32>
    %239 = arith.subf %237, %238 : vector<4x128xf32>
    %240 = vector.extract_strided_slice %232 {offsets = [0, 384], sizes = [4, 128], strides = [1, 1]} : vector<4x512xf32> to vector<4x128xf32>
    %241 = tpu.concatenate %210, %213 in 0 : vector<2x128xf32>, vector<2x128xf32> -> vector<4x128xf32>
    %242 = arith.mulf %234, %241 : vector<4x128xf32>
    %243 = arith.mulf %233, %239 : vector<4x128xf32>
    %244 = arith.addf %242, %243 : vector<4x128xf32>
    %245 = math.tanh %244 : vector<4x128xf32>
    %246 = arith.mulf %240, %245 : vector<4x128xf32>
    %247 = vector.extract_strided_slice %244 {offsets = [0, 0], sizes = [2, 128], strides = [1, 1]} : vector<4x128xf32> to vector<2x128xf32>
    %248 = vector.extract_strided_slice %246 {offsets = [0, 0], sizes = [2, 128], strides = [1, 1]} : vector<4x128xf32> to vector<2x128xf32>
    %249 = arith.truncf %248 : vector<2x128xf32> to vector<2x128xbf16>
    %250 = vector.extract_strided_slice %244 {offsets = [2, 0], sizes = [2, 128], strides = [1, 1]} : vector<4x128xf32> to vector<2x128xf32>
    %251 = vector.extract_strided_slice %246 {offsets = [2, 0], sizes = [2, 128], strides = [1, 1]} : vector<4x128xf32> to vector<2x128xf32>
    %252 = arith.truncf %251 : vector<2x128xf32> to vector<2x128xbf16>
    %253 = vector.extract_strided_slice %9 {offsets = [14, 0], sizes = [2, 512], strides = [1, 1]} : vector<16x512xf32> to vector<2x512xf32>
    %c0_75 = arith.constant 0 : index
    %c128_76 = arith.constant 128 : index
    %c0_77 = arith.constant 0 : index
    %254 = vector.load %arg1[%c0_75, %c128_76, %c0_77] : memref<3x256x512xbf16, #tpu.memory_space<vmem>>, vector<1x128x512xbf16>
    %255 = vector.shape_cast %254 : vector<1x128x512xbf16> to vector<128x512xbf16>
    %cst_78 = arith.constant dense<0.000000e+00> : vector<2x512xf32>
    %256 = tpu.matmul %249, %255, %cst_78 {dimension_numbers = #tpu.dot_dimension_numbers<[1], [0], [0], [1], [0, 0, 1, 1], [], []>} : vector<2x128xbf16>, vector<128x512xbf16>, vector<2x512xf32> -> vector<2x512xf32>
    %257 = arith.addf %253, %256 : vector<2x512xf32>
    %258 = tpu.concatenate %249, %252 in 1 : vector<2x128xbf16>, vector<2x128xbf16> -> vector<2x256xbf16>
    %c1_79 = arith.constant 1 : index
    %c0_80 = arith.constant 0 : index
    %c0_81 = arith.constant 0 : index
    %259 = vector.load %arg1[%c1_79, %c0_80, %c0_81] : memref<3x256x512xbf16, #tpu.memory_space<vmem>>, vector<1x256x512xbf16>
    %260 = vector.shape_cast %259 : vector<1x256x512xbf16> to vector<256x512xbf16>
    %cst_82 = arith.constant dense<0.000000e+00> : vector<2x512xf32>
    %261 = tpu.matmul %258, %260, %cst_82 {dimension_numbers = #tpu.dot_dimension_numbers<[1], [0], [0], [1], [0, 0, 1, 1], [], []>} : vector<2x256xbf16>, vector<256x512xbf16>, vector<2x512xf32> -> vector<2x512xf32>
    %262 = vector.broadcast %2 : vector<1x512xf32> to vector<2x512xf32>
    %263 = arith.addf %261, %262 : vector<2x512xf32>
    %264 = tpu.concatenate %257, %263 in 0 : vector<2x512xf32>, vector<2x512xf32> -> vector<4x512xf32>
    %265 = arith.negf %264 : vector<4x512xf32>
    %266 = math.exp %265 : vector<4x512xf32>
    %cst_83 = arith.constant 1.000000e+00 : f32
    %267 = vector.broadcast %cst_83 : f32 to vector<4x512xf32>
    %268 = arith.addf %267, %266 : vector<4x512xf32>
    %269 = arith.divf %267, %268 : vector<4x512xf32>
    %270 = vector.extract_strided_slice %269 {offsets = [0, 0], sizes = [4, 128], strides = [1, 1]} : vector<4x512xf32> to vector<4x128xf32>
    %271 = vector.extract_strided_slice %269 {offsets = [0, 128], sizes = [4, 128], strides = [1, 1]} : vector<4x512xf32> to vector<4x128xf32>
    %272 = vector.extract_strided_slice %269 {offsets = [0, 256], sizes = [4, 128], strides = [1, 1]} : vector<4x512xf32> to vector<4x128xf32>
    %cst_84 = arith.constant 2.000000e+00 : f32
    %273 = vector.broadcast %cst_84 : f32 to vector<4x128xf32>
    %274 = arith.mulf %273, %272 : vector<4x128xf32>
    %cst_85 = arith.constant 1.000000e+00 : f32
    %275 = vector.broadcast %cst_85 : f32 to vector<4x128xf32>
    %276 = arith.subf %274, %275 : vector<4x128xf32>
    %277 = vector.extract_strided_slice %269 {offsets = [0, 384], sizes = [4, 128], strides = [1, 1]} : vector<4x512xf32> to vector<4x128xf32>
    %278 = tpu.concatenate %247, %250 in 0 : vector<2x128xf32>, vector<2x128xf32> -> vector<4x128xf32>
    %279 = arith.mulf %271, %278 : vector<4x128xf32>
    %280 = arith.mulf %270, %276 : vector<4x128xf32>
    %281 = arith.addf %279, %280 : vector<4x128xf32>
    %282 = math.tanh %281 : vector<4x128xf32>
    %283 = arith.mulf %277, %282 : vector<4x128xf32>
    %284 = vector.extract_strided_slice %283 {offsets = [0, 0], sizes = [2, 128], strides = [1, 1]} : vector<4x128xf32> to vector<2x128xf32>
    %285 = arith.truncf %284 : vector<2x128xf32> to vector<2x128xbf16>
    %286 = vector.extract_strided_slice %281 {offsets = [2, 0], sizes = [2, 128], strides = [1, 1]} : vector<4x128xf32> to vector<2x128xf32>
    %287 = vector.extract_strided_slice %283 {offsets = [2, 0], sizes = [2, 128], strides = [1, 1]} : vector<4x128xf32> to vector<2x128xf32>
    %288 = arith.truncf %287 : vector<2x128xf32> to vector<2x128xbf16>
    %289 = tpu.concatenate %285, %288 in 1 : vector<2x128xbf16>, vector<2x128xbf16> -> vector<2x256xbf16>
    %c1_86 = arith.constant 1 : index
    %c0_87 = arith.constant 0 : index
    %c0_88 = arith.constant 0 : index
    %290 = vector.load %arg1[%c1_86, %c0_87, %c0_88] : memref<3x256x512xbf16, #tpu.memory_space<vmem>>, vector<1x256x512xbf16>
    %291 = vector.shape_cast %290 : vector<1x256x512xbf16> to vector<256x512xbf16>
    %cst_89 = arith.constant dense<0.000000e+00> : vector<2x512xf32>
    %292 = tpu.matmul %289, %291, %cst_89 {dimension_numbers = #tpu.dot_dimension_numbers<[1], [0], [0], [1], [0, 0, 1, 1], [], []>} : vector<2x256xbf16>, vector<256x512xbf16>, vector<2x512xf32> -> vector<2x512xf32>
    %293 = vector.broadcast %2 : vector<1x512xf32> to vector<2x512xf32>
    %294 = arith.addf %292, %293 : vector<2x512xf32>
    %295 = arith.negf %294 : vector<2x512xf32>
    %296 = math.exp %295 : vector<2x512xf32>
    %cst_90 = arith.constant 1.000000e+00 : f32
    %297 = vector.broadcast %cst_90 : f32 to vector<2x512xf32>
    %298 = arith.addf %297, %296 : vector<2x512xf32>
    %299 = arith.divf %297, %298 : vector<2x512xf32>
    %300 = vector.extract_strided_slice %299 {offsets = [0, 0], sizes = [2, 128], strides = [1, 1]} : vector<2x512xf32> to vector<2x128xf32>
    %301 = vector.extract_strided_slice %299 {offsets = [0, 128], sizes = [2, 128], strides = [1, 1]} : vector<2x512xf32> to vector<2x128xf32>
    %302 = vector.extract_strided_slice %299 {offsets = [0, 256], sizes = [2, 128], strides = [1, 1]} : vector<2x512xf32> to vector<2x128xf32>
    %cst_91 = arith.constant 2.000000e+00 : f32
    %303 = vector.broadcast %cst_91 : f32 to vector<2x128xf32>
    %304 = arith.mulf %303, %302 : vector<2x128xf32>
    %cst_92 = arith.constant 1.000000e+00 : f32
    %305 = vector.broadcast %cst_92 : f32 to vector<2x128xf32>
    %306 = arith.subf %304, %305 : vector<2x128xf32>
    %307 = vector.extract_strided_slice %299 {offsets = [0, 384], sizes = [2, 128], strides = [1, 1]} : vector<2x512xf32> to vector<2x128xf32>
    %308 = arith.mulf %301, %286 : vector<2x128xf32>
    %309 = arith.mulf %300, %306 : vector<2x128xf32>
    %310 = arith.addf %308, %309 : vector<2x128xf32>
    %311 = math.tanh %310 : vector<2x128xf32>
    %312 = arith.mulf %307, %311 : vector<2x128xf32>
    %313 = arith.truncf %312 : vector<2x128xf32> to vector<2x128xbf16>
    %c2 = arith.constant 2 : index
    %c0_93 = arith.constant 0 : index
    %c0_94 = arith.constant 0 : index
    %314 = vector.load %arg1[%c2, %c0_93, %c0_94] : memref<3x256x512xbf16, #tpu.memory_space<vmem>>, vector<1x128x128xbf16>
    %315 = vector.shape_cast %314 : vector<1x128x128xbf16> to vector<128x128xbf16>
    %cst_95 = arith.constant dense<0.000000e+00> : vector<2x128xf32>
    %316 = tpu.matmul %313, %315, %cst_95 {dimension_numbers = #tpu.dot_dimension_numbers<[1], [0], [0], [1], [0, 0, 1, 1], [], []>} : vector<2x128xbf16>, vector<128x128xbf16>, vector<2x128xf32> -> vector<2x128xf32>
    %317 = vector.broadcast %3 : vector<1x128xf32> to vector<2x128xf32>
    %318 = arith.addf %316, %317 : vector<2x128xf32>
    %c0_96 = arith.constant 0 : index
    %c0_97 = arith.constant 0 : index
    %319 = vector.load %arg3[%c0_96, %c0_97] : memref<2x128xf32, #tpu.memory_space<vmem>>, vector<2x128xf32>
    tpu.vector_store %arg3[%c0_96, %c0_97], %318 {strides = array<i32>} : memref<2x128xf32, #tpu.memory_space<vmem>>, vector<2x128xf32>,
    return
  }
}

</mosaic_0001>

<llo_original>
// kernel: forward.1
$region0: #{forward.1}
  #allocation0 [shape = 'u32[]', space=smem, size = 0x4, offset = 0x4, fixed_abs, tag = 'smem constant byte address 0x4 - core index']
  #allocation1 [shape = 'u32[144,128]{1,0:T(1,128)}', space=vmem, size = 0x12000, scoped, tag = 'internal scratch']
  %s0 = inlined_call_operand.vmem [shape: bf16[16,16], index: 0, kind: input, shape index: {}]
  %s1 = inlined_call_operand.vmem [shape: bf16[3,256,512], index: 1, kind: input, shape index: {}]
  %s2 = inlined_call_operand.vmem [shape: f32[3,512], index: 2, kind: input, shape index: {}]
  %s3 = inlined_call_operand.hbm [shape: f32[2,128], index: 3, kind: output, shape index: {}]
  %s4 = sld [smem:[#allocation0]]
  $region22: #{forward.1} parent=0
    _
  %s6 = ssub.s32 1, %s4
  %s7 = scalar_select 0, %s6, %s4
  $region1: #{forward.1} parent=0
    #allocation2 [shape = 'u8[1024]{0}', space=vmem, size = 0x400, scoped, tag = 'output window, operand 0, single buffered']
    #allocation3 [shape = 's32[1]{0}', space=sflag, size = 0x4, scoped, tag = 'scoped memory for forward.1']
    %8 = vsyncpa [#allocation3], 0
    // Predicated region
    $region2: #{forward.1} parent=1 // pred_check
      _
    $region3: #{forward.1} parent=1 // pred_check_branch
      %10 = sbr.rel (0) target = $region5
    $region4: #{forward.1} parent=1 // pred_region
      _
    $region5: #{forward.1} parent=1 // pred_fallthru
      _
    // Predicated region
    $region6: #{forward.1} parent=1 // pred_check
      _
    $region7: #{forward.1} parent=1 // pred_check_branch
      %12 = sbr.rel (0) target = $region9
    $region8: #{forward.1} parent=1 // pred_region
      _
    $region9: #{forward.1} parent=1 // pred_fallthru
      _
    // Predicated region
    $region10: #{forward.1} parent=1 // pred_check
      _
    $region11: #{forward.1} parent=1 // pred_check_branch
      %14 = sbr.rel (0) target = $region13
    $region12: #{forward.1} parent=1 // pred_region
      _
    $region13: #{forward.1} parent=1 // pred_fallthru
      _
    %v16 = vld [vmem:[%s2] sm:$0x77]
    %v17 = vld [vmem:[%s2 + $0x8] sm:$0x77]
    %v18 = vld [vmem:[%s0] sm:$0xf]
    %v19 = vld [vmem:[%s0 + $0x4] sm:$0xf]
    %v20 = vld [vmem:[%s1] sm:$0xff]
    %v21 = vld [vmem:[%s1 + $0x8] sm:$0xff]
    %v22 = vld [vmem:[%s1 + $0x10] sm:$0xff]
    %v23 = vld [vmem:[%s1 + $0x18] sm:$0xff]
    %v26 = vlaneseq
    %v27 = vshrl.u32 %v26, 7
    %v28 = vsub.s32 0, %v27
    %v29 = vrot.slane %v16, %v28
    %v30 = vlaneseq
    %v31 = vshrl.u32 %v30, 7
    %v32 = vsub.s32 4, %v31
    %v33 = vrot.slane %v16, %v32
    %v34 = vlaneseq
    %v35 = vshrl.u32 %v34, 7
    %v36 = vsub.s32 0, %v35
    %v37 = vrot.slane %v17, %v36
    %v38 = vlaneseq
    %v39 = vshrl.u32 %v38, 7
    %v40 = vsub.s32 4, %v39
    %v41 = vrot.slane %v17, %v40
    %v46 = vlaneseq
    %v47 = vshrl.u32 %v46, 7
    %v48 = vsub.s32 0, %v47
    %v49 = vrot.slane %v29, %v48
    %v50 = vlaneseq
    %v51 = vshrl.u32 %v50, 7
    %v52 = vsub.s32 0, %v51
    %v53 = vrot.slane %v33, %v52
    %v54 = vlaneseq
    %v55 = vshrl.u32 %v54, 7
    %v56 = vsub.s32 0, %v55
    %v57 = vrot.slane %v37, %v56
    %v58 = vlaneseq
    %v59 = vshrl.u32 %v58, 7
    %v60 = vsub.s32 0, %v59
    %v61 = vrot.slane %v41, %v60
    %v64 = vunpack.c.l.b16 %v18
    %v65 = vunpack.c.l.b16 %v19
    %v66 = vpack.c.b16 %v65, %v64
    %v71 = vunpack.c.l.b16 %v20
    %v72 = vunpack.c.h.b16 %v20
    %v73 = vunpack.c.l.b16 %v21
    %v74 = vunpack.c.h.b16 %v21
    %v75 = vunpack.c.l.b16 %v22
    %v76 = vunpack.c.h.b16 %v22
    %v77 = vunpack.c.l.b16 %v23
    %v78 = vunpack.c.h.b16 %v23
    %v79 = vpack.c.b16 %v75, %v71
    %v80 = vpack.c.b16 %v76, %v72
    %v81 = vpack.c.b16 %v77, %v73
    %v82 = vpack.c.b16 %v78, %v74
    %vm87 = vcmask 130048
    %v89 = vsel %vm87, %v66, 0
    %91 = vmatprep.subr.bf16.mxu0 %v80
    %92 = vmatpush1.bf16.msra.mxu0 %v79
    %93 = vmatprep.subr.bf16.mxu0 0
    %94 = vmatpush1.bf16.msra.mxu0 0
    %95 = vmatprep.subr.bf16.mxu0 0
    %96 = vmatpush1.bf16.msra.mxu0 0
    %97 = vmatprep.subr.bf16.mxu0 0
    %98 = vmatpush1.bf16.msra.mxu0 0
    %99 = vmatprep.subr.bf16.mxu0 0
    %100 = vmatpush1.bf16.msra.mxu0 0
    %101 = vmatprep.subr.bf16.mxu0 0
    %102 = vmatpush1.bf16.msra.mxu0 0
    %103 = vmatprep.subr.bf16.mxu0 0
    %104 = vmatpush1.bf16.msra.mxu0 0
    %105 = vmatprep.subr.bf16.mxu0 0
    %106 = vmatpush1.bf16.msra.mxu0 0
    %107 = vmatprep.subr.bf16.mxu0 0
    %108 = vmatpush1.bf16.msra.mxu0 0
    %109 = vmatprep.subr.bf16.mxu0 0
    %110 = vmatpush1.bf16.msra.mxu0 0
    %111 = vmatprep.subr.bf16.mxu0 0
    %112 = vmatpush1.bf16.msra.mxu0 0
    %113 = vmatprep.subr.bf16.mxu0 0
    %114 = vmatpush1.bf16.msra.mxu0 0
    %115 = vmatprep.subr.bf16.mxu0 0
    %116 = vmatpush1.bf16.msra.mxu0 0
    %117 = vmatprep.subr.bf16.mxu0 0
    %118 = vmatpush1.bf16.msra.mxu0 0
    %119 = vmatprep.subr.bf16.mxu0 0
    %120 = vmatpush1.bf16.msra.mxu0 0
    %121 = vmatprep.subr.bf16.mxu0 0
    %122 = vmatpush1.bf16.msra.mxu0 0
    %123 = vmatprep.mubr.bf16.mxu0 0
    %124 = vmatmul.mubr.bf16.gmra.mrb[0].mxu0 %v89
    %v125 = vpop.f32.mrb[0].mxu0
    %v126 = vadd.f32 %v49, %v125
    %v127 = vpop.f32.mrb[0].mxu0
    %v128 = vadd.f32 %v53, %v127
    %v129 = vpop.f32.mrb[0].mxu0
    %v130 = vadd.f32 %v49, %v129
    %v131 = vpop.f32.mrb[0].mxu0
    %v132 = vadd.f32 %v53, %v131
    %133 = vdwg.mxu0
    %134 = vmatprep.subr.bf16.mxu0 %v82
    %135 = vmatpush1.bf16.msra.mxu0 %v81
    %136 = vmatprep.subr.bf16.mxu0 0
    %137 = vmatpush1.bf16.msra.mxu0 0
    %138 = vmatprep.subr.bf16.mxu0 0
    %139 = vmatpush1.bf16.msra.mxu0 0
    %140 = vmatprep.subr.bf16.mxu0 0
    %141 = vmatpush1.bf16.msra.mxu0 0
    %142 = vmatprep.subr.bf16.mxu0 0
    %143 = vmatpush1.bf16.msra.mxu0 0
    %144 = vmatprep.subr.bf16.mxu0 0
    %145 = vmatpush1.bf16.msra.mxu0 0
    %146 = vmatprep.subr.bf16.mxu0 0
    %147 = vmatpush1.bf16.msra.mxu0 0
    %148 = vmatprep.subr.bf16.mxu0 0
    %149 = vmatpush1.bf16.msra.mxu0 0
    %150 = vmatprep.subr.bf16.mxu0 0
    %151 = vmatpush1.bf16.msra.mxu0 0
    %152 = vmatprep.subr.bf16.mxu0 0
    %153 = vmatpush1.bf16.msra.mxu0 0
    %154 = vmatprep.subr.bf16.mxu0 0
    %155 = vmatpush1.bf16.msra.mxu0 0
    %156 = vmatprep.subr.bf16.mxu0 0
    %157 = vmatpush1.bf16.msra.mxu0 0
    %158 = vmatprep.subr.bf16.mxu0 0
    %159 = vmatpush1.bf16.msra.mxu0 0
    %160 = vmatprep.subr.bf16.mxu0 0
    %161 = vmatpush1.bf16.msra.mxu0 0
    %162 = vmatprep.subr.bf16.mxu0 0
    %163 = vmatpush1.bf16.msra.mxu0 0
    %164 = vmatprep.subr.bf16.mxu0 0
    %165 = vmatpush1.bf16.msra.mxu0 0
    %166 = vmatprep.mubr.bf16.mxu0 0
    %167 = vmatmul.mubr.bf16.gmra.mrb[0].mxu0 %v89
    %v168 = vpop.f32.mrb[0].mxu0
    %v169 = vadd.f32 %v57, %v168
    %v170 = vpop.f32.mrb[0].mxu0
    %v171 = vadd.f32 %v61, %v170
    %v172 = vpop.f32.mrb[0].mxu0
    %v173 = vadd.f32 %v57, %v172
    %v174 = vpop.f32.mrb[0].mxu0
    %v175 = vadd.f32 %v61, %v174
    %176 = vdwg.mxu0
    %v177 = vxor.u32 %v126, 2147483648
    %v178 = vxor.u32 %v128, 2147483648
    %v179 = vxor.u32 %v169, 2147483648
    %v180 = vxor.u32 %v171, 2147483648
    %v181 = vmul.f32 %v177, 1.442695
    %v182 = vpow.pop %v181
    %v183 = vmul.f32 %v178, 1.442695
    %v184 = vpow.pop %v183
    %v185 = vmul.f32 %v179, 1.442695
    %v186 = vpow.pop %v185
    %v187 = vmul.f32 %v180, 1.442695
    %v188 = vpow.pop %v187
    %v189 = vadd.f32 %v182, 1.0
    %v190 = vadd.f32 %v184, 1.0
    %v191 = vadd.f32 %v186, 1.0
    %v192 = vadd.f32 %v188, 1.0
    %v193 = vrcp.pop %v189
    %v194 = vmul.f32 1.0, %v193
    %v195 = vrcp.pop %v190
    %v196 = vmul.f32 1.0, %v195
    %v197 = vrcp.pop %v191
    %v198 = vmul.f32 1.0, %v197
    %v199 = vrcp.pop %v192
    %v200 = vmul.f32 1.0, %v199
    %v201 = vmul.f32 %v198, 2.0
    %v202 = vsub.f32 %v201, 1.0
    %v203 = vmul.f32 %v196, 0.0
    %v204 = vmul.f32 %v194, %v202
    %v205 = vadd.f32 %v203, %v204
    %v206 = vtanh.pop %v205
    %v207 = vmul.f32 %v200, %v206
    %v208 = vpack.c.bf16 %v207, %v207
    %v209 = vld [vmem:[%s1 + $0x100] sm:$0xff]
    %v210 = vld [vmem:[%s1 + $0x108] sm:$0xff]
    %v211 = vld [vmem:[%s1 + $0x110] sm:$0xff]
    %v212 = vld [vmem:[%s1 + $0x118] sm:$0xff]
    %v213 = vld [vmem:[%s1 + $0x120] sm:$0xff]
    %v214 = vld [vmem:[%s1 + $0x128] sm:$0xff]
    %v215 = vld [vmem:[%s1 + $0x130] sm:$0xff]
    %v216 = vld [vmem:[%s1 + $0x138] sm:$0xff]
    %v217 = vld [vmem:[%s1 + $0x140] sm:$0xff]
    %v218 = vld [vmem:[%s1 + $0x148] sm:$0xff]
    %v219 = vld [vmem:[%s1 + $0x150] sm:$0xff]
    %v220 = vld [vmem:[%s1 + $0x158] sm:$0xff]
    %v221 = vld [vmem:[%s1 + $0x160] sm:$0xff]
    %v222 = vld [vmem:[%s1 + $0x168] sm:$0xff]
    %v223 = vld [vmem:[%s1 + $0x170] sm:$0xff]
    %v224 = vld [vmem:[%s1 + $0x178] sm:$0xff]
    %v225 = vld [vmem:[%s1 + $0x180] sm:$0xff]
    %v226 = vld [vmem:[%s1 + $0x188] sm:$0xff]
    %v227 = vld [vmem:[%s1 + $0x190] sm:$0xff]
    %v228 = vld [vmem:[%s1 + $0x198] sm:$0xff]
    %v229 = vld [vmem:[%s1 + $0x1a0] sm:$0xff]
    %v230 = vld [vmem:[%s1 + $0x1a8] sm:$0xff]
    %v231 = vld [vmem:[%s1 + $0x1b0] sm:$0xff]
    %v232 = vld [vmem:[%s1 + $0x1b8] sm:$0xff]
    %v233 = vld [vmem:[%s1 + $0x1c0] sm:$0xff]
    %v234 = vld [vmem:[%s1 + $0x1c8] sm:$0xff]
    %v235 = vld [vmem:[%s1 + $0x1d0] sm:$0xff]
    %v236 = vld [vmem:[%s1 + $0x1d8] sm:$0xff]
    %v237 = vld [vmem:[%s1 + $0x1e0] sm:$0xff]
    %v238 = vld [vmem:[%s1 + $0x1e8] sm:$0xff]
    %v239 = vld [vmem:[%s1 + $0x1f0] sm:$0xff]
    %v240 = vld [vmem:[%s1 + $0x1f8] sm:$0xff]
    %v273 = vunpack.c.l.b16 %v209
    %v274 = vunpack.c.h.b16 %v209
    %v275 = vunpack.c.l.b16 %v210
    %v276 = vunpack.c.h.b16 %v210
    %v277 = vunpack.c.l.b16 %v211
    %v278 = vunpack.c.h.b16 %v211
    %v279 = vunpack.c.l.b16 %v212
    %v280 = vunpack.c.h.b16 %v212
    %v281 = vunpack.c.l.b16 %v213
    %v282 = vunpack.c.h.b16 %v213
    %v283 = vunpack.c.l.b16 %v214
    %v284 = vunpack.c.h.b16 %v214
    %v285 = vunpack.c.l.b16 %v215
    %v286 = vunpack.c.h.b16 %v215
    %v287 = vunpack.c.l.b16 %v216
    %v288 = vunpack.c.h.b16 %v216
    %v289 = vunpack.c.l.b16 %v217
    %v290 = vunpack.c.h.b16 %v217
    %v291 = vunpack.c.l.b16 %v218
    %v292 = vunpack.c.h.b16 %v218
    %v293 = vunpack.c.l.b16 %v219
    %v294 = vunpack.c.h.b16 %v219
    %v295 = vunpack.c.l.b16 %v220
    %v296 = vunpack.c.h.b16 %v220
    %v297 = vunpack.c.l.b16 %v221
    %v298 = vunpack.c.h.b16 %v221
    %v299 = vunpack.c.l.b16 %v222
    %v300 = vunpack.c.h.b16 %v222
    %v301 = vunpack.c.l.b16 %v223
    %v302 = vunpack.c.h.b16 %v223
    %v303 = vunpack.c.l.b16 %v224
    %v304 = vunpack.c.h.b16 %v224
    %v305 = vunpack.c.l.b16 %v225
    %v306 = vunpack.c.h.b16 %v225
    %v307 = vunpack.c.l.b16 %v226
    %v308 = vunpack.c.h.b16 %v226
    %v309 = vunpack.c.l.b16 %v227
    %v310 = vunpack.c.h.b16 %v227
    %v311 = vunpack.c.l.b16 %v228
    %v312 = vunpack.c.h.b16 %v228
    %v313 = vunpack.c.l.b16 %v229
    %v314 = vunpack.c.h.b16 %v229
    %v315 = vunpack.c.l.b16 %v230
    %v316 = vunpack.c.h.b16 %v230
    %v317 = vunpack.c.l.b16 %v231
    %v318 = vunpack.c.h.b16 %v231
    %v319 = vunpack.c.l.b16 %v232
    %v320 = vunpack.c.h.b16 %v232
    %v321 = vunpack.c.l.b16 %v233
    %v322 = vunpack.c.h.b16 %v233
    %v323 = vunpack.c.l.b16 %v234
    %v324 = vunpack.c.h.b16 %v234
    %v325 = vunpack.c.l.b16 %v235
    %v326 = vunpack.c.h.b16 %v235
    %v327 = vunpack.c.l.b16 %v236
    %v328 = vunpack.c.h.b16 %v236
    %v329 = vunpack.c.l.b16 %v237
    %v330 = vunpack.c.h.b16 %v237
    %v331 = vunpack.c.l.b16 %v238
    %v332 = vunpack.c.h.b16 %v238
    %v333 = vunpack.c.l.b16 %v239
    %v334 = vunpack.c.h.b16 %v239
    %v335 = vunpack.c.l.b16 %v240
    %v336 = vunpack.c.h.b16 %v240
    %v337 = vpack.c.b16 %v277, %v273
    %v338 = vpack.c.b16 %v278, %v274
    %v339 = vpack.c.b16 %v279, %v275
    %v340 = vpack.c.b16 %v280, %v276
    %v341 = vpack.c.b16 %v285, %v281
    %v342 = vpack.c.b16 %v286, %v282
    %v343 = vpack.c.b16 %v287, %v283
    %v344 = vpack.c.b16 %v288, %v284
    %v345 = vpack.c.b16 %v293, %v289
    %v346 = vpack.c.b16 %v294, %v290
    %v347 = vpack.c.b16 %v295, %v291
    %v348 = vpack.c.b16 %v296, %v292
    %v349 = vpack.c.b16 %v301, %v297
    %v350 = vpack.c.b16 %v302, %v298
    %v351 = vpack.c.b16 %v303, %v299
    %v352 = vpack.c.b16 %v304, %v300
    %v353 = vpack.c.b16 %v309, %v305
    %v354 = vpack.c.b16 %v310, %v306
    %v355 = vpack.c.b16 %v311, %v307
    %v356 = vpack.c.b16 %v312, %v308
    %v357 = vpack.c.b16 %v317, %v313
    %v358 = vpack.c.b16 %v318, %v314
    %v359 = vpack.c.b16 %v319, %v315
    %v360 = vpack.c.b16 %v320, %v316
    %v361 = vpack.c.b16 %v325, %v321
    %v362 = vpack.c.b16 %v326, %v322
    %v363 = vpack.c.b16 %v327, %v323
    %v364 = vpack.c.b16 %v328, %v324
    %v365 = vpack.c.b16 %v333, %v329
    %v366 = vpack.c.b16 %v334, %v330
    %v367 = vpack.c.b16 %v335, %v331
    %v368 = vpack.c.b16 %v336, %v332
    %401 = vmatprep.subr.bf16.mxu0 %v338
    %402 = vmatpush1.bf16.msra.mxu0 %v337
    %403 = vmatprep.subr.bf16.mxu0 %v342
    %404 = vmatpush1.bf16.msra.mxu0 %v341
    %405 = vmatprep.subr.bf16.mxu0 %v346
    %406 = vmatpush1.bf16.msra.mxu0 %v345
    %407 = vmatprep.subr.bf16.mxu0 %v350
    %408 = vmatpush1.bf16.msra.mxu0 %v349
    %409 = vmatprep.subr.bf16.mxu0 %v354
    %410 = vmatpush1.bf16.msra.mxu0 %v353
    %411 = vmatprep.subr.bf16.mxu0 %v358
    %412 = vmatpush1.bf16.msra.mxu0 %v357
    %413 = vmatprep.subr.bf16.mxu0 %v362
    %414 = vmatpush1.bf16.msra.mxu0 %v361
    %415 = vmatprep.subr.bf16.mxu0 %v366
    %416 = vmatpush1.bf16.msra.mxu0 %v365
    %417 = vmatprep.subr.bf16.mxu0 0
    %418 = vmatpush1.bf16.msra.mxu0 0
    %419 = vmatprep.subr.bf16.mxu0 0
    %420 = vmatpush1.bf16.msra.mxu0 0
    %421 = vmatprep.subr.bf16.mxu0 0
    %422 = vmatpush1.bf16.msra.mxu0 0
    %423 = vmatprep.subr.bf16.mxu0 0
    %424 = vmatpush1.bf16.msra.mxu0 0
    %425 = vmatprep.subr.bf16.mxu0 0
    %426 = vmatpush1.bf16.msra.mxu0 0
    %427 = vmatprep.subr.bf16.mxu0 0
    %428 = vmatpush1.bf16.msra.mxu0 0
    %429 = vmatprep.subr.bf16.mxu0 0
    %430 = vmatpush1.bf16.msra.mxu0 0
    %431 = vmatprep.subr.bf16.mxu0 0
    %432 = vmatpush1.bf16.msra.mxu0 0
    %433 = vmatprep.mubr.bf16.mxu0 0
    %434 = vmatmul.mubr.bf16.gmra.mrb[0].mxu0 %v208
    %v435 = vpop.f32.mrb[0].mxu0
    %v436 = vadd.f32 0.0, %v435
    %v437 = vpop.f32.mrb[0].mxu0
    %v438 = vadd.f32 0.0, %v437
    %v439 = vpop.f32.mrb[0].mxu0
    %v440 = vpop.f32.mrb[0].mxu0
    %441 = vdwg.mxu0
    %442 = vmatprep.subr.bf16.mxu0 %v340
    %443 = vmatpush1.bf16.msra.mxu0 %v339
    %444 = vmatprep.subr.bf16.mxu0 %v344
    %445 = vmatpush1.bf16.msra.mxu0 %v343
    %446 = vmatprep.subr.bf16.mxu0 %v348
    %447 = vmatpush1.bf16.msra.mxu0 %v347
    %448 = vmatprep.subr.bf16.mxu0 %v352
    %449 = vmatpush1.bf16.msra.mxu0 %v351
    %450 = vmatprep.subr.bf16.mxu0 %v356
    %451 = vmatpush1.bf16.msra.mxu0 %v355
    %452 = vmatprep.subr.bf16.mxu0 %v360
    %453 = vmatpush1.bf16.msra.mxu0 %v359
    %454 = vmatprep.subr.bf16.mxu0 %v364
    %455 = vmatpush1.bf16.msra.mxu0 %v363
    %456 = vmatprep.subr.bf16.mxu0 %v368
    %457 = vmatpush1.bf16.msra.mxu0 %v367
    %458 = vmatprep.subr.bf16.mxu0 0
    %459 = vmatpush1.bf16.msra.mxu0 0
    %460 = vmatprep.subr.bf16.mxu0 0
    %461 = vmatpush1.bf16.msra.mxu0 0
    %462 = vmatprep.subr.bf16.mxu0 0
    %463 = vmatpush1.bf16.msra.mxu0 0
    %464 = vmatprep.subr.bf16.mxu0 0
    %465 = vmatpush1.bf16.msra.mxu0 0
    %466 = vmatprep.subr.bf16.mxu0 0
    %467 = vmatpush1.bf16.msra.mxu0 0
    %468 = vmatprep.subr.bf16.mxu0 0
    %469 = vmatpush1.bf16.msra.mxu0 0
    %470 = vmatprep.subr.bf16.mxu0 0
    %471 = vmatpush1.bf16.msra.mxu0 0
    %472 = vmatprep.subr.bf16.mxu0 0
    %473 = vmatpush1.bf16.msra.mxu0 0
    %474 = vmatprep.mubr.bf16.mxu0 0
    %475 = vmatmul.mubr.bf16.gmra.mrb[0].mxu0 %v208
    %v476 = vpop.f32.mrb[0].mxu0
    %v477 = vadd.f32 0.0, %v476
    %v478 = vpop.f32.mrb[0].mxu0
    %v479 = vadd.f32 0.0, %v478
    %v480 = vpop.f32.mrb[0].mxu0
    %v481 = vpop.f32.mrb[0].mxu0
    %482 = vdwg.mxu0
    %v487 = vrot.slane %v436, 6
    %v488 = vrot.slane %v438, 6
    %v489 = vrot.slane %v477, 6
    %v490 = vrot.slane %v479, 6
    %v495 = vadd.f32 %v126, %v487
    %v496 = vadd.f32 %v128, %v488
    %v497 = vadd.f32 %v169, %v489
    %v498 = vadd.f32 %v171, %v490
    %s499 = scalar_lea.vmem %s1, 512
    %v500 = vld [vmem:[%s499] sm:$0xff]
    %v501 = vld [vmem:[%s499 + $0x8] sm:$0xff]
    %v502 = vld [vmem:[%s499 + $0x10] sm:$0xff]
    %v503 = vld [vmem:[%s499 + $0x18] sm:$0xff]
    %v504 = vld [vmem:[%s499 + $0x20] sm:$0xff]
    %v505 = vld [vmem:[%s499 + $0x28] sm:$0xff]
    %v506 = vld [vmem:[%s499 + $0x30] sm:$0xff]
    %v507 = vld [vmem:[%s499 + $0x38] sm:$0xff]
    %v508 = vld [vmem:[%s499 + $0x40] sm:$0xff]
    %v509 = vld [vmem:[%s499 + $0x48] sm:$0xff]
    %v510 = vld [vmem:[%s499 + $0x50] sm:$0xff]
    %v511 = vld [vmem:[%s499 + $0x58] sm:$0xff]
    %v512 = vld [vmem:[%s499 + $0x60] sm:$0xff]
    %v513 = vld [vmem:[%s499 + $0x68] sm:$0xff]
    %v514 = vld [vmem:[%s499 + $0x70] sm:$0xff]
    %v515 = vld [vmem:[%s499 + $0x78] sm:$0xff]
    %v516 = vld [vmem:[%s499 + $0x80] sm:$0xff]
    %v517 = vld [vmem:[%s499 + $0x88] sm:$0xff]
    %v518 = vld [vmem:[%s499 + $0x90] sm:$0xff]
    %v519 = vld [vmem:[%s499 + $0x98] sm:$0xff]
    %v520 = vld [vmem:[%s499 + $0xa0] sm:$0xff]
    %v521 = vld [vmem:[%s499 + $0xa8] sm:$0xff]
    %v522 = vld [vmem:[%s499 + $0xb0] sm:$0xff]
    %v523 = vld [vmem:[%s499 + $0xb8] sm:$0xff]
    %v524 = vld [vmem:[%s499 + $0xc0] sm:$0xff]
    %v525 = vld [vmem:[%s499 + $0xc8] sm:$0xff]
    %v526 = vld [vmem:[%s499 + $0xd0] sm:$0xff]
    %v527 = vld [vmem:[%s499 + $0xd8] sm:$0xff]
    %v528 = vld [vmem:[%s499 + $0xe0] sm:$0xff]
    %v529 = vld [vmem:[%s499 + $0xe8] sm:$0xff]
    %v530 = vld [vmem:[%s499 + $0xf0] sm:$0xff]
    %v531 = vld [vmem:[%s499 + $0xf8] sm:$0xff]
    %v532 = vlaneseq
    %v533 = vshrl.u32 %v532, 7
    %v534 = vsub.s32 1, %v533
    %v535 = vrot.slane %v16, %v534
    %v536 = vlaneseq
    %v537 = vshrl.u32 %v536, 7
    %v538 = vsub.s32 5, %v537
    %v539 = vrot.slane %v16, %v538
    %v540 = vlaneseq
    %v541 = vshrl.u32 %v540, 7
    %v542 = vsub.s32 1, %v541
    %v543 = vrot.slane %v17, %v542
    %v544 = vlaneseq
    %v545 = vshrl.u32 %v544, 7
    %v546 = vsub.s32 5, %v545
    %v547 = vrot.slane %v17, %v546
    %v552 = vlaneseq
    %v553 = vshrl.u32 %v552, 7
    %v554 = vsub.s32 1, %v553
    %v555 = vrot.slane %v535, %v554
    %v556 = vlaneseq
    %v557 = vshrl.u32 %v556, 7
    %v558 = vsub.s32 1, %v557
    %v559 = vrot.slane %v539, %v558
    %v560 = vlaneseq
    %v561 = vshrl.u32 %v560, 7
    %v562 = vsub.s32 1, %v561
    %v563 = vrot.slane %v543, %v562
    %v564 = vlaneseq
    %v565 = vshrl.u32 %v564, 7
    %v566 = vsub.s32 1, %v565
    %v567 = vrot.slane %v547, %v566
    %v600 = vunpack.c.l.b16 %v500
    %v601 = vunpack.c.h.b16 %v500
    %v602 = vunpack.c.l.b16 %v501
    %v603 = vunpack.c.h.b16 %v501
    %v604 = vunpack.c.l.b16 %v502
    %v605 = vunpack.c.h.b16 %v502
    %v606 = vunpack.c.l.b16 %v503
    %v607 = vunpack.c.h.b16 %v503
    %v608 = vunpack.c.l.b16 %v504
    %v609 = vunpack.c.h.b16 %v504
    %v610 = vunpack.c.l.b16 %v505
    %v611 = vunpack.c.h.b16 %v505
    %v612 = vunpack.c.l.b16 %v506
    %v613 = vunpack.c.h.b16 %v506
    %v614 = vunpack.c.l.b16 %v507
    %v615 = vunpack.c.h.b16 %v507
    %v616 = vunpack.c.l.b16 %v508
    %v617 = vunpack.c.h.b16 %v508
    %v618 = vunpack.c.l.b16 %v509
    %v619 = vunpack.c.h.b16 %v509
    %v620 = vunpack.c.l.b16 %v510
    %v621 = vunpack.c.h.b16 %v510
    %v622 = vunpack.c.l.b16 %v511
    %v623 = vunpack.c.h.b16 %v511
    %v624 = vunpack.c.l.b16 %v512
    %v625 = vunpack.c.h.b16 %v512
    %v626 = vunpack.c.l.b16 %v513
    %v627 = vunpack.c.h.b16 %v513
    %v628 = vunpack.c.l.b16 %v514
    %v629 = vunpack.c.h.b16 %v514
    %v630 = vunpack.c.l.b16 %v515
    %v631 = vunpack.c.h.b16 %v515
    %v632 = vunpack.c.l.b16 %v516
    %v633 = vunpack.c.h.b16 %v516
    %v634 = vunpack.c.l.b16 %v517
    %v635 = vunpack.c.h.b16 %v517
    %v636 = vunpack.c.l.b16 %v518
    %v637 = vunpack.c.h.b16 %v518
    %v638 = vunpack.c.l.b16 %v519
    %v639 = vunpack.c.h.b16 %v519
    %v640 = vunpack.c.l.b16 %v520
    %v641 = vunpack.c.h.b16 %v520
    %v642 = vunpack.c.l.b16 %v521
    %v643 = vunpack.c.h.b16 %v521
    %v644 = vunpack.c.l.b16 %v522
    %v645 = vunpack.c.h.b16 %v522
    %v646 = vunpack.c.l.b16 %v523
    %v647 = vunpack.c.h.b16 %v523
    %v648 = vunpack.c.l.b16 %v524
    %v649 = vunpack.c.h.b16 %v524
    %v650 = vunpack.c.l.b16 %v525
    %v651 = vunpack.c.h.b16 %v525
    %v652 = vunpack.c.l.b16 %v526
    %v653 = vunpack.c.h.b16 %v526
    %v654 = vunpack.c.l.b16 %v527
    %v655 = vunpack.c.h.b16 %v527
    %v656 = vunpack.c.l.b16 %v528
    %v657 = vunpack.c.h.b16 %v528
    %v658 = vunpack.c.l.b16 %v529
    %v659 = vunpack.c.h.b16 %v529
    %v660 = vunpack.c.l.b16 %v530
    %v661 = vunpack.c.h.b16 %v530
    %v662 = vunpack.c.l.b16 %v531
    %v663 = vunpack.c.h.b16 %v531
    %v664 = vpack.c.b16 %v604, %v600
    %v665 = vpack.c.b16 %v605, %v601
    %v666 = vpack.c.b16 %v606, %v602
    %v667 = vpack.c.b16 %v607, %v603
    %v668 = vpack.c.b16 %v612, %v608
    %v669 = vpack.c.b16 %v613, %v609
    %v670 = vpack.c.b16 %v614, %v610
    %v671 = vpack.c.b16 %v615, %v611
    %v672 = vpack.c.b16 %v620, %v616
    %v673 = vpack.c.b16 %v621, %v617
    %v674 = vpack.c.b16 %v622, %v618
    %v675 = vpack.c.b16 %v623, %v619
    %v676 = vpack.c.b16 %v628, %v624
    %v677 = vpack.c.b16 %v629, %v625
    %v678 = vpack.c.b16 %v630, %v626
    %v679 = vpack.c.b16 %v631, %v627
    %v680 = vpack.c.b16 %v636, %v632
    %v681 = vpack.c.b16 %v637, %v633
    %v682 = vpack.c.b16 %v638, %v634
    %v683 = vpack.c.b16 %v639, %v635
    %v684 = vpack.c.b16 %v644, %v640
    %v685 = vpack.c.b16 %v645, %v641
    %v686 = vpack.c.b16 %v646, %v642
    %v687 = vpack.c.b16 %v647, %v643
    %v688 = vpack.c.b16 %v652, %v648
    %v689 = vpack.c.b16 %v653, %v649
    %v690 = vpack.c.b16 %v654, %v650
    %v691 = vpack.c.b16 %v655, %v651
    %v692 = vpack.c.b16 %v660, %v656
    %v693 = vpack.c.b16 %v661, %v657
    %v694 = vpack.c.b16 %v662, %v658
    %v695 = vpack.c.b16 %v663, %v659
    %728 = vmatprep.subr.bf16.mxu0 %v665
    %729 = vmatpush1.bf16.msra.mxu0 %v664
    %730 = vmatprep.subr.bf16.mxu0 %v669
    %731 = vmatpush1.bf16.msra.mxu0 %v668
    %732 = vmatprep.subr.bf16.mxu0 %v673
    %733 = vmatpush1.bf16.msra.mxu0 %v672
    %734 = vmatprep.subr.bf16.mxu0 %v677
    %735 = vmatpush1.bf16.msra.mxu0 %v676
    %736 = vmatprep.subr.bf16.mxu0 %v681
    %737 = vmatpush1.bf16.msra.mxu0 %v680
    %738 = vmatprep.subr.bf16.mxu0 %v685
    %739 = vmatpush1.bf16.msra.mxu0 %v684
    %740 = vmatprep.subr.bf16.mxu0 %v689
    %741 = vmatpush1.bf16.msra.mxu0 %v688
    %742 = vmatprep.subr.bf16.mxu0 %v693
    %743 = vmatpush1.bf16.msra.mxu0 %v692
    %744 = vmatprep.subr.bf16.mxu0 0
    %745 = vmatpush1.bf16.msra.mxu0 0
    %746 = vmatprep.subr.bf16.mxu0 0
    %747 = vmatpush1.bf16.msra.mxu0 0
    %748 = vmatprep.subr.bf16.mxu0 0
    %749 = vmatpush1.bf16.msra.mxu0 0
    %750 = vmatprep.subr.bf16.mxu0 0
    %751 = vmatpush1.bf16.msra.mxu0 0
    %752 = vmatprep.subr.bf16.mxu0 0
    %753 = vmatpush1.bf16.msra.mxu0 0
    %754 = vmatprep.subr.bf16.mxu0 0
    %755 = vmatpush1.bf16.msra.mxu0 0
    %756 = vmatprep.subr.bf16.mxu0 0
    %757 = vmatpush1.bf16.msra.mxu0 0
    %758 = vmatprep.subr.bf16.mxu0 0
    %759 = vmatpush1.bf16.msra.mxu0 0
    %760 = vmatprep.mubr.bf16.mxu0 0
    %761 = vmatmul.mubr.bf16.gmra.mrb[0].mxu0 %v208
    %v762 = vpop.f32.mrb[0].mxu0
    %v763 = vadd.f32 %v555, %v762
    %v764 = vpop.f32.mrb[0].mxu0
    %v765 = vadd.f32 %v559, %v764
    %v766 = vpop.f32.mrb[0].mxu0
    %v767 = vpop.f32.mrb[0].mxu0
    %768 = vdwg.mxu0
    %769 = vmatprep.subr.bf16.mxu0 %v667
    %770 = vmatpush1.bf16.msra.mxu0 %v666
    %771 = vmatprep.subr.bf16.mxu0 %v671
    %772 = vmatpush1.bf16.msra.mxu0 %v670
    %773 = vmatprep.subr.bf16.mxu0 %v675
    %774 = vmatpush1.bf16.msra.mxu0 %v674
    %775 = vmatprep.subr.bf16.mxu0 %v679
    %776 = vmatpush1.bf16.msra.mxu0 %v678
    %777 = vmatprep.subr.bf16.mxu0 %v683
    %778 = vmatpush1.bf16.msra.mxu0 %v682
    %779 = vmatprep.subr.bf16.mxu0 %v687
    %780 = vmatpush1.bf16.msra.mxu0 %v686
    %781 = vmatprep.subr.bf16.mxu0 %v691
    %782 = vmatpush1.bf16.msra.mxu0 %v690
    %783 = vmatprep.subr.bf16.mxu0 %v695
    %784 = vmatpush1.bf16.msra.mxu0 %v694
    %785 = vmatprep.subr.bf16.mxu0 0
    %786 = vmatpush1.bf16.msra.mxu0 0
    %787 = vmatprep.subr.bf16.mxu0 0
    %788 = vmatpush1.bf16.msra.mxu0 0
    %789 = vmatprep.subr.bf16.mxu0 0
    %790 = vmatpush1.bf16.msra.mxu0 0
    %791 = vmatprep.subr.bf16.mxu0 0
    %792 = vmatpush1.bf16.msra.mxu0 0
    %793 = vmatprep.subr.bf16.mxu0 0
    %794 = vmatpush1.bf16.msra.mxu0 0
    %795 = vmatprep.subr.bf16.mxu0 0
    %796 = vmatpush1.bf16.msra.mxu0 0
    %797 = vmatprep.subr.bf16.mxu0 0
    %798 = vmatpush1.bf16.msra.mxu0 0
    %799 = vmatprep.subr.bf16.mxu0 0
    %800 = vmatpush1.bf16.msra.mxu0 0
    %801 = vmatprep.mubr.bf16.mxu0 0
    %802 = vmatmul.mubr.bf16.gmra.mrb[0].mxu0 %v208
    %v803 = vpop.f32.mrb[0].mxu0
    %v804 = vadd.f32 %v563, %v803
    %v805 = vpop.f32.mrb[0].mxu0
    %v806 = vadd.f32 %v567, %v805
    %v807 = vpop.f32.mrb[0].mxu0
    %v808 = vpop.f32.mrb[0].mxu0
    %809 = vdwg.mxu0
    %v814 = vrot.slane %v495, 2
    %v815 = vrot.slane %v496, 2
    %v816 = vrot.slane %v497, 2
    %v817 = vrot.slane %v498, 2
    %v826 = vrot.slane %v763, 6
    %v827 = vrot.slane %v765, 6
    %v828 = vrot.slane %v804, 6
    %v829 = vrot.slane %v806, 6
    %vm834 = vcmask 1041408
    %v835 = vsel %vm834, %v814, %v826
    %v836 = vsel %vm834, %v815, %v827
    %v837 = vsel %vm834, %v816, %v828
    %v838 = vsel %vm834, %v817, %v829
    %v839 = vxor.u32 %v835, 2147483648
    %v840 = vxor.u32 %v836, 2147483648
    %v841 = vxor.u32 %v837, 2147483648
    %v842 = vxor.u32 %v838, 2147483648
    %v843 = vmul.f32 %v839, 1.442695
    %v844 = vpow.pop %v843
    %v845 = vmul.f32 %v840, 1.442695
    %v846 = vpow.pop %v845
    %v847 = vmul.f32 %v841, 1.442695
    %v848 = vpow.pop %v847
    %v849 = vmul.f32 %v842, 1.442695
    %v850 = vpow.pop %v849
    %v851 = vadd.f32 %v844, 1.0
    %v852 = vadd.f32 %v846, 1.0
    %v853 = vadd.f32 %v848, 1.0
    %v854 = vadd.f32 %v850, 1.0
    %v855 = vrcp.pop %v851
    %v856 = vmul.f32 1.0, %v855
    %v857 = vrcp.pop %v852
    %v858 = vmul.f32 1.0, %v857
    %v859 = vrcp.pop %v853
    %v860 = vmul.f32 1.0, %v859
    %v861 = vrcp.pop %v854
    %v862 = vmul.f32 1.0, %v861
    %v863 = vmul.f32 %v860, 2.0
    %v864 = vsub.f32 %v863, 1.0
    %v865 = vsel %vm834, %v205, 0.0
    %v866 = vmul.f32 %v858, %v865
    %v867 = vmul.f32 %v856, %v864
    %v868 = vadd.f32 %v866, %v867
    %v869 = vtanh.pop %v868
    %v870 = vmul.f32 %v862, %v869
    %v871 = vpack.c.bf16 %v870, %v870
    %872 = vmatprep.subr.bf16.mxu0 %v338
    %873 = vmatpush1.bf16.msra.mxu0 %v337
    %874 = vmatprep.subr.bf16.mxu0 %v342
    %875 = vmatpush1.bf16.msra.mxu0 %v341
    %876 = vmatprep.subr.bf16.mxu0 %v346
    %877 = vmatpush1.bf16.msra.mxu0 %v345
    %878 = vmatprep.subr.bf16.mxu0 %v350
    %879 = vmatpush1.bf16.msra.mxu0 %v349
    %880 = vmatprep.subr.bf16.mxu0 %v354
    %881 = vmatpush1.bf16.msra.mxu0 %v353
    %882 = vmatprep.subr.bf16.mxu0 %v358
    %883 = vmatpush1.bf16.msra.mxu0 %v357
    %884 = vmatprep.subr.bf16.mxu0 %v362
    %885 = vmatpush1.bf16.msra.mxu0 %v361
    %886 = vmatprep.subr.bf16.mxu0 %v366
    %887 = vmatpush1.bf16.msra.mxu0 %v365
    %888 = vmatprep.subr.bf16.mxu0 0
    %889 = vmatpush1.bf16.msra.mxu0 0
    %890 = vmatprep.subr.bf16.mxu0 0
    %891 = vmatpush1.bf16.msra.mxu0 0
    %892 = vmatprep.subr.bf16.mxu0 0
    %893 = vmatpush1.bf16.msra.mxu0 0
    %894 = vmatprep.subr.bf16.mxu0 0
    %895 = vmatpush1.bf16.msra.mxu0 0
    %896 = vmatprep.subr.bf16.mxu0 0
    %897 = vmatpush1.bf16.msra.mxu0 0
    %898 = vmatprep.subr.bf16.mxu0 0
    %899 = vmatpush1.bf16.msra.mxu0 0
    %900 = vmatprep.subr.bf16.mxu0 0
    %901 = vmatpush1.bf16.msra.mxu0 0
    %902 = vmatprep.subr.bf16.mxu0 0
    %903 = vmatpush1.bf16.msra.mxu0 0
    %904 = vmatprep.mubr.bf16.mxu0 0
    %905 = vmatmul.mubr.bf16.gmra.mrb[0].mxu0 %v871
    %v906 = vpop.f32.mrb[0].mxu0
    %v907 = vadd.f32 0.0, %v906
    %v908 = vpop.f32.mrb[0].mxu0
    %v909 = vadd.f32 0.0, %v908
    %v910 = vpop.f32.mrb[0].mxu0
    %v911 = vpop.f32.mrb[0].mxu0
    %912 = vdwg.mxu0
    %913 = vmatprep.subr.bf16.mxu0 %v340
    %914 = vmatpush1.bf16.msra.mxu0 %v339
    %915 = vmatprep.subr.bf16.mxu0 %v344
    %916 = vmatpush1.bf16.msra.mxu0 %v343
    %917 = vmatprep.subr.bf16.mxu0 %v348
    %918 = vmatpush1.bf16.msra.mxu0 %v347
    %919 = vmatprep.subr.bf16.mxu0 %v352
    %920 = vmatpush1.bf16.msra.mxu0 %v351
    %921 = vmatprep.subr.bf16.mxu0 %v356
    %922 = vmatpush1.bf16.msra.mxu0 %v355
    %923 = vmatprep.subr.bf16.mxu0 %v360
    %924 = vmatpush1.bf16.msra.mxu0 %v359
    %925 = vmatprep.subr.bf16.mxu0 %v364
    %926 = vmatpush1.bf16.msra.mxu0 %v363
    %927 = vmatprep.subr.bf16.mxu0 %v368
    %928 = vmatpush1.bf16.msra.mxu0 %v367
    %929 = vmatprep.subr.bf16.mxu0 0
    %930 = vmatpush1.bf16.msra.mxu0 0
    %931 = vmatprep.subr.bf16.mxu0 0
    %932 = vmatpush1.bf16.msra.mxu0 0
    %933 = vmatprep.subr.bf16.mxu0 0
    %934 = vmatpush1.bf16.msra.mxu0 0
    %935 = vmatprep.subr.bf16.mxu0 0
    %936 = vmatpush1.bf16.msra.mxu0 0
    %937 = vmatprep.subr.bf16.mxu0 0
    %938 = vmatpush1.bf16.msra.mxu0 0
    %939 = vmatprep.subr.bf16.mxu0 0
    %940 = vmatpush1.bf16.msra.mxu0 0
    %941 = vmatprep.subr.bf16.mxu0 0
    %942 = vmatpush1.bf16.msra.mxu0 0
    %943 = vmatprep.subr.bf16.mxu0 0
    %944 = vmatpush1.bf16.msra.mxu0 0
    %945 = vmatprep.mubr.bf16.mxu0 0
    %946 = vmatmul.mubr.bf16.gmra.mrb[0].mxu0 %v871
    %v947 = vpop.f32.mrb[0].mxu0
    %v948 = vadd.f32 0.0, %v947
    %v949 = vpop.f32.mrb[0].mxu0
    %v950 = vadd.f32 0.0, %v949
    %v951 = vpop.f32.mrb[0].mxu0
    %v952 = vpop.f32.mrb[0].mxu0
    %953 = vdwg.mxu0
    %v958 = vrot.slane %v907, 4
    %v959 = vrot.slane %v909, 4
    %v960 = vrot.slane %v948, 4
    %v961 = vrot.slane %v950, 4
    %v966 = vadd.f32 %v126, %v958
    %v967 = vadd.f32 %v128, %v959
    %v968 = vadd.f32 %v169, %v960
    %v969 = vadd.f32 %v171, %v961
    %v971 = vrot.slane %v871, 1
    %v973 = vld [vmem:[%s499] sm:$0xff]
    %v974 = vld [vmem:[%s499 + $0x8] sm:$0xff]
    %v975 = vld [vmem:[%s499 + $0x10] sm:$0xff]
    %v976 = vld [vmem:[%s499 + $0x18] sm:$0xff]
    %v977 = vld [vmem:[%s499 + $0x20] sm:$0xff]
    %v978 = vld [vmem:[%s499 + $0x28] sm:$0xff]
    %v979 = vld [vmem:[%s499 + $0x30] sm:$0xff]
    %v980 = vld [vmem:[%s499 + $0x38] sm:$0xff]
    %v981 = vld [vmem:[%s499 + $0x40] sm:$0xff]
    %v982 = vld [vmem:[%s499 + $0x48] sm:$0xff]
    %v983 = vld [vmem:[%s499 + $0x50] sm:$0xff]
    %v984 = vld [vmem:[%s499 + $0x58] sm:$0xff]
    %v985 = vld [vmem:[%s499 + $0x60] sm:$0xff]
    %v986 = vld [vmem:[%s499 + $0x68] sm:$0xff]
    %v987 = vld [vmem:[%s499 + $0x70] sm:$0xff]
    %v988 = vld [vmem:[%s499 + $0x78] sm:$0xff]
    %v989 = vld [vmem:[%s499 + $0x80] sm:$0xff]
    %v990 = vld [vmem:[%s499 + $0x88] sm:$0xff]
    %v991 = vld [vmem:[%s499 + $0x90] sm:$0xff]
    %v992 = vld [vmem:[%s499 + $0x98] sm:$0xff]
    %v993 = vld [vmem:[%s499 + $0xa0] sm:$0xff]
    %v994 = vld [vmem:[%s499 + $0xa8] sm:$0xff]
    %v995 = vld [vmem:[%s499 + $0xb0] sm:$0xff]
    %v996 = vld [vmem:[%s499 + $0xb8] sm:$0xff]
    %v997 = vld [vmem:[%s499 + $0xc0] sm:$0xff]
    %v998 = vld [vmem:[%s499 + $0xc8] sm:$0xff]
    %v999 = vld [vmem:[%s499 + $0xd0] sm:$0xff]
    %v1000 = vld [vmem:[%s499 + $0xd8] sm:$0xff]
    %v1001 = vld [vmem:[%s499 + $0xe0] sm:$0xff]
    %v1002 = vld [vmem:[%s499 + $0xe8] sm:$0xff]
    %v1003 = vld [vmem:[%s499 + $0xf0] sm:$0xff]
    %v1004 = vld [vmem:[%s499 + $0xf8] sm:$0xff]
    %v1005 = vld [vmem:[%s499 + $0x100] sm:$0xff]
    %v1006 = vld [vmem:[%s499 + $0x108] sm:$0xff]
    %v1007 = vld [vmem:[%s499 + $0x110] sm:$0xff]
    %v1008 = vld [vmem:[%s499 + $0x118] sm:$0xff]
    %v1009 = vld [vmem:[%s499 + $0x120] sm:$0xff]
    %v1010 = vld [vmem:[%s499 + $0x128] sm:$0xff]
    %v1011 = vld [vmem:[%s499 + $0x130] sm:$0xff]
    %v1012 = vld [vmem:[%s499 + $0x138] sm:$0xff]
    %v1013 = vld [vmem:[%s499 + $0x140] sm:$0xff]
    %v1014 = vld [vmem:[%s499 + $0x148] sm:$0xff]
    %v1015 = vld [vmem:[%s499 + $0x150] sm:$0xff]
    %v1016 = vld [vmem:[%s499 + $0x158] sm:$0xff]
    %v1017 = vld [vmem:[%s499 + $0x160] sm:$0xff]
    %v1018 = vld [vmem:[%s499 + $0x168] sm:$0xff]
    %v1019 = vld [vmem:[%s499 + $0x170] sm:$0xff]
    %v1020 = vld [vmem:[%s499 + $0x178] sm:$0xff]
    %v1021 = vld [vmem:[%s499 + $0x180] sm:$0xff]
    %v1022 = vld [vmem:[%s499 + $0x188] sm:$0xff]
    %v1023 = vld [vmem:[%s499 + $0x190] sm:$0xff]
    %v1024 = vld [vmem:[%s499 + $0x198] sm:$0xff]
    %v1025 = vld [vmem:[%s499 + $0x1a0] sm:$0xff]
    %v1026 = vld [vmem:[%s499 + $0x1a8] sm:$0xff]
    %v1027 = vld [vmem:[%s499 + $0x1b0] sm:$0xff]
    %v1028 = vld [vmem:[%s499 + $0x1b8] sm:$0xff]
    %v1029 = vld [vmem:[%s499 + $0x1c0] sm:$0xff]
    %v1030 = vld [vmem:[%s499 + $0x1c8] sm:$0xff]
    %v1031 = vld [vmem:[%s499 + $0x1d0] sm:$0xff]
    %v1032 = vld [vmem:[%s499 + $0x1d8] sm:$0xff]
    %v1033 = vld [vmem:[%s499 + $0x1e0] sm:$0xff]
    %v1034 = vld [vmem:[%s499 + $0x1e8] sm:$0xff]
    %v1035 = vld [vmem:[%s499 + $0x1f0] sm:$0xff]
    %v1036 = vld [vmem:[%s499 + $0x1f8] sm:$0xff]
    %v1101 = vunpack.c.l.b16 %v973
    %v1102 = vunpack.c.h.b16 %v973
    %v1103 = vunpack.c.l.b16 %v974
    %v1104 = vunpack.c.h.b16 %v974
    %v1105 = vunpack.c.l.b16 %v975
    %v1106 = vunpack.c.h.b16 %v975
    %v1107 = vunpack.c.l.b16 %v976
    %v1108 = vunpack.c.h.b16 %v976
    %v1109 = vunpack.c.l.b16 %v977
    %v1110 = vunpack.c.h.b16 %v977
    %v1111 = vunpack.c.l.b16 %v978
    %v1112 = vunpack.c.h.b16 %v978
    %v1113 = vunpack.c.l.b16 %v979
    %v1114 = vunpack.c.h.b16 %v979
    %v1115 = vunpack.c.l.b16 %v980
    %v1116 = vunpack.c.h.b16 %v980
    %v1117 = vunpack.c.l.b16 %v981
    %v1118 = vunpack.c.h.b16 %v981
    %v1119 = vunpack.c.l.b16 %v982
    %v1120 = vunpack.c.h.b16 %v982
    %v1121 = vunpack.c.l.b16 %v983
    %v1122 = vunpack.c.h.b16 %v983
    %v1123 = vunpack.c.l.b16 %v984
    %v1124 = vunpack.c.h.b16 %v984
    %v1125 = vunpack.c.l.b16 %v985
    %v1126 = vunpack.c.h.b16 %v985
    %v1127 = vunpack.c.l.b16 %v986
    %v1128 = vunpack.c.h.b16 %v986
    %v1129 = vunpack.c.l.b16 %v987
    %v1130 = vunpack.c.h.b16 %v987
    %v1131 = vunpack.c.l.b16 %v988
    %v1132 = vunpack.c.h.b16 %v988
    %v1133 = vunpack.c.l.b16 %v989
    %v1134 = vunpack.c.h.b16 %v989
    %v1135 = vunpack.c.l.b16 %v990
    %v1136 = vunpack.c.h.b16 %v990
    %v1137 = vunpack.c.l.b16 %v991
    %v1138 = vunpack.c.h.b16 %v991
    %v1139 = vunpack.c.l.b16 %v992
    %v1140 = vunpack.c.h.b16 %v992
    %v1141 = vunpack.c.l.b16 %v993
    %v1142 = vunpack.c.h.b16 %v993
    %v1143 = vunpack.c.l.b16 %v994
    %v1144 = vunpack.c.h.b16 %v994
    %v1145 = vunpack.c.l.b16 %v995
    %v1146 = vunpack.c.h.b16 %v995
    %v1147 = vunpack.c.l.b16 %v996
    %v1148 = vunpack.c.h.b16 %v996
    %v1149 = vunpack.c.l.b16 %v997
    %v1150 = vunpack.c.h.b16 %v997
    %v1151 = vunpack.c.l.b16 %v998
    %v1152 = vunpack.c.h.b16 %v998
    %v1153 = vunpack.c.l.b16 %v999
    %v1154 = vunpack.c.h.b16 %v999
    %v1155 = vunpack.c.l.b16 %v1000
    %v1156 = vunpack.c.h.b16 %v1000
    %v1157 = vunpack.c.l.b16 %v1001
    %v1158 = vunpack.c.h.b16 %v1001
    %v1159 = vunpack.c.l.b16 %v1002
    %v1160 = vunpack.c.h.b16 %v1002
    %v1161 = vunpack.c.l.b16 %v1003
    %v1162 = vunpack.c.h.b16 %v1003
    %v1163 = vunpack.c.l.b16 %v1004
    %v1164 = vunpack.c.h.b16 %v1004
    %v1165 = vunpack.c.l.b16 %v1005
    %v1166 = vunpack.c.h.b16 %v1005
    %v1167 = vunpack.c.l.b16 %v1006
    %v1168 = vunpack.c.h.b16 %v1006
    %v1169 = vunpack.c.l.b16 %v1007
    %v1170 = vunpack.c.h.b16 %v1007
    %v1171 = vunpack.c.l.b16 %v1008
    %v1172 = vunpack.c.h.b16 %v1008
    %v1173 = vunpack.c.l.b16 %v1009
    %v1174 = vunpack.c.h.b16 %v1009
    %v1175 = vunpack.c.l.b16 %v1010
    %v1176 = vunpack.c.h.b16 %v1010
    %v1177 = vunpack.c.l.b16 %v1011
    %v1178 = vunpack.c.h.b16 %v1011
    %v1179 = vunpack.c.l.b16 %v1012
    %v1180 = vunpack.c.h.b16 %v1012
    %v1181 = vunpack.c.l.b16 %v1013
    %v1182 = vunpack.c.h.b16 %v1013
    %v1183 = vunpack.c.l.b16 %v1014
    %v1184 = vunpack.c.h.b16 %v1014
    %v1185 = vunpack.c.l.b16 %v1015
    %v1186 = vunpack.c.h.b16 %v1015
    %v1187 = vunpack.c.l.b16 %v1016
    %v1188 = vunpack.c.h.b16 %v1016
    %v1189 = vunpack.c.l.b16 %v1017
    %v1190 = vunpack.c.h.b16 %v1017
    %v1191 = vunpack.c.l.b16 %v1018
    %v1192 = vunpack.c.h.b16 %v1018
    %v1193 = vunpack.c.l.b16 %v1019
    %v1194 = vunpack.c.h.b16 %v1019
    %v1195 = vunpack.c.l.b16 %v1020
    %v1196 = vunpack.c.h.b16 %v1020
    %v1197 = vunpack.c.l.b16 %v1021
    %v1198 = vunpack.c.h.b16 %v1021
    %v1199 = vunpack.c.l.b16 %v1022
    %v1200 = vunpack.c.h.b16 %v1022
    %v1201 = vunpack.c.l.b16 %v1023
    %v1202 = vunpack.c.h.b16 %v1023
    %v1203 = vunpack.c.l.b16 %v1024
    %v1204 = vunpack.c.h.b16 %v1024
    %v1205 = vunpack.c.l.b16 %v1025
    %v1206 = vunpack.c.h.b16 %v1025
    %v1207 = vunpack.c.l.b16 %v1026
    %v1208 = vunpack.c.h.b16 %v1026
    %v1209 = vunpack.c.l.b16 %v1027
    %v1210 = vunpack.c.h.b16 %v1027
    %v1211 = vunpack.c.l.b16 %v1028
    %v1212 = vunpack.c.h.b16 %v1028
    %v1213 = vunpack.c.l.b16 %v1029
    %v1214 = vunpack.c.h.b16 %v1029
    %v1215 = vunpack.c.l.b16 %v1030
    %v1216 = vunpack.c.h.b16 %v1030
    %v1217 = vunpack.c.l.b16 %v1031
    %v1218 = vunpack.c.h.b16 %v1031
    %v1219 = vunpack.c.l.b16 %v1032
    %v1220 = vunpack.c.h.b16 %v1032
    %v1221 = vunpack.c.l.b16 %v1033
    %v1222 = vunpack.c.h.b16 %v1033
    %v1223 = vunpack.c.l.b16 %v1034
    %v1224 = vunpack.c.h.b16 %v1034
    %v1225 = vunpack.c.l.b16 %v1035
    %v1226 = vunpack.c.h.b16 %v1035
    %v1227 = vunpack.c.l.b16 %v1036
    %v1228 = vunpack.c.h.b16 %v1036
    %v1229 = vpack.c.b16 %v1105, %v1101
    %v1230 = vpack.c.b16 %v1106, %v1102
    %v1231 = vpack.c.b16 %v1107, %v1103
    %v1232 = vpack.c.b16 %v1108, %v1104
    %v1233 = vpack.c.b16 %v1113, %v1109
    %v1234 = vpack.c.b16 %v1114, %v1110
    %v1235 = vpack.c.b16 %v1115, %v1111
    %v1236 = vpack.c.b16 %v1116, %v1112
    %v1237 = vpack.c.b16 %v1121, %v1117
    %v1238 = vpack.c.b16 %v1122, %v1118
    %v1239 = vpack.c.b16 %v1123, %v1119
    %v1240 = vpack.c.b16 %v1124, %v1120
    %v1241 = vpack.c.b16 %v1129, %v1125
    %v1242 = vpack.c.b16 %v1130, %v1126
    %v1243 = vpack.c.b16 %v1131, %v1127
    %v1244 = vpack.c.b16 %v1132, %v1128
    %v1245 = vpack.c.b16 %v1137, %v1133
    %v1246 = vpack.c.b16 %v1138, %v1134
    %v1247 = vpack.c.b16 %v1139, %v1135
    %v1248 = vpack.c.b16 %v1140, %v1136
    %v1249 = vpack.c.b16 %v1145, %v1141
    %v1250 = vpack.c.b16 %v1146, %v1142
    %v1251 = vpack.c.b16 %v1147, %v1143
    %v1252 = vpack.c.b16 %v1148, %v1144
    %v1253 = vpack.c.b16 %v1153, %v1149
    %v1254 = vpack.c.b16 %v1154, %v1150
    %v1255 = vpack.c.b16 %v1155, %v1151
    %v1256 = vpack.c.b16 %v1156, %v1152
    %v1257 = vpack.c.b16 %v1161, %v1157
    %v1258 = vpack.c.b16 %v1162, %v1158
    %v1259 = vpack.c.b16 %v1163, %v1159
    %v1260 = vpack.c.b16 %v1164, %v1160
    %v1261 = vpack.c.b16 %v1169, %v1165
    %v1262 = vpack.c.b16 %v1170, %v1166
    %v1263 = vpack.c.b16 %v1171, %v1167
    %v1264 = vpack.c.b16 %v1172, %v1168
    %v1265 = vpack.c.b16 %v1177, %v1173
    %v1266 = vpack.c.b16 %v1178, %v1174
    %v1267 = vpack.c.b16 %v1179, %v1175
    %v1268 = vpack.c.b16 %v1180, %v1176
    %v1269 = vpack.c.b16 %v1185, %v1181
    %v1270 = vpack.c.b16 %v1186, %v1182
    %v1271 = vpack.c.b16 %v1187, %v1183
    %v1272 = vpack.c.b16 %v1188, %v1184
    %v1273 = vpack.c.b16 %v1193, %v1189
    %v1274 = vpack.c.b16 %v1194, %v1190
    %v1275 = vpack.c.b16 %v1195, %v1191
    %v1276 = vpack.c.b16 %v1196, %v1192
    %v1277 = vpack.c.b16 %v1201, %v1197
    %v1278 = vpack.c.b16 %v1202, %v1198
    %v1279 = vpack.c.b16 %v1203, %v1199
    %v1280 = vpack.c.b16 %v1204, %v1200
    %v1281 = vpack.c.b16 %v1209, %v1205
    %v1282 = vpack.c.b16 %v1210, %v1206
    %v1283 = vpack.c.b16 %v1211, %v1207
    %v1284 = vpack.c.b16 %v1212, %v1208
    %v1285 = vpack.c.b16 %v1217, %v1213
    %v1286 = vpack.c.b16 %v1218, %v1214
    %v1287 = vpack.c.b16 %v1219, %v1215
    %v1288 = vpack.c.b16 %v1220, %v1216
    %v1289 = vpack.c.b16 %v1225, %v1221
    %v1290 = vpack.c.b16 %v1226, %v1222
    %v1291 = vpack.c.b16 %v1227, %v1223
    %v1292 = vpack.c.b16 %v1228, %v1224
    %1357 = vmatprep.subr.bf16.mxu0 %v1230
    %1358 = vmatpush1.bf16.msra.mxu0 %v1229
    %1359 = vmatprep.subr.bf16.mxu0 %v1234
    %1360 = vmatpush1.bf16.msra.mxu0 %v1233
    %1361 = vmatprep.subr.bf16.mxu0 %v1238
    %1362 = vmatpush1.bf16.msra.mxu0 %v1237
    %1363 = vmatprep.subr.bf16.mxu0 %v1242
    %1364 = vmatpush1.bf16.msra.mxu0 %v1241
    %1365 = vmatprep.subr.bf16.mxu0 %v1246
    %1366 = vmatpush1.bf16.msra.mxu0 %v1245
    %1367 = vmatprep.subr.bf16.mxu0 %v1250
    %1368 = vmatpush1.bf16.msra.mxu0 %v1249
    %1369 = vmatprep.subr.bf16.mxu0 %v1254
    %1370 = vmatpush1.bf16.msra.mxu0 %v1253
    %1371 = vmatprep.subr.bf16.mxu0 %v1258
    %1372 = vmatpush1.bf16.msra.mxu0 %v1257
    %1373 = vmatprep.subr.bf16.mxu0 %v1262
    %1374 = vmatpush1.bf16.msra.mxu0 %v1261
    %1375 = vmatprep.subr.bf16.mxu0 %v1266
    %1376 = vmatpush1.bf16.msra.mxu0 %v1265
    %1377 = vmatprep.subr.bf16.mxu0 %v1270
    %1378 = vmatpush1.bf16.msra.mxu0 %v1269
    %1379 = vmatprep.subr.bf16.mxu0 %v1274
    %1380 = vmatpush1.bf16.msra.mxu0 %v1273
    %1381 = vmatprep.subr.bf16.mxu0 %v1278
    %1382 = vmatpush1.bf16.msra.mxu0 %v1277
    %1383 = vmatprep.subr.bf16.mxu0 %v1282
    %1384 = vmatpush1.bf16.msra.mxu0 %v1281
    %1385 = vmatprep.subr.bf16.mxu0 %v1286
    %1386 = vmatpush1.bf16.msra.mxu0 %v1285
    %1387 = vmatprep.subr.bf16.mxu0 %v1290
    %1388 = vmatpush1.bf16.msra.mxu0 %v1289
    %1389 = vmatprep.mubr.bf16.mxu0 %v971
    %1390 = vmatmul.mubr.bf16.gmra.mrb[0].mxu0 %v871
    %v1391 = vpop.f32.mrb[0].mxu0
    %v1392 = vadd.f32 %v555, %v1391
    %v1393 = vpop.f32.mrb[0].mxu0
    %v1394 = vadd.f32 %v559, %v1393
    %v1395 = vpop.f32.mrb[0].mxu0
    %v1396 = vpop.f32.mrb[0].mxu0
    %1397 = vdwg.mxu0
    %1398 = vmatprep.subr.bf16.mxu0 %v1232
    %1399 = vmatpush1.bf16.msra.mxu0 %v1231
    %1400 = vmatprep.subr.bf16.mxu0 %v1236
    %1401 = vmatpush1.bf16.msra.mxu0 %v1235
    %1402 = vmatprep.subr.bf16.mxu0 %v1240
    %1403 = vmatpush1.bf16.msra.mxu0 %v1239
    %1404 = vmatprep.subr.bf16.mxu0 %v1244
    %1405 = vmatpush1.bf16.msra.mxu0 %v1243
    %1406 = vmatprep.subr.bf16.mxu0 %v1248
    %1407 = vmatpush1.bf16.msra.mxu0 %v1247
    %1408 = vmatprep.subr.bf16.mxu0 %v1252
    %1409 = vmatpush1.bf16.msra.mxu0 %v1251
    %1410 = vmatprep.subr.bf16.mxu0 %v1256
    %1411 = vmatpush1.bf16.msra.mxu0 %v1255
    %1412 = vmatprep.subr.bf16.mxu0 %v1260
    %1413 = vmatpush1.bf16.msra.mxu0 %v1259
    %1414 = vmatprep.subr.bf16.mxu0 %v1264
    %1415 = vmatpush1.bf16.msra.mxu0 %v1263
    %1416 = vmatprep.subr.bf16.mxu0 %v1268
    %1417 = vmatpush1.bf16.msra.mxu0 %v1267
    %1418 = vmatprep.subr.bf16.mxu0 %v1272
    %1419 = vmatpush1.bf16.msra.mxu0 %v1271
    %1420 = vmatprep.subr.bf16.mxu0 %v1276
    %1421 = vmatpush1.bf16.msra.mxu0 %v1275
    %1422 = vmatprep.subr.bf16.mxu0 %v1280
    %1423 = vmatpush1.bf16.msra.mxu0 %v1279
    %1424 = vmatprep.subr.bf16.mxu0 %v1284
    %1425 = vmatpush1.bf16.msra.mxu0 %v1283
    %1426 = vmatprep.subr.bf16.mxu0 %v1288
    %1427 = vmatpush1.bf16.msra.mxu0 %v1287
    %1428 = vmatprep.subr.bf16.mxu0 %v1292
    %1429 = vmatpush1.bf16.msra.mxu0 %v1291
    %1430 = vmatprep.mubr.bf16.mxu0 %v971
    %1431 = vmatmul.mubr.bf16.gmra.mrb[0].mxu0 %v871
    %v1432 = vpop.f32.mrb[0].mxu0
    %v1433 = vadd.f32 %v563, %v1432
    %v1434 = vpop.f32.mrb[0].mxu0
    %v1435 = vadd.f32 %v567, %v1434
    %v1436 = vpop.f32.mrb[0].mxu0
    %v1437 = vpop.f32.mrb[0].mxu0
    %1438 = vdwg.mxu0
    %v1443 = vrot.slane %v966, 4
    %v1444 = vrot.slane %v967, 4
    %v1445 = vrot.slane %v968, 4
    %v1446 = vrot.slane %v969, 4
    %v1455 = vrot.slane %v1392, 6
    %v1456 = vrot.slane %v1394, 6
    %v1457 = vrot.slane %v1433, 6
    %v1458 = vrot.slane %v1435, 6
    %v1463 = vsel %vm834, %v1443, %v1455
    %v1464 = vsel %vm834, %v1444, %v1456
    %v1465 = vsel %vm834, %v1445, %v1457
    %v1466 = vsel %vm834, %v1446, %v1458
    %v1467 = vxor.u32 %v1463, 2147483648
    %v1468 = vxor.u32 %v1464, 2147483648
    %v1469 = vxor.u32 %v1465, 2147483648
    %v1470 = vxor.u32 %v1466, 2147483648
    %v1471 = vmul.f32 %v1467, 1.442695
    %v1472 = vpow.pop %v1471
    %v1473 = vmul.f32 %v1468, 1.442695
    %v1474 = vpow.pop %v1473
    %v1475 = vmul.f32 %v1469, 1.442695
    %v1476 = vpow.pop %v1475
    %v1477 = vmul.f32 %v1470, 1.442695
    %v1478 = vpow.pop %v1477
    %v1479 = vadd.f32 %v1472, 1.0
    %v1480 = vadd.f32 %v1474, 1.0
    %v1481 = vadd.f32 %v1476, 1.0
    %v1482 = vadd.f32 %v1478, 1.0
    %v1483 = vrcp.pop %v1479
    %v1484 = vmul.f32 1.0, %v1483
    %v1485 = vrcp.pop %v1480
    %v1486 = vmul.f32 1.0, %v1485
    %v1487 = vrcp.pop %v1481
    %v1488 = vmul.f32 1.0, %v1487
    %v1489 = vrcp.pop %v1482
    %v1490 = vmul.f32 1.0, %v1489
    %v1491 = vmul.f32 %v1488, 2.0
    %v1492 = vsub.f32 %v1491, 1.0
    %v1493 = vmul.f32 %v1486, %v868
    %v1494 = vmul.f32 %v1484, %v1492
    %v1495 = vadd.f32 %v1493, %v1494
    %v1496 = vtanh.pop %v1495
    %v1497 = vmul.f32 %v1490, %v1496
    %v1498 = vpack.c.bf16 %v1497, %v1497
    %1499 = vmatprep.subr.bf16.mxu0 %v338
    %1500 = vmatpush1.bf16.msra.mxu0 %v337
    %1501 = vmatprep.subr.bf16.mxu0 %v342
    %1502 = vmatpush1.bf16.msra.mxu0 %v341
    %1503 = vmatprep.subr.bf16.mxu0 %v346
    %1504 = vmatpush1.bf16.msra.mxu0 %v345
    %1505 = vmatprep.subr.bf16.mxu0 %v350
    %1506 = vmatpush1.bf16.msra.mxu0 %v349
    %1507 = vmatprep.subr.bf16.mxu0 %v354
    %1508 = vmatpush1.bf16.msra.mxu0 %v353
    %1509 = vmatprep.subr.bf16.mxu0 %v358
    %1510 = vmatpush1.bf16.msra.mxu0 %v357
    %1511 = vmatprep.subr.bf16.mxu0 %v362
    %1512 = vmatpush1.bf16.msra.mxu0 %v361
    %1513 = vmatprep.subr.bf16.mxu0 %v366
    %1514 = vmatpush1.bf16.msra.mxu0 %v365
    %1515 = vmatprep.subr.bf16.mxu0 0
    %1516 = vmatpush1.bf16.msra.mxu0 0
    %1517 = vmatprep.subr.bf16.mxu0 0
    %1518 = vmatpush1.bf16.msra.mxu0 0
    %1519 = vmatprep.subr.bf16.mxu0 0
    %1520 = vmatpush1.bf16.msra.mxu0 0
    %1521 = vmatprep.subr.bf16.mxu0 0
    %1522 = vmatpush1.bf16.msra.mxu0 0
    %1523 = vmatprep.subr.bf16.mxu0 0
    %1524 = vmatpush1.bf16.msra.mxu0 0
    %1525 = vmatprep.subr.bf16.mxu0 0
    %1526 = vmatpush1.bf16.msra.mxu0 0
    %1527 = vmatprep.subr.bf16.mxu0 0
    %1528 = vmatpush1.bf16.msra.mxu0 0
    %1529 = vmatprep.subr.bf16.mxu0 0
    %1530 = vmatpush1.bf16.msra.mxu0 0
    %1531 = vmatprep.mubr.bf16.mxu0 0
    %1532 = vmatmul.mubr.bf16.gmra.mrb[0].mxu0 %v1498
    %v1533 = vpop.f32.mrb[0].mxu0
    %v1534 = vadd.f32 0.0, %v1533
    %v1535 = vpop.f32.mrb[0].mxu0
    %v1536 = vadd.f32 0.0, %v1535
    %v1537 = vpop.f32.mrb[0].mxu0
    %v1538 = vpop.f32.mrb[0].mxu0
    %1539 = vdwg.mxu0
    %1540 = vmatprep.subr.bf16.mxu0 %v340
    %1541 = vmatpush1.bf16.msra.mxu0 %v339
    %1542 = vmatprep.subr.bf16.mxu0 %v344
    %1543 = vmatpush1.bf16.msra.mxu0 %v343
    %1544 = vmatprep.subr.bf16.mxu0 %v348
    %1545 = vmatpush1.bf16.msra.mxu0 %v347
    %1546 = vmatprep.subr.bf16.mxu0 %v352
    %1547 = vmatpush1.bf16.msra.mxu0 %v351
    %1548 = vmatprep.subr.bf16.mxu0 %v356
    %1549 = vmatpush1.bf16.msra.mxu0 %v355
    %1550 = vmatprep.subr.bf16.mxu0 %v360
    %1551 = vmatpush1.bf16.msra.mxu0 %v359
    %1552 = vmatprep.subr.bf16.mxu0 %v364
    %1553 = vmatpush1.bf16.msra.mxu0 %v363
    %1554 = vmatprep.subr.bf16.mxu0 %v368
    %1555 = vmatpush1.bf16.msra.mxu0 %v367
    %1556 = vmatprep.subr.bf16.mxu0 0
    %1557 = vmatpush1.bf16.msra.mxu0 0
    %1558 = vmatprep.subr.bf16.mxu0 0
    %1559 = vmatpush1.bf16.msra.mxu0 0
    %1560 = vmatprep.subr.bf16.mxu0 0
    %1561 = vmatpush1.bf16.msra.mxu0 0
    %1562 = vmatprep.subr.bf16.mxu0 0
    %1563 = vmatpush1.bf16.msra.mxu0 0
    %1564 = vmatprep.subr.bf16.mxu0 0
    %1565 = vmatpush1.bf16.msra.mxu0 0
    %1566 = vmatprep.subr.bf16.mxu0 0
    %1567 = vmatpush1.bf16.msra.mxu0 0
    %1568 = vmatprep.subr.bf16.mxu0 0
    %1569 = vmatpush1.bf16.msra.mxu0 0
    %1570 = vmatprep.subr.bf16.mxu0 0
    %1571 = vmatpush1.bf16.msra.mxu0 0
    %1572 = vmatprep.mubr.bf16.mxu0 0
    %1573 = vmatmul.mubr.bf16.gmra.mrb[0].mxu0 %v1498
    %v1574 = vpop.f32.mrb[0].mxu0
    %v1575 = vadd.f32 0.0, %v1574
    %v1576 = vpop.f32.mrb[0].mxu0
    %v1577 = vadd.f32 0.0, %v1576
    %v1578 = vpop.f32.mrb[0].mxu0
    %v1579 = vpop.f32.mrb[0].mxu0
    %1580 = vdwg.mxu0
    %v1585 = vrot.slane %v1534, 2
    %v1586 = vrot.slane %v1536, 2
    %v1587 = vrot.slane %v1575, 2
    %v1588 = vrot.slane %v1577, 2
    %v1593 = vadd.f32 %v126, %v1585
    %v1594 = vadd.f32 %v128, %v1586
    %v1595 = vadd.f32 %v169, %v1587
    %v1596 = vadd.f32 %v171, %v1588
    %v1598 = vrot.slane %v1498, 1
    %1600 = vmatprep.subr.bf16.mxu0 %v1230
    %1601 = vmatpush1.bf16.msra.mxu0 %v1229
    %1602 = vmatprep.subr.bf16.mxu0 %v1234
    %1603 = vmatpush1.bf16.msra.mxu0 %v1233
    %1604 = vmatprep.subr.bf16.mxu0 %v1238
    %1605 = vmatpush1.bf16.msra.mxu0 %v1237
    %1606 = vmatprep.subr.bf16.mxu0 %v1242
    %1607 = vmatpush1.bf16.msra.mxu0 %v1241
    %1608 = vmatprep.subr.bf16.mxu0 %v1246
    %1609 = vmatpush1.bf16.msra.mxu0 %v1245
    %1610 = vmatprep.subr.bf16.mxu0 %v1250
    %1611 = vmatpush1.bf16.msra.mxu0 %v1249
    %1612 = vmatprep.subr.bf16.mxu0 %v1254
    %1613 = vmatpush1.bf16.msra.mxu0 %v1253
    %1614 = vmatprep.subr.bf16.mxu0 %v1258
    %1615 = vmatpush1.bf16.msra.mxu0 %v1257
    %1616 = vmatprep.subr.bf16.mxu0 %v1262
    %1617 = vmatpush1.bf16.msra.mxu0 %v1261
    %1618 = vmatprep.subr.bf16.mxu0 %v1266
    %1619 = vmatpush1.bf16.msra.mxu0 %v1265
    %1620 = vmatprep.subr.bf16.mxu0 %v1270
    %1621 = vmatpush1.bf16.msra.mxu0 %v1269
    %1622 = vmatprep.subr.bf16.mxu0 %v1274
    %1623 = vmatpush1.bf16.msra.mxu0 %v1273
    %1624 = vmatprep.subr.bf16.mxu0 %v1278
    %1625 = vmatpush1.bf16.msra.mxu0 %v1277
    %1626 = vmatprep.subr.bf16.mxu0 %v1282
    %1627 = vmatpush1.bf16.msra.mxu0 %v1281
    %1628 = vmatprep.subr.bf16.mxu0 %v1286
    %1629 = vmatpush1.bf16.msra.mxu0 %v1285
    %1630 = vmatprep.subr.bf16.mxu0 %v1290
    %1631 = vmatpush1.bf16.msra.mxu0 %v1289
    %1632 = vmatprep.mubr.bf16.mxu0 %v1598
    %1633 = vmatmul.mubr.bf16.gmra.mrb[0].mxu0 %v1498
    %v1634 = vpop.f32.mrb[0].mxu0
    %v1635 = vadd.f32 %v555, %v1634
    %v1636 = vpop.f32.mrb[0].mxu0
    %v1637 = vadd.f32 %v559, %v1636
    %v1638 = vpop.f32.mrb[0].mxu0
    %v1639 = vpop.f32.mrb[0].mxu0
    %1640 = vdwg.mxu0
    %1641 = vmatprep.subr.bf16.mxu0 %v1232
    %1642 = vmatpush1.bf16.msra.mxu0 %v1231
    %1643 = vmatprep.subr.bf16.mxu0 %v1236
    %1644 = vmatpush1.bf16.msra.mxu0 %v1235
    %1645 = vmatprep.subr.bf16.mxu0 %v1240
    %1646 = vmatpush1.bf16.msra.mxu0 %v1239
    %1647 = vmatprep.subr.bf16.mxu0 %v1244
    %1648 = vmatpush1.bf16.msra.mxu0 %v1243
    %1649 = vmatprep.subr.bf16.mxu0 %v1248
    %1650 = vmatpush1.bf16.msra.mxu0 %v1247
    %1651 = vmatprep.subr.bf16.mxu0 %v1252
    %1652 = vmatpush1.bf16.msra.mxu0 %v1251
    %1653 = vmatprep.subr.bf16.mxu0 %v1256
    %1654 = vmatpush1.bf16.msra.mxu0 %v1255
    %1655 = vmatprep.subr.bf16.mxu0 %v1260
    %1656 = vmatpush1.bf16.msra.mxu0 %v1259
    %1657 = vmatprep.subr.bf16.mxu0 %v1264
    %1658 = vmatpush1.bf16.msra.mxu0 %v1263
    %1659 = vmatprep.subr.bf16.mxu0 %v1268
    %1660 = vmatpush1.bf16.msra.mxu0 %v1267
    %1661 = vmatprep.subr.bf16.mxu0 %v1272
    %1662 = vmatpush1.bf16.msra.mxu0 %v1271
    %1663 = vmatprep.subr.bf16.mxu0 %v1276
    %1664 = vmatpush1.bf16.msra.mxu0 %v1275
    %1665 = vmatprep.subr.bf16.mxu0 %v1280
    %1666 = vmatpush1.bf16.msra.mxu0 %v1279
    %1667 = vmatprep.subr.bf16.mxu0 %v1284
    %1668 = vmatpush1.bf16.msra.mxu0 %v1283
    %1669 = vmatprep.subr.bf16.mxu0 %v1288
    %1670 = vmatpush1.bf16.msra.mxu0 %v1287
    %1671 = vmatprep.subr.bf16.mxu0 %v1292
    %1672 = vmatpush1.bf16.msra.mxu0 %v1291
    %1673 = vmatprep.mubr.bf16.mxu0 %v1598
    %1674 = vmatmul.mubr.bf16.gmra.mrb[0].mxu0 %v1498
    %v1675 = vpop.f32.mrb[0].mxu0
    %v1676 = vadd.f32 %v563, %v1675
    %v1677 = vpop.f32.mrb[0].mxu0
    %v1678 = vadd.f32 %v567, %v1677
    %v1679 = vpop.f32.mrb[0].mxu0
    %v1680 = vpop.f32.mrb[0].mxu0
    %1681 = vdwg.mxu0
    %v1686 = vrot.slane %v1593, 6
    %v1687 = vrot.slane %v1594, 6
    %v1688 = vrot.slane %v1595, 6
    %v1689 = vrot.slane %v1596, 6
    %v1698 = vrot.slane %v1635, 6
    %v1699 = vrot.slane %v1637, 6
    %v1700 = vrot.slane %v1676, 6
    %v1701 = vrot.slane %v1678, 6
    %v1706 = vsel %vm834, %v1686, %v1698
    %v1707 = vsel %vm834, %v1687, %v1699
    %v1708 = vsel %vm834, %v1688, %v1700
    %v1709 = vsel %vm834, %v1689, %v1701
    %v1710 = vxor.u32 %v1706, 2147483648
    %v1711 = vxor.u32 %v1707, 2147483648
    %v1712 = vxor.u32 %v1708, 2147483648
    %v1713 = vxor.u32 %v1709, 2147483648
    %v1714 = vmul.f32 %v1710, 1.442695
    %v1715 = vpow.pop %v1714
    %v1716 = vmul.f32 %v1711, 1.442695
    %v1717 = vpow.pop %v1716
    %v1718 = vmul.f32 %v1712, 1.442695
    %v1719 = vpow.pop %v1718
    %v1720 = vmul.f32 %v1713, 1.442695
    %v1721 = vpow.pop %v1720
    %v1722 = vadd.f32 %v1715, 1.0
    %v1723 = vadd.f32 %v1717, 1.0
    %v1724 = vadd.f32 %v1719, 1.0
    %v1725 = vadd.f32 %v1721, 1.0
    %v1726 = vrcp.pop %v1722
    %v1727 = vmul.f32 1.0, %v1726
    %v1728 = vrcp.pop %v1723
    %v1729 = vmul.f32 1.0, %v1728
    %v1730 = vrcp.pop %v1724
    %v1731 = vmul.f32 1.0, %v1730
    %v1732 = vrcp.pop %v1725
    %v1733 = vmul.f32 1.0, %v1732
    %v1734 = vmul.f32 %v1731, 2.0
    %v1735 = vsub.f32 %v1734, 1.0
    %v1736 = vmul.f32 %v1729, %v1495
    %v1737 = vmul.f32 %v1727, %v1735
    %v1738 = vadd.f32 %v1736, %v1737
    %v1739 = vtanh.pop %v1738
    %v1740 = vmul.f32 %v1733, %v1739
    %v1741 = vpack.c.bf16 %v1740, %v1740
    %1742 = vmatprep.subr.bf16.mxu0 %v338
    %1743 = vmatpush1.bf16.msra.mxu0 %v337
    %1744 = vmatprep.subr.bf16.mxu0 %v342
    %1745 = vmatpush1.bf16.msra.mxu0 %v341
    %1746 = vmatprep.subr.bf16.mxu0 %v346
    %1747 = vmatpush1.bf16.msra.mxu0 %v345
    %1748 = vmatprep.subr.bf16.mxu0 %v350
    %1749 = vmatpush1.bf16.msra.mxu0 %v349
    %1750 = vmatprep.subr.bf16.mxu0 %v354
    %1751 = vmatpush1.bf16.msra.mxu0 %v353
    %1752 = vmatprep.subr.bf16.mxu0 %v358
    %1753 = vmatpush1.bf16.msra.mxu0 %v357
    %1754 = vmatprep.subr.bf16.mxu0 %v362
    %1755 = vmatpush1.bf16.msra.mxu0 %v361
    %1756 = vmatprep.subr.bf16.mxu0 %v366
    %1757 = vmatpush1.bf16.msra.mxu0 %v365
    %1758 = vmatprep.subr.bf16.mxu0 0
    %1759 = vmatpush1.bf16.msra.mxu0 0
    %1760 = vmatprep.subr.bf16.mxu0 0
    %1761 = vmatpush1.bf16.msra.mxu0 0
    %1762 = vmatprep.subr.bf16.mxu0 0
    %1763 = vmatpush1.bf16.msra.mxu0 0
    %1764 = vmatprep.subr.bf16.mxu0 0
    %1765 = vmatpush1.bf16.msra.mxu0 0
    %1766 = vmatprep.subr.bf16.mxu0 0
    %1767 = vmatpush1.bf16.msra.mxu0 0
    %1768 = vmatprep.subr.bf16.mxu0 0
    %1769 = vmatpush1.bf16.msra.mxu0 0
    %1770 = vmatprep.subr.bf16.mxu0 0
    %1771 = vmatpush1.bf16.msra.mxu0 0
    %1772 = vmatprep.subr.bf16.mxu0 0
    %1773 = vmatpush1.bf16.msra.mxu0 0
    %1774 = vmatprep.mubr.bf16.mxu0 0
    %1775 = vmatmul.mubr.bf16.gmra.mrb[0].mxu0 %v1741
    %v1776 = vpop.f32.mrb[0].mxu0
    %v1777 = vadd.f32 0.0, %v1776
    %v1778 = vpop.f32.mrb[0].mxu0
    %v1779 = vadd.f32 0.0, %v1778
    %v1780 = vpop.f32.mrb[0].mxu0
    %v1781 = vpop.f32.mrb[0].mxu0
    %1782 = vdwg.mxu0
    %1783 = vmatprep.subr.bf16.mxu0 %v340
    %1784 = vmatpush1.bf16.msra.mxu0 %v339
    %1785 = vmatprep.subr.bf16.mxu0 %v344
    %1786 = vmatpush1.bf16.msra.mxu0 %v343
    %1787 = vmatprep.subr.bf16.mxu0 %v348
    %1788 = vmatpush1.bf16.msra.mxu0 %v347
    %1789 = vmatprep.subr.bf16.mxu0 %v352
    %1790 = vmatpush1.bf16.msra.mxu0 %v351
    %1791 = vmatprep.subr.bf16.mxu0 %v356
    %1792 = vmatpush1.bf16.msra.mxu0 %v355
    %1793 = vmatprep.subr.bf16.mxu0 %v360
    %1794 = vmatpush1.bf16.msra.mxu0 %v359
    %1795 = vmatprep.subr.bf16.mxu0 %v364
    %1796 = vmatpush1.bf16.msra.mxu0 %v363
    %1797 = vmatprep.subr.bf16.mxu0 %v368
    %1798 = vmatpush1.bf16.msra.mxu0 %v367
    %1799 = vmatprep.subr.bf16.mxu0 0
    %1800 = vmatpush1.bf16.msra.mxu0 0
    %1801 = vmatprep.subr.bf16.mxu0 0
    %1802 = vmatpush1.bf16.msra.mxu0 0
    %1803 = vmatprep.subr.bf16.mxu0 0
    %1804 = vmatpush1.bf16.msra.mxu0 0
    %1805 = vmatprep.subr.bf16.mxu0 0
    %1806 = vmatpush1.bf16.msra.mxu0 0
    %1807 = vmatprep.subr.bf16.mxu0 0
    %1808 = vmatpush1.bf16.msra.mxu0 0
    %1809 = vmatprep.subr.bf16.mxu0 0
    %1810 = vmatpush1.bf16.msra.mxu0 0
    %1811 = vmatprep.subr.bf16.mxu0 0
    %1812 = vmatpush1.bf16.msra.mxu0 0
    %1813 = vmatprep.subr.bf16.mxu0 0
    %1814 = vmatpush1.bf16.msra.mxu0 0
    %1815 = vmatprep.mubr.bf16.mxu0 0
    %1816 = vmatmul.mubr.bf16.gmra.mrb[0].mxu0 %v1741
    %v1817 = vpop.f32.mrb[0].mxu0
    %v1818 = vadd.f32 0.0, %v1817
    %v1819 = vpop.f32.mrb[0].mxu0
    %v1820 = vadd.f32 0.0, %v1819
    %v1821 = vpop.f32.mrb[0].mxu0
    %v1822 = vpop.f32.mrb[0].mxu0
    %1823 = vdwg.mxu0
    %v1824 = vadd.f32 %v130, %v1777
    %v1825 = vadd.f32 %v132, %v1779
    %v1826 = vadd.f32 %v173, %v1818
    %v1827 = vadd.f32 %v175, %v1820
    %v1829 = vrot.slane %v1741, 1
    %1831 = vmatprep.subr.bf16.mxu0 %v1230
    %1832 = vmatpush1.bf16.msra.mxu0 %v1229
    %1833 = vmatprep.subr.bf16.mxu0 %v1234
    %1834 = vmatpush1.bf16.msra.mxu0 %v1233
    %1835 = vmatprep.subr.bf16.mxu0 %v1238
    %1836 = vmatpush1.bf16.msra.mxu0 %v1237
    %1837 = vmatprep.subr.bf16.mxu0 %v1242
    %1838 = vmatpush1.bf16.msra.mxu0 %v1241
    %1839 = vmatprep.subr.bf16.mxu0 %v1246
    %1840 = vmatpush1.bf16.msra.mxu0 %v1245
    %1841 = vmatprep.subr.bf16.mxu0 %v1250
    %1842 = vmatpush1.bf16.msra.mxu0 %v1249
    %1843 = vmatprep.subr.bf16.mxu0 %v1254
    %1844 = vmatpush1.bf16.msra.mxu0 %v1253
    %1845 = vmatprep.subr.bf16.mxu0 %v1258
    %1846 = vmatpush1.bf16.msra.mxu0 %v1257
    %1847 = vmatprep.subr.bf16.mxu0 %v1262
    %1848 = vmatpush1.bf16.msra.mxu0 %v1261
    %1849 = vmatprep.subr.bf16.mxu0 %v1266
    %1850 = vmatpush1.bf16.msra.mxu0 %v1265
    %1851 = vmatprep.subr.bf16.mxu0 %v1270
    %1852 = vmatpush1.bf16.msra.mxu0 %v1269
    %1853 = vmatprep.subr.bf16.mxu0 %v1274
    %1854 = vmatpush1.bf16.msra.mxu0 %v1273
    %1855 = vmatprep.subr.bf16.mxu0 %v1278
    %1856 = vmatpush1.bf16.msra.mxu0 %v1277
    %1857 = vmatprep.subr.bf16.mxu0 %v1282
    %1858 = vmatpush1.bf16.msra.mxu0 %v1281
    %1859 = vmatprep.subr.bf16.mxu0 %v1286
    %1860 = vmatpush1.bf16.msra.mxu0 %v1285
    %1861 = vmatprep.subr.bf16.mxu0 %v1290
    %1862 = vmatpush1.bf16.msra.mxu0 %v1289
    %1863 = vmatprep.mubr.bf16.mxu0 %v1829
    %1864 = vmatmul.mubr.bf16.gmra.mrb[0].mxu0 %v1741
    %v1865 = vpop.f32.mrb[0].mxu0
    %v1866 = vadd.f32 %v555, %v1865
    %v1867 = vpop.f32.mrb[0].mxu0
    %v1868 = vadd.f32 %v559, %v1867
    %v1869 = vpop.f32.mrb[0].mxu0
    %v1870 = vpop.f32.mrb[0].mxu0
    %1871 = vdwg.mxu0
    %1872 = vmatprep.subr.bf16.mxu0 %v1232
    %1873 = vmatpush1.bf16.msra.mxu0 %v1231
    %1874 = vmatprep.subr.bf16.mxu0 %v1236
    %1875 = vmatpush1.bf16.msra.mxu0 %v1235
    %1876 = vmatprep.subr.bf16.mxu0 %v1240
    %1877 = vmatpush1.bf16.msra.mxu0 %v1239
    %1878 = vmatprep.subr.bf16.mxu0 %v1244
    %1879 = vmatpush1.bf16.msra.mxu0 %v1243
    %1880 = vmatprep.subr.bf16.mxu0 %v1248
    %1881 = vmatpush1.bf16.msra.mxu0 %v1247
    %1882 = vmatprep.subr.bf16.mxu0 %v1252
    %1883 = vmatpush1.bf16.msra.mxu0 %v1251
    %1884 = vmatprep.subr.bf16.mxu0 %v1256
    %1885 = vmatpush1.bf16.msra.mxu0 %v1255
    %1886 = vmatprep.subr.bf16.mxu0 %v1260
    %1887 = vmatpush1.bf16.msra.mxu0 %v1259
    %1888 = vmatprep.subr.bf16.mxu0 %v1264
    %1889 = vmatpush1.bf16.msra.mxu0 %v1263
    %1890 = vmatprep.subr.bf16.mxu0 %v1268
    %1891 = vmatpush1.bf16.msra.mxu0 %v1267
    %1892 = vmatprep.subr.bf16.mxu0 %v1272
    %1893 = vmatpush1.bf16.msra.mxu0 %v1271
    %1894 = vmatprep.subr.bf16.mxu0 %v1276
    %1895 = vmatpush1.bf16.msra.mxu0 %v1275
    %1896 = vmatprep.subr.bf16.mxu0 %v1280
    %1897 = vmatpush1.bf16.msra.mxu0 %v1279
    %1898 = vmatprep.subr.bf16.mxu0 %v1284
    %1899 = vmatpush1.bf16.msra.mxu0 %v1283
    %1900 = vmatprep.subr.bf16.mxu0 %v1288
    %1901 = vmatpush1.bf16.msra.mxu0 %v1287
    %1902 = vmatprep.subr.bf16.mxu0 %v1292
    %1903 = vmatpush1.bf16.msra.mxu0 %v1291
    %1904 = vmatprep.mubr.bf16.mxu0 %v1829
    %1905 = vmatmul.mubr.bf16.gmra.mrb[0].mxu0 %v1741
    %v1906 = vpop.f32.mrb[0].mxu0
    %v1907 = vadd.f32 %v563, %v1906
    %v1908 = vpop.f32.mrb[0].mxu0
    %v1909 = vadd.f32 %v567, %v1908
    %v1910 = vpop.f32.mrb[0].mxu0
    %v1911 = vpop.f32.mrb[0].mxu0
    %1912 = vdwg.mxu0
    %v1917 = vrot.slane %v1866, 6
    %v1918 = vrot.slane %v1868, 6
    %v1919 = vrot.slane %v1907, 6
    %v1920 = vrot.slane %v1909, 6
    %v1925 = vsel %vm834, %v1824, %v1917
    %v1926 = vsel %vm834, %v1825, %v1918
    %v1927 = vsel %vm834, %v1826, %v1919
    %v1928 = vsel %vm834, %v1827, %v1920
    %v1929 = vxor.u32 %v1925, 2147483648
    %v1930 = vxor.u32 %v1926, 2147483648
    %v1931 = vxor.u32 %v1927, 2147483648
    %v1932 = vxor.u32 %v1928, 2147483648
    %v1933 = vmul.f32 %v1929, 1.442695
    %v1934 = vpow.pop %v1933
    %v1935 = vmul.f32 %v1930, 1.442695
    %v1936 = vpow.pop %v1935
    %v1937 = vmul.f32 %v1931, 1.442695
    %v1938 = vpow.pop %v1937
    %v1939 = vmul.f32 %v1932, 1.442695
    %v1940 = vpow.pop %v1939
    %v1941 = vadd.f32 %v1934, 1.0
    %v1942 = vadd.f32 %v1936, 1.0
    %v1943 = vadd.f32 %v1938, 1.0
    %v1944 = vadd.f32 %v1940, 1.0
    %v1945 = vrcp.pop %v1941
    %v1946 = vmul.f32 1.0, %v1945
    %v1947 = vrcp.pop %v1942
    %v1948 = vmul.f32 1.0, %v1947
    %v1949 = vrcp.pop %v1943
    %v1950 = vmul.f32 1.0, %v1949
    %v1951 = vrcp.pop %v1944
    %v1952 = vmul.f32 1.0, %v1951
    %v1953 = vmul.f32 %v1950, 2.0
    %v1954 = vsub.f32 %v1953, 1.0
    %v1955 = vmul.f32 %v1948, %v1738
    %v1956 = vmul.f32 %v1946, %v1954
    %v1957 = vadd.f32 %v1955, %v1956
    %v1958 = vtanh.pop %v1957
    %v1959 = vmul.f32 %v1952, %v1958
    %v1960 = vpack.c.bf16 %v1959, %v1959
    %1961 = vmatprep.subr.bf16.mxu0 %v338
    %1962 = vmatpush1.bf16.msra.mxu0 %v337
    %1963 = vmatprep.subr.bf16.mxu0 %v342
    %1964 = vmatpush1.bf16.msra.mxu0 %v341
    %1965 = vmatprep.subr.bf16.mxu0 %v346
    %1966 = vmatpush1.bf16.msra.mxu0 %v345
    %1967 = vmatprep.subr.bf16.mxu0 %v350
    %1968 = vmatpush1.bf16.msra.mxu0 %v349
    %1969 = vmatprep.subr.bf16.mxu0 %v354
    %1970 = vmatpush1.bf16.msra.mxu0 %v353
    %1971 = vmatprep.subr.bf16.mxu0 %v358
    %1972 = vmatpush1.bf16.msra.mxu0 %v357
    %1973 = vmatprep.subr.bf16.mxu0 %v362
    %1974 = vmatpush1.bf16.msra.mxu0 %v361
    %1975 = vmatprep.subr.bf16.mxu0 %v366
    %1976 = vmatpush1.bf16.msra.mxu0 %v365
    %1977 = vmatprep.subr.bf16.mxu0 0
    %1978 = vmatpush1.bf16.msra.mxu0 0
    %1979 = vmatprep.subr.bf16.mxu0 0
    %1980 = vmatpush1.bf16.msra.mxu0 0
    %1981 = vmatprep.subr.bf16.mxu0 0
    %1982 = vmatpush1.bf16.msra.mxu0 0
    %1983 = vmatprep.subr.bf16.mxu0 0
    %1984 = vmatpush1.bf16.msra.mxu0 0
    %1985 = vmatprep.subr.bf16.mxu0 0
    %1986 = vmatpush1.bf16.msra.mxu0 0
    %1987 = vmatprep.subr.bf16.mxu0 0
    %1988 = vmatpush1.bf16.msra.mxu0 0
    %1989 = vmatprep.subr.bf16.mxu0 0
    %1990 = vmatpush1.bf16.msra.mxu0 0
    %1991 = vmatprep.subr.bf16.mxu0 0
    %1992 = vmatpush1.bf16.msra.mxu0 0
    %1993 = vmatprep.mubr.bf16.mxu0 0
    %1994 = vmatmul.mubr.bf16.gmra.mrb[0].mxu0 %v1960
    %v1995 = vpop.f32.mrb[0].mxu0
    %v1996 = vadd.f32 0.0, %v1995
    %v1997 = vpop.f32.mrb[0].mxu0
    %v1998 = vadd.f32 0.0, %v1997
    %v1999 = vpop.f32.mrb[0].mxu0
    %v2000 = vpop.f32.mrb[0].mxu0
    %2001 = vdwg.mxu0
    %2002 = vmatprep.subr.bf16.mxu0 %v340
    %2003 = vmatpush1.bf16.msra.mxu0 %v339
    %2004 = vmatprep.subr.bf16.mxu0 %v344
    %2005 = vmatpush1.bf16.msra.mxu0 %v343
    %2006 = vmatprep.subr.bf16.mxu0 %v348
    %2007 = vmatpush1.bf16.msra.mxu0 %v347
    %2008 = vmatprep.subr.bf16.mxu0 %v352
    %2009 = vmatpush1.bf16.msra.mxu0 %v351
    %2010 = vmatprep.subr.bf16.mxu0 %v356
    %2011 = vmatpush1.bf16.msra.mxu0 %v355
    %2012 = vmatprep.subr.bf16.mxu0 %v360
    %2013 = vmatpush1.bf16.msra.mxu0 %v359
    %2014 = vmatprep.subr.bf16.mxu0 %v364
    %2015 = vmatpush1.bf16.msra.mxu0 %v363
    %2016 = vmatprep.subr.bf16.mxu0 %v368
    %2017 = vmatpush1.bf16.msra.mxu0 %v367
    %2018 = vmatprep.subr.bf16.mxu0 0
    %2019 = vmatpush1.bf16.msra.mxu0 0
    %2020 = vmatprep.subr.bf16.mxu0 0
    %2021 = vmatpush1.bf16.msra.mxu0 0
    %2022 = vmatprep.subr.bf16.mxu0 0
    %2023 = vmatpush1.bf16.msra.mxu0 0
    %2024 = vmatprep.subr.bf16.mxu0 0
    %2025 = vmatpush1.bf16.msra.mxu0 0
    %2026 = vmatprep.subr.bf16.mxu0 0
    %2027 = vmatpush1.bf16.msra.mxu0 0
    %2028 = vmatprep.subr.bf16.mxu0 0
    %2029 = vmatpush1.bf16.msra.mxu0 0
    %2030 = vmatprep.subr.bf16.mxu0 0
    %2031 = vmatpush1.bf16.msra.mxu0 0
    %2032 = vmatprep.subr.bf16.mxu0 0
    %2033 = vmatpush1.bf16.msra.mxu0 0
    %2034 = vmatprep.mubr.bf16.mxu0 0
    %2035 = vmatmul.mubr.bf16.gmra.mrb[0].mxu0 %v1960
    %v2036 = vpop.f32.mrb[0].mxu0
    %v2037 = vadd.f32 0.0, %v2036
    %v2038 = vpop.f32.mrb[0].mxu0
    %v2039 = vadd.f32 0.0, %v2038
    %v2040 = vpop.f32.mrb[0].mxu0
    %v2041 = vpop.f32.mrb[0].mxu0
    %2042 = vdwg.mxu0
    %v2047 = vrot.slane %v1996, 6
    %v2048 = vrot.slane %v1998, 6
    %v2049 = vrot.slane %v2037, 6
    %v2050 = vrot.slane %v2039, 6
    %v2055 = vadd.f32 %v130, %v2047
    %v2056 = vadd.f32 %v132, %v2048
    %v2057 = vadd.f32 %v173, %v2049
    %v2058 = vadd.f32 %v175, %v2050
    %v2060 = vrot.slane %v1960, 1
    %2062 = vmatprep.subr.bf16.mxu0 %v1230
    %2063 = vmatpush1.bf16.msra.mxu0 %v1229
    %2064 = vmatprep.subr.bf16.mxu0 %v1234
    %2065 = vmatpush1.bf16.msra.mxu0 %v1233
    %2066 = vmatprep.subr.bf16.mxu0 %v1238
    %2067 = vmatpush1.bf16.msra.mxu0 %v1237
    %2068 = vmatprep.subr.bf16.mxu0 %v1242
    %2069 = vmatpush1.bf16.msra.mxu0 %v1241
    %2070 = vmatprep.subr.bf16.mxu0 %v1246
    %2071 = vmatpush1.bf16.msra.mxu0 %v1245
    %2072 = vmatprep.subr.bf16.mxu0 %v1250
    %2073 = vmatpush1.bf16.msra.mxu0 %v1249
    %2074 = vmatprep.subr.bf16.mxu0 %v1254
    %2075 = vmatpush1.bf16.msra.mxu0 %v1253
    %2076 = vmatprep.subr.bf16.mxu0 %v1258
    %2077 = vmatpush1.bf16.msra.mxu0 %v1257
    %2078 = vmatprep.subr.bf16.mxu0 %v1262
    %2079 = vmatpush1.bf16.msra.mxu0 %v1261
    %2080 = vmatprep.subr.bf16.mxu0 %v1266
    %2081 = vmatpush1.bf16.msra.mxu0 %v1265
    %2082 = vmatprep.subr.bf16.mxu0 %v1270
    %2083 = vmatpush1.bf16.msra.mxu0 %v1269
    %2084 = vmatprep.subr.bf16.mxu0 %v1274
    %2085 = vmatpush1.bf16.msra.mxu0 %v1273
    %2086 = vmatprep.subr.bf16.mxu0 %v1278
    %2087 = vmatpush1.bf16.msra.mxu0 %v1277
    %2088 = vmatprep.subr.bf16.mxu0 %v1282
    %2089 = vmatpush1.bf16.msra.mxu0 %v1281
    %2090 = vmatprep.subr.bf16.mxu0 %v1286
    %2091 = vmatpush1.bf16.msra.mxu0 %v1285
    %2092 = vmatprep.subr.bf16.mxu0 %v1290
    %2093 = vmatpush1.bf16.msra.mxu0 %v1289
    %2094 = vmatprep.mubr.bf16.mxu0 %v2060
    %2095 = vmatmul.mubr.bf16.gmra.mrb[0].mxu0 %v1960
    %v2096 = vpop.f32.mrb[0].mxu0
    %v2097 = vadd.f32 %v555, %v2096
    %v2098 = vpop.f32.mrb[0].mxu0
    %v2099 = vadd.f32 %v559, %v2098
    %v2100 = vpop.f32.mrb[0].mxu0
    %v2101 = vpop.f32.mrb[0].mxu0
    %2102 = vdwg.mxu0
    %2103 = vmatprep.subr.bf16.mxu0 %v1232
    %2104 = vmatpush1.bf16.msra.mxu0 %v1231
    %2105 = vmatprep.subr.bf16.mxu0 %v1236
    %2106 = vmatpush1.bf16.msra.mxu0 %v1235
    %2107 = vmatprep.subr.bf16.mxu0 %v1240
    %2108 = vmatpush1.bf16.msra.mxu0 %v1239
    %2109 = vmatprep.subr.bf16.mxu0 %v1244
    %2110 = vmatpush1.bf16.msra.mxu0 %v1243
    %2111 = vmatprep.subr.bf16.mxu0 %v1248
    %2112 = vmatpush1.bf16.msra.mxu0 %v1247
    %2113 = vmatprep.subr.bf16.mxu0 %v1252
    %2114 = vmatpush1.bf16.msra.mxu0 %v1251
    %2115 = vmatprep.subr.bf16.mxu0 %v1256
    %2116 = vmatpush1.bf16.msra.mxu0 %v1255
    %2117 = vmatprep.subr.bf16.mxu0 %v1260
    %2118 = vmatpush1.bf16.msra.mxu0 %v1259
    %2119 = vmatprep.subr.bf16.mxu0 %v1264
    %2120 = vmatpush1.bf16.msra.mxu0 %v1263
    %2121 = vmatprep.subr.bf16.mxu0 %v1268
    %2122 = vmatpush1.bf16.msra.mxu0 %v1267
    %2123 = vmatprep.subr.bf16.mxu0 %v1272
    %2124 = vmatpush1.bf16.msra.mxu0 %v1271
    %2125 = vmatprep.subr.bf16.mxu0 %v1276
    %2126 = vmatpush1.bf16.msra.mxu0 %v1275
    %2127 = vmatprep.subr.bf16.mxu0 %v1280
    %2128 = vmatpush1.bf16.msra.mxu0 %v1279
    %2129 = vmatprep.subr.bf16.mxu0 %v1284
    %2130 = vmatpush1.bf16.msra.mxu0 %v1283
    %2131 = vmatprep.subr.bf16.mxu0 %v1288
    %2132 = vmatpush1.bf16.msra.mxu0 %v1287
    %2133 = vmatprep.subr.bf16.mxu0 %v1292
    %2134 = vmatpush1.bf16.msra.mxu0 %v1291
    %2135 = vmatprep.mubr.bf16.mxu0 %v2060
    %2136 = vmatmul.mubr.bf16.gmra.mrb[0].mxu0 %v1960
    %v2137 = vpop.f32.mrb[0].mxu0
    %v2138 = vadd.f32 %v563, %v2137
    %v2139 = vpop.f32.mrb[0].mxu0
    %v2140 = vadd.f32 %v567, %v2139
    %v2141 = vpop.f32.mrb[0].mxu0
    %v2142 = vpop.f32.mrb[0].mxu0
    %2143 = vdwg.mxu0
    %v2148 = vrot.slane %v2055, 2
    %v2149 = vrot.slane %v2056, 2
    %v2150 = vrot.slane %v2057, 2
    %v2151 = vrot.slane %v2058, 2
    %v2160 = vrot.slane %v2097, 6
    %v2161 = vrot.slane %v2099, 6
    %v2162 = vrot.slane %v2138, 6
    %v2163 = vrot.slane %v2140, 6
    %v2168 = vsel %vm834, %v2148, %v2160
    %v2169 = vsel %vm834, %v2149, %v2161
    %v2170 = vsel %vm834, %v2150, %v2162
    %v2171 = vsel %vm834, %v2151, %v2163
    %v2172 = vxor.u32 %v2168, 2147483648
    %v2173 = vxor.u32 %v2169, 2147483648
    %v2174 = vxor.u32 %v2170, 2147483648
    %v2175 = vxor.u32 %v2171, 2147483648
    %v2176 = vmul.f32 %v2172, 1.442695
    %v2177 = vpow.pop %v2176
    %v2178 = vmul.f32 %v2173, 1.442695
    %v2179 = vpow.pop %v2178
    %v2180 = vmul.f32 %v2174, 1.442695
    %v2181 = vpow.pop %v2180
    %v2182 = vmul.f32 %v2175, 1.442695
    %v2183 = vpow.pop %v2182
    %v2184 = vadd.f32 %v2177, 1.0
    %v2185 = vadd.f32 %v2179, 1.0
    %v2186 = vadd.f32 %v2181, 1.0
    %v2187 = vadd.f32 %v2183, 1.0
    %v2188 = vrcp.pop %v2184
    %v2189 = vmul.f32 1.0, %v2188
    %v2190 = vrcp.pop %v2185
    %v2191 = vmul.f32 1.0, %v2190
    %v2192 = vrcp.pop %v2186
    %v2193 = vmul.f32 1.0, %v2192
    %v2194 = vrcp.pop %v2187
    %v2195 = vmul.f32 1.0, %v2194
    %v2196 = vmul.f32 %v2193, 2.0
    %v2197 = vsub.f32 %v2196, 1.0
    %v2198 = vmul.f32 %v2191, %v1957
    %v2199 = vmul.f32 %v2189, %v2197
    %v2200 = vadd.f32 %v2198, %v2199
    %v2201 = vtanh.pop %v2200
    %v2202 = vmul.f32 %v2195, %v2201
    %v2203 = vpack.c.bf16 %v2202, %v2202
    %2204 = vmatprep.subr.bf16.mxu0 %v338
    %2205 = vmatpush1.bf16.msra.mxu0 %v337
    %2206 = vmatprep.subr.bf16.mxu0 %v342
    %2207 = vmatpush1.bf16.msra.mxu0 %v341
    %2208 = vmatprep.subr.bf16.mxu0 %v346
    %2209 = vmatpush1.bf16.msra.mxu0 %v345
    %2210 = vmatprep.subr.bf16.mxu0 %v350
    %2211 = vmatpush1.bf16.msra.mxu0 %v349
    %2212 = vmatprep.subr.bf16.mxu0 %v354
    %2213 = vmatpush1.bf16.msra.mxu0 %v353
    %2214 = vmatprep.subr.bf16.mxu0 %v358
    %2215 = vmatpush1.bf16.msra.mxu0 %v357
    %2216 = vmatprep.subr.bf16.mxu0 %v362
    %2217 = vmatpush1.bf16.msra.mxu0 %v361
    %2218 = vmatprep.subr.bf16.mxu0 %v366
    %2219 = vmatpush1.bf16.msra.mxu0 %v365
    %2220 = vmatprep.subr.bf16.mxu0 0
    %2221 = vmatpush1.bf16.msra.mxu0 0
    %2222 = vmatprep.subr.bf16.mxu0 0
    %2223 = vmatpush1.bf16.msra.mxu0 0
    %2224 = vmatprep.subr.bf16.mxu0 0
    %2225 = vmatpush1.bf16.msra.mxu0 0
    %2226 = vmatprep.subr.bf16.mxu0 0
    %2227 = vmatpush1.bf16.msra.mxu0 0
    %2228 = vmatprep.subr.bf16.mxu0 0
    %2229 = vmatpush1.bf16.msra.mxu0 0
    %2230 = vmatprep.subr.bf16.mxu0 0
    %2231 = vmatpush1.bf16.msra.mxu0 0
    %2232 = vmatprep.subr.bf16.mxu0 0
    %2233 = vmatpush1.bf16.msra.mxu0 0
    %2234 = vmatprep.subr.bf16.mxu0 0
    %2235 = vmatpush1.bf16.msra.mxu0 0
    %2236 = vmatprep.mubr.bf16.mxu0 0
    %2237 = vmatmul.mubr.bf16.gmra.mrb[0].mxu0 %v2203
    %v2238 = vpop.f32.mrb[0].mxu0
    %v2239 = vadd.f32 0.0, %v2238
    %v2240 = vpop.f32.mrb[0].mxu0
    %v2241 = vadd.f32 0.0, %v2240
    %v2242 = vpop.f32.mrb[0].mxu0
    %v2243 = vpop.f32.mrb[0].mxu0
    %2244 = vdwg.mxu0
    %2245 = vmatprep.subr.bf16.mxu0 %v340
    %2246 = vmatpush1.bf16.msra.mxu0 %v339
    %2247 = vmatprep.subr.bf16.mxu0 %v344
    %2248 = vmatpush1.bf16.msra.mxu0 %v343
    %2249 = vmatprep.subr.bf16.mxu0 %v348
    %2250 = vmatpush1.bf16.msra.mxu0 %v347
    %2251 = vmatprep.subr.bf16.mxu0 %v352
    %2252 = vmatpush1.bf16.msra.mxu0 %v351
    %2253 = vmatprep.subr.bf16.mxu0 %v356
    %2254 = vmatpush1.bf16.msra.mxu0 %v355
    %2255 = vmatprep.subr.bf16.mxu0 %v360
    %2256 = vmatpush1.bf16.msra.mxu0 %v359
    %2257 = vmatprep.subr.bf16.mxu0 %v364
    %2258 = vmatpush1.bf16.msra.mxu0 %v363
    %2259 = vmatprep.subr.bf16.mxu0 %v368
    %2260 = vmatpush1.bf16.msra.mxu0 %v367
    %2261 = vmatprep.subr.bf16.mxu0 0
    %2262 = vmatpush1.bf16.msra.mxu0 0
    %2263 = vmatprep.subr.bf16.mxu0 0
    %2264 = vmatpush1.bf16.msra.mxu0 0
    %2265 = vmatprep.subr.bf16.mxu0 0
    %2266 = vmatpush1.bf16.msra.mxu0 0
    %2267 = vmatprep.subr.bf16.mxu0 0
    %2268 = vmatpush1.bf16.msra.mxu0 0
    %2269 = vmatprep.subr.bf16.mxu0 0
    %2270 = vmatpush1.bf16.msra.mxu0 0
    %2271 = vmatprep.subr.bf16.mxu0 0
    %2272 = vmatpush1.bf16.msra.mxu0 0
    %2273 = vmatprep.subr.bf16.mxu0 0
    %2274 = vmatpush1.bf16.msra.mxu0 0
    %2275 = vmatprep.subr.bf16.mxu0 0
    %2276 = vmatpush1.bf16.msra.mxu0 0
    %2277 = vmatprep.mubr.bf16.mxu0 0
    %2278 = vmatmul.mubr.bf16.gmra.mrb[0].mxu0 %v2203
    %v2279 = vpop.f32.mrb[0].mxu0
    %v2280 = vadd.f32 0.0, %v2279
    %v2281 = vpop.f32.mrb[0].mxu0
    %v2282 = vadd.f32 0.0, %v2281
    %v2283 = vpop.f32.mrb[0].mxu0
    %v2284 = vpop.f32.mrb[0].mxu0
    %2285 = vdwg.mxu0
    %v2290 = vrot.slane %v2239, 4
    %v2291 = vrot.slane %v2241, 4
    %v2292 = vrot.slane %v2280, 4
    %v2293 = vrot.slane %v2282, 4
    %v2298 = vadd.f32 %v130, %v2290
    %v2299 = vadd.f32 %v132, %v2291
    %v2300 = vadd.f32 %v173, %v2292
    %v2301 = vadd.f32 %v175, %v2293
    %v2303 = vrot.slane %v2203, 1
    %2305 = vmatprep.subr.bf16.mxu0 %v1230
    %2306 = vmatpush1.bf16.msra.mxu0 %v1229
    %2307 = vmatprep.subr.bf16.mxu0 %v1234
    %2308 = vmatpush1.bf16.msra.mxu0 %v1233
    %2309 = vmatprep.subr.bf16.mxu0 %v1238
    %2310 = vmatpush1.bf16.msra.mxu0 %v1237
    %2311 = vmatprep.subr.bf16.mxu0 %v1242
    %2312 = vmatpush1.bf16.msra.mxu0 %v1241
    %2313 = vmatprep.subr.bf16.mxu0 %v1246
    %2314 = vmatpush1.bf16.msra.mxu0 %v1245
    %2315 = vmatprep.subr.bf16.mxu0 %v1250
    %2316 = vmatpush1.bf16.msra.mxu0 %v1249
    %2317 = vmatprep.subr.bf16.mxu0 %v1254
    %2318 = vmatpush1.bf16.msra.mxu0 %v1253
    %2319 = vmatprep.subr.bf16.mxu0 %v1258
    %2320 = vmatpush1.bf16.msra.mxu0 %v1257
    %2321 = vmatprep.subr.bf16.mxu0 %v1262
    %2322 = vmatpush1.bf16.msra.mxu0 %v1261
    %2323 = vmatprep.subr.bf16.mxu0 %v1266
    %2324 = vmatpush1.bf16.msra.mxu0 %v1265
    %2325 = vmatprep.subr.bf16.mxu0 %v1270
    %2326 = vmatpush1.bf16.msra.mxu0 %v1269
    %2327 = vmatprep.subr.bf16.mxu0 %v1274
    %2328 = vmatpush1.bf16.msra.mxu0 %v1273
    %2329 = vmatprep.subr.bf16.mxu0 %v1278
    %2330 = vmatpush1.bf16.msra.mxu0 %v1277
    %2331 = vmatprep.subr.bf16.mxu0 %v1282
    %2332 = vmatpush1.bf16.msra.mxu0 %v1281
    %2333 = vmatprep.subr.bf16.mxu0 %v1286
    %2334 = vmatpush1.bf16.msra.mxu0 %v1285
    %2335 = vmatprep.subr.bf16.mxu0 %v1290
    %2336 = vmatpush1.bf16.msra.mxu0 %v1289
    %2337 = vmatprep.mubr.bf16.mxu0 %v2303
    %2338 = vmatmul.mubr.bf16.gmra.mrb[0].mxu0 %v2203
    %v2339 = vpop.f32.mrb[0].mxu0
    %v2340 = vadd.f32 %v555, %v2339
    %v2341 = vpop.f32.mrb[0].mxu0
    %v2342 = vadd.f32 %v559, %v2341
    %v2343 = vpop.f32.mrb[0].mxu0
    %v2344 = vpop.f32.mrb[0].mxu0
    %2345 = vdwg.mxu0
    %2346 = vmatprep.subr.bf16.mxu0 %v1232
    %2347 = vmatpush1.bf16.msra.mxu0 %v1231
    %2348 = vmatprep.subr.bf16.mxu0 %v1236
    %2349 = vmatpush1.bf16.msra.mxu0 %v1235
    %2350 = vmatprep.subr.bf16.mxu0 %v1240
    %2351 = vmatpush1.bf16.msra.mxu0 %v1239
    %2352 = vmatprep.subr.bf16.mxu0 %v1244
    %2353 = vmatpush1.bf16.msra.mxu0 %v1243
    %2354 = vmatprep.subr.bf16.mxu0 %v1248
    %2355 = vmatpush1.bf16.msra.mxu0 %v1247
    %2356 = vmatprep.subr.bf16.mxu0 %v1252
    %2357 = vmatpush1.bf16.msra.mxu0 %v1251
    %2358 = vmatprep.subr.bf16.mxu0 %v1256
    %2359 = vmatpush1.bf16.msra.mxu0 %v1255
    %2360 = vmatprep.subr.bf16.mxu0 %v1260
    %2361 = vmatpush1.bf16.msra.mxu0 %v1259
    %2362 = vmatprep.subr.bf16.mxu0 %v1264
    %2363 = vmatpush1.bf16.msra.mxu0 %v1263
    %2364 = vmatprep.subr.bf16.mxu0 %v1268
    %2365 = vmatpush1.bf16.msra.mxu0 %v1267
    %2366 = vmatprep.subr.bf16.mxu0 %v1272
    %2367 = vmatpush1.bf16.msra.mxu0 %v1271
    %2368 = vmatprep.subr.bf16.mxu0 %v1276
    %2369 = vmatpush1.bf16.msra.mxu0 %v1275
    %2370 = vmatprep.subr.bf16.mxu0 %v1280
    %2371 = vmatpush1.bf16.msra.mxu0 %v1279
    %2372 = vmatprep.subr.bf16.mxu0 %v1284
    %2373 = vmatpush1.bf16.msra.mxu0 %v1283
    %2374 = vmatprep.subr.bf16.mxu0 %v1288
    %2375 = vmatpush1.bf16.msra.mxu0 %v1287
    %2376 = vmatprep.subr.bf16.mxu0 %v1292
    %2377 = vmatpush1.bf16.msra.mxu0 %v1291
    %2378 = vmatprep.mubr.bf16.mxu0 %v2303
    %2379 = vmatmul.mubr.bf16.gmra.mrb[0].mxu0 %v2203
    %v2380 = vpop.f32.mrb[0].mxu0
    %v2381 = vadd.f32 %v563, %v2380
    %v2382 = vpop.f32.mrb[0].mxu0
    %v2383 = vadd.f32 %v567, %v2382
    %v2384 = vpop.f32.mrb[0].mxu0
    %v2385 = vpop.f32.mrb[0].mxu0
    %2386 = vdwg.mxu0
    %v2391 = vrot.slane %v2298, 4
    %v2392 = vrot.slane %v2299, 4
    %v2393 = vrot.slane %v2300, 4
    %v2394 = vrot.slane %v2301, 4
    %v2403 = vrot.slane %v2340, 6
    %v2404 = vrot.slane %v2342, 6
    %v2405 = vrot.slane %v2381, 6
    %v2406 = vrot.slane %v2383, 6
    %v2411 = vsel %vm834, %v2391, %v2403
    %v2412 = vsel %vm834, %v2392, %v2404
    %v2413 = vsel %vm834, %v2393, %v2405
    %v2414 = vsel %vm834, %v2394, %v2406
    %v2415 = vxor.u32 %v2411, 2147483648
    %v2416 = vxor.u32 %v2412, 2147483648
    %v2417 = vxor.u32 %v2413, 2147483648
    %v2418 = vxor.u32 %v2414, 2147483648
    %v2419 = vmul.f32 %v2415, 1.442695
    %v2420 = vpow.pop %v2419
    %v2421 = vmul.f32 %v2416, 1.442695
    %v2422 = vpow.pop %v2421
    %v2423 = vmul.f32 %v2417, 1.442695
    %v2424 = vpow.pop %v2423
    %v2425 = vmul.f32 %v2418, 1.442695
    %v2426 = vpow.pop %v2425
    %v2427 = vadd.f32 %v2420, 1.0
    %v2428 = vadd.f32 %v2422, 1.0
    %v2429 = vadd.f32 %v2424, 1.0
    %v2430 = vadd.f32 %v2426, 1.0
    %v2431 = vrcp.pop %v2427
    %v2432 = vmul.f32 1.0, %v2431
    %v2433 = vrcp.pop %v2428
    %v2434 = vmul.f32 1.0, %v2433
    %v2435 = vrcp.pop %v2429
    %v2436 = vmul.f32 1.0, %v2435
    %v2437 = vrcp.pop %v2430
    %v2438 = vmul.f32 1.0, %v2437
    %v2439 = vmul.f32 %v2436, 2.0
    %v2440 = vsub.f32 %v2439, 1.0
    %v2441 = vmul.f32 %v2434, %v2200
    %v2442 = vmul.f32 %v2432, %v2440
    %v2443 = vadd.f32 %v2441, %v2442
    %v2444 = vtanh.pop %v2443
    %v2445 = vmul.f32 %v2438, %v2444
    %v2446 = vpack.c.bf16 %v2445, %v2445
    %2447 = vmatprep.subr.bf16.mxu0 %v338
    %2448 = vmatpush1.bf16.msra.mxu0 %v337
    %2449 = vmatprep.subr.bf16.mxu0 %v342
    %2450 = vmatpush1.bf16.msra.mxu0 %v341
    %2451 = vmatprep.subr.bf16.mxu0 %v346
    %2452 = vmatpush1.bf16.msra.mxu0 %v345
    %2453 = vmatprep.subr.bf16.mxu0 %v350
    %2454 = vmatpush1.bf16.msra.mxu0 %v349
    %2455 = vmatprep.subr.bf16.mxu0 %v354
    %2456 = vmatpush1.bf16.msra.mxu0 %v353
    %2457 = vmatprep.subr.bf16.mxu0 %v358
    %2458 = vmatpush1.bf16.msra.mxu0 %v357
    %2459 = vmatprep.subr.bf16.mxu0 %v362
    %2460 = vmatpush1.bf16.msra.mxu0 %v361
    %2461 = vmatprep.subr.bf16.mxu0 %v366
    %2462 = vmatpush1.bf16.msra.mxu0 %v365
    %2463 = vmatprep.subr.bf16.mxu0 0
    %2464 = vmatpush1.bf16.msra.mxu0 0
    %2465 = vmatprep.subr.bf16.mxu0 0
    %2466 = vmatpush1.bf16.msra.mxu0 0
    %2467 = vmatprep.subr.bf16.mxu0 0
    %2468 = vmatpush1.bf16.msra.mxu0 0
    %2469 = vmatprep.subr.bf16.mxu0 0
    %2470 = vmatpush1.bf16.msra.mxu0 0
    %2471 = vmatprep.subr.bf16.mxu0 0
    %2472 = vmatpush1.bf16.msra.mxu0 0
    %2473 = vmatprep.subr.bf16.mxu0 0
    %2474 = vmatpush1.bf16.msra.mxu0 0
    %2475 = vmatprep.subr.bf16.mxu0 0
    %2476 = vmatpush1.bf16.msra.mxu0 0
    %2477 = vmatprep.subr.bf16.mxu0 0
    %2478 = vmatpush1.bf16.msra.mxu0 0
    %2479 = vmatprep.mubr.bf16.mxu0 0
    %2480 = vmatmul.mubr.bf16.gmra.mrb[0].mxu0 %v2446
    %v2481 = vpop.f32.mrb[0].mxu0
    %v2482 = vadd.f32 0.0, %v2481
    %v2483 = vpop.f32.mrb[0].mxu0
    %v2484 = vadd.f32 0.0, %v2483
    %v2485 = vpop.f32.mrb[0].mxu0
    %v2486 = vpop.f32.mrb[0].mxu0
    %2487 = vdwg.mxu0
    %2488 = vmatprep.subr.bf16.mxu0 %v340
    %2489 = vmatpush1.bf16.msra.mxu0 %v339
    %2490 = vmatprep.subr.bf16.mxu0 %v344
    %2491 = vmatpush1.bf16.msra.mxu0 %v343
    %2492 = vmatprep.subr.bf16.mxu0 %v348
    %2493 = vmatpush1.bf16.msra.mxu0 %v347
    %2494 = vmatprep.subr.bf16.mxu0 %v352
    %2495 = vmatpush1.bf16.msra.mxu0 %v351
    %2496 = vmatprep.subr.bf16.mxu0 %v356
    %2497 = vmatpush1.bf16.msra.mxu0 %v355
    %2498 = vmatprep.subr.bf16.mxu0 %v360
    %2499 = vmatpush1.bf16.msra.mxu0 %v359
    %2500 = vmatprep.subr.bf16.mxu0 %v364
    %2501 = vmatpush1.bf16.msra.mxu0 %v363
    %2502 = vmatprep.subr.bf16.mxu0 %v368
    %2503 = vmatpush1.bf16.msra.mxu0 %v367
    %2504 = vmatprep.subr.bf16.mxu0 0
    %2505 = vmatpush1.bf16.msra.mxu0 0
    %2506 = vmatprep.subr.bf16.mxu0 0
    %2507 = vmatpush1.bf16.msra.mxu0 0
    %2508 = vmatprep.subr.bf16.mxu0 0
    %2509 = vmatpush1.bf16.msra.mxu0 0
    %2510 = vmatprep.subr.bf16.mxu0 0
    %2511 = vmatpush1.bf16.msra.mxu0 0
    %2512 = vmatprep.subr.bf16.mxu0 0
    %2513 = vmatpush1.bf16.msra.mxu0 0
    %2514 = vmatprep.subr.bf16.mxu0 0
    %2515 = vmatpush1.bf16.msra.mxu0 0
    %2516 = vmatprep.subr.bf16.mxu0 0
    %2517 = vmatpush1.bf16.msra.mxu0 0
    %2518 = vmatprep.subr.bf16.mxu0 0
    %2519 = vmatpush1.bf16.msra.mxu0 0
    %2520 = vmatprep.mubr.bf16.mxu0 0
    %2521 = vmatmul.mubr.bf16.gmra.mrb[0].mxu0 %v2446
    %v2522 = vpop.f32.mrb[0].mxu0
    %v2523 = vadd.f32 0.0, %v2522
    %v2524 = vpop.f32.mrb[0].mxu0
    %v2525 = vadd.f32 0.0, %v2524
    %v2526 = vpop.f32.mrb[0].mxu0
    %v2527 = vpop.f32.mrb[0].mxu0
    %2528 = vdwg.mxu0
    %v2533 = vrot.slane %v2482, 2
    %v2534 = vrot.slane %v2484, 2
    %v2535 = vrot.slane %v2523, 2
    %v2536 = vrot.slane %v2525, 2
    %v2541 = vadd.f32 %v130, %v2533
    %v2542 = vadd.f32 %v132, %v2534
    %v2543 = vadd.f32 %v173, %v2535
    %v2544 = vadd.f32 %v175, %v2536
    %v2546 = vrot.slane %v2446, 1
    %2548 = vmatprep.subr.bf16.mxu0 %v1230
    %2549 = vmatpush1.bf16.msra.mxu0 %v1229
    %2550 = vmatprep.subr.bf16.mxu0 %v1234
    %2551 = vmatpush1.bf16.msra.mxu0 %v1233
    %2552 = vmatprep.subr.bf16.mxu0 %v1238
    %2553 = vmatpush1.bf16.msra.mxu0 %v1237
    %2554 = vmatprep.subr.bf16.mxu0 %v1242
    %2555 = vmatpush1.bf16.msra.mxu0 %v1241
    %2556 = vmatprep.subr.bf16.mxu0 %v1246
    %2557 = vmatpush1.bf16.msra.mxu0 %v1245
    %2558 = vmatprep.subr.bf16.mxu0 %v1250
    %2559 = vmatpush1.bf16.msra.mxu0 %v1249
    %2560 = vmatprep.subr.bf16.mxu0 %v1254
    %2561 = vmatpush1.bf16.msra.mxu0 %v1253
    %2562 = vmatprep.subr.bf16.mxu0 %v1258
    %2563 = vmatpush1.bf16.msra.mxu0 %v1257
    %2564 = vmatprep.subr.bf16.mxu0 %v1262
    %2565 = vmatpush1.bf16.msra.mxu0 %v1261
    %2566 = vmatprep.subr.bf16.mxu0 %v1266
    %2567 = vmatpush1.bf16.msra.mxu0 %v1265
    %2568 = vmatprep.subr.bf16.mxu0 %v1270
    %2569 = vmatpush1.bf16.msra.mxu0 %v1269
    %2570 = vmatprep.subr.bf16.mxu0 %v1274
    %2571 = vmatpush1.bf16.msra.mxu0 %v1273
    %2572 = vmatprep.subr.bf16.mxu0 %v1278
    %2573 = vmatpush1.bf16.msra.mxu0 %v1277
    %2574 = vmatprep.subr.bf16.mxu0 %v1282
    %2575 = vmatpush1.bf16.msra.mxu0 %v1281
    %2576 = vmatprep.subr.bf16.mxu0 %v1286
    %2577 = vmatpush1.bf16.msra.mxu0 %v1285
    %2578 = vmatprep.subr.bf16.mxu0 %v1290
    %2579 = vmatpush1.bf16.msra.mxu0 %v1289
    %2580 = vmatprep.mubr.bf16.mxu0 %v2546
    %2581 = vmatmul.mubr.bf16.gmra.mrb[0].mxu0 %v2446
    %v2582 = vpop.f32.mrb[0].mxu0
    %v2583 = vadd.f32 %v555, %v2582
    %v2584 = vpop.f32.mrb[0].mxu0
    %v2585 = vadd.f32 %v559, %v2584
    %v2586 = vpop.f32.mrb[0].mxu0
    %v2587 = vpop.f32.mrb[0].mxu0
    %2588 = vdwg.mxu0
    %2589 = vmatprep.subr.bf16.mxu0 %v1232
    %2590 = vmatpush1.bf16.msra.mxu0 %v1231
    %2591 = vmatprep.subr.bf16.mxu0 %v1236
    %2592 = vmatpush1.bf16.msra.mxu0 %v1235
    %2593 = vmatprep.subr.bf16.mxu0 %v1240
    %2594 = vmatpush1.bf16.msra.mxu0 %v1239
    %2595 = vmatprep.subr.bf16.mxu0 %v1244
    %2596 = vmatpush1.bf16.msra.mxu0 %v1243
    %2597 = vmatprep.subr.bf16.mxu0 %v1248
    %2598 = vmatpush1.bf16.msra.mxu0 %v1247
    %2599 = vmatprep.subr.bf16.mxu0 %v1252
    %2600 = vmatpush1.bf16.msra.mxu0 %v1251
    %2601 = vmatprep.subr.bf16.mxu0 %v1256
    %2602 = vmatpush1.bf16.msra.mxu0 %v1255
    %2603 = vmatprep.subr.bf16.mxu0 %v1260
    %2604 = vmatpush1.bf16.msra.mxu0 %v1259
    %2605 = vmatprep.subr.bf16.mxu0 %v1264
    %2606 = vmatpush1.bf16.msra.mxu0 %v1263
    %2607 = vmatprep.subr.bf16.mxu0 %v1268
    %2608 = vmatpush1.bf16.msra.mxu0 %v1267
    %2609 = vmatprep.subr.bf16.mxu0 %v1272
    %2610 = vmatpush1.bf16.msra.mxu0 %v1271
    %2611 = vmatprep.subr.bf16.mxu0 %v1276
    %2612 = vmatpush1.bf16.msra.mxu0 %v1275
    %2613 = vmatprep.subr.bf16.mxu0 %v1280
    %2614 = vmatpush1.bf16.msra.mxu0 %v1279
    %2615 = vmatprep.subr.bf16.mxu0 %v1284
    %2616 = vmatpush1.bf16.msra.mxu0 %v1283
    %2617 = vmatprep.subr.bf16.mxu0 %v1288
    %2618 = vmatpush1.bf16.msra.mxu0 %v1287
    %2619 = vmatprep.subr.bf16.mxu0 %v1292
    %2620 = vmatpush1.bf16.msra.mxu0 %v1291
    %2621 = vmatprep.mubr.bf16.mxu0 %v2546
    %2622 = vmatmul.mubr.bf16.gmra.mrb[0].mxu0 %v2446
    %v2623 = vpop.f32.mrb[0].mxu0
    %v2624 = vadd.f32 %v563, %v2623
    %v2625 = vpop.f32.mrb[0].mxu0
    %v2626 = vadd.f32 %v567, %v2625
    %v2627 = vpop.f32.mrb[0].mxu0
    %v2628 = vpop.f32.mrb[0].mxu0
    %2629 = vdwg.mxu0
    %v2634 = vrot.slane %v2541, 6
    %v2635 = vrot.slane %v2542, 6
    %v2636 = vrot.slane %v2543, 6
    %v2637 = vrot.slane %v2544, 6
    %v2646 = vrot.slane %v2583, 6
    %v2647 = vrot.slane %v2585, 6
    %v2648 = vrot.slane %v2624, 6
    %v2649 = vrot.slane %v2626, 6
    %v2654 = vsel %vm834, %v2634, %v2646
    %v2655 = vsel %vm834, %v2635, %v2647
    %v2656 = vsel %vm834, %v2636, %v2648
    %v2657 = vsel %vm834, %v2637, %v2649
    %v2658 = vxor.u32 %v2654, 2147483648
    %v2659 = vxor.u32 %v2655, 2147483648
    %v2660 = vxor.u32 %v2656, 2147483648
    %v2661 = vxor.u32 %v2657, 2147483648
    %v2662 = vmul.f32 %v2658, 1.442695
    %v2663 = vpow.pop %v2662
    %v2664 = vmul.f32 %v2659, 1.442695
    %v2665 = vpow.pop %v2664
    %v2666 = vmul.f32 %v2660, 1.442695
    %v2667 = vpow.pop %v2666
    %v2668 = vmul.f32 %v2661, 1.442695
    %v2669 = vpow.pop %v2668
    %v2670 = vadd.f32 %v2663, 1.0
    %v2671 = vadd.f32 %v2665, 1.0
    %v2672 = vadd.f32 %v2667, 1.0
    %v2673 = vadd.f32 %v2669, 1.0
    %v2674 = vrcp.pop %v2670
    %v2675 = vmul.f32 1.0, %v2674
    %v2676 = vrcp.pop %v2671
    %v2677 = vmul.f32 1.0, %v2676
    %v2678 = vrcp.pop %v2672
    %v2679 = vmul.f32 1.0, %v2678
    %v2680 = vrcp.pop %v2673
    %v2681 = vmul.f32 1.0, %v2680
    %v2682 = vmul.f32 %v2679, 2.0
    %v2683 = vsub.f32 %v2682, 1.0
    %v2684 = vmul.f32 %v2677, %v2443
    %v2685 = vmul.f32 %v2675, %v2683
    %v2686 = vadd.f32 %v2684, %v2685
    %v2687 = vtanh.pop %v2686
    %v2688 = vmul.f32 %v2681, %v2687
    %v2689 = vpack.c.bf16 %v2688, %v2688
    %v2691 = vrot.slane %v2689, 1
    %2693 = vmatprep.subr.bf16.mxu0 %v1230
    %2694 = vmatpush1.bf16.msra.mxu0 %v1229
    %2695 = vmatprep.subr.bf16.mxu0 %v1234
    %2696 = vmatpush1.bf16.msra.mxu0 %v1233
    %2697 = vmatprep.subr.bf16.mxu0 %v1238
    %2698 = vmatpush1.bf16.msra.mxu0 %v1237
    %2699 = vmatprep.subr.bf16.mxu0 %v1242
    %2700 = vmatpush1.bf16.msra.mxu0 %v1241
    %2701 = vmatprep.subr.bf16.mxu0 %v1246
    %2702 = vmatpush1.bf16.msra.mxu0 %v1245
    %2703 = vmatprep.subr.bf16.mxu0 %v1250
    %2704 = vmatpush1.bf16.msra.mxu0 %v1249
    %2705 = vmatprep.subr.bf16.mxu0 %v1254
    %2706 = vmatpush1.bf16.msra.mxu0 %v1253
    %2707 = vmatprep.subr.bf16.mxu0 %v1258
    %2708 = vmatpush1.bf16.msra.mxu0 %v1257
    %2709 = vmatprep.subr.bf16.mxu0 %v1262
    %2710 = vmatpush1.bf16.msra.mxu0 %v1261
    %2711 = vmatprep.subr.bf16.mxu0 %v1266
    %2712 = vmatpush1.bf16.msra.mxu0 %v1265
    %2713 = vmatprep.subr.bf16.mxu0 %v1270
    %2714 = vmatpush1.bf16.msra.mxu0 %v1269
    %2715 = vmatprep.subr.bf16.mxu0 %v1274
    %2716 = vmatpush1.bf16.msra.mxu0 %v1273
    %2717 = vmatprep.subr.bf16.mxu0 %v1278
    %2718 = vmatpush1.bf16.msra.mxu0 %v1277
    %2719 = vmatprep.subr.bf16.mxu0 %v1282
    %2720 = vmatpush1.bf16.msra.mxu0 %v1281
    %2721 = vmatprep.subr.bf16.mxu0 %v1286
    %2722 = vmatpush1.bf16.msra.mxu0 %v1285
    %2723 = vmatprep.subr.bf16.mxu0 %v1290
    %2724 = vmatpush1.bf16.msra.mxu0 %v1289
    %2725 = vmatprep.mubr.bf16.mxu0 %v2691
    %2726 = vmatmul.mubr.bf16.gmra.mrb[0].mxu0 %v2689
    %v2727 = vpop.f32.mrb[0].mxu0
    %v2728 = vadd.f32 %v555, %v2727
    %v2729 = vpop.f32.mrb[0].mxu0
    %v2730 = vadd.f32 %v559, %v2729
    %v2731 = vpop.f32.mrb[0].mxu0
    %v2732 = vpop.f32.mrb[0].mxu0
    %2733 = vdwg.mxu0
    %2734 = vmatprep.subr.bf16.mxu0 %v1232
    %2735 = vmatpush1.bf16.msra.mxu0 %v1231
    %2736 = vmatprep.subr.bf16.mxu0 %v1236
    %2737 = vmatpush1.bf16.msra.mxu0 %v1235
    %2738 = vmatprep.subr.bf16.mxu0 %v1240
    %2739 = vmatpush1.bf16.msra.mxu0 %v1239
    %2740 = vmatprep.subr.bf16.mxu0 %v1244
    %2741 = vmatpush1.bf16.msra.mxu0 %v1243
    %2742 = vmatprep.subr.bf16.mxu0 %v1248
    %2743 = vmatpush1.bf16.msra.mxu0 %v1247
    %2744 = vmatprep.subr.bf16.mxu0 %v1252
    %2745 = vmatpush1.bf16.msra.mxu0 %v1251
    %2746 = vmatprep.subr.bf16.mxu0 %v1256
    %2747 = vmatpush1.bf16.msra.mxu0 %v1255
    %2748 = vmatprep.subr.bf16.mxu0 %v1260
    %2749 = vmatpush1.bf16.msra.mxu0 %v1259
    %2750 = vmatprep.subr.bf16.mxu0 %v1264
    %2751 = vmatpush1.bf16.msra.mxu0 %v1263
    %2752 = vmatprep.subr.bf16.mxu0 %v1268
    %2753 = vmatpush1.bf16.msra.mxu0 %v1267
    %2754 = vmatprep.subr.bf16.mxu0 %v1272
    %2755 = vmatpush1.bf16.msra.mxu0 %v1271
    %2756 = vmatprep.subr.bf16.mxu0 %v1276
    %2757 = vmatpush1.bf16.msra.mxu0 %v1275
    %2758 = vmatprep.subr.bf16.mxu0 %v1280
    %2759 = vmatpush1.bf16.msra.mxu0 %v1279
    %2760 = vmatprep.subr.bf16.mxu0 %v1284
    %2761 = vmatpush1.bf16.msra.mxu0 %v1283
    %2762 = vmatprep.subr.bf16.mxu0 %v1288
    %2763 = vmatpush1.bf16.msra.mxu0 %v1287
    %2764 = vmatprep.subr.bf16.mxu0 %v1292
    %2765 = vmatpush1.bf16.msra.mxu0 %v1291
    %2766 = vmatprep.mubr.bf16.mxu0 %v2691
    %2767 = vmatmul.mubr.bf16.gmra.mrb[0].mxu0 %v2689
    %v2768 = vpop.f32.mrb[0].mxu0
    %v2769 = vadd.f32 %v563, %v2768
    %v2770 = vpop.f32.mrb[0].mxu0
    %v2771 = vadd.f32 %v567, %v2770
    %v2772 = vpop.f32.mrb[0].mxu0
    %v2773 = vpop.f32.mrb[0].mxu0
    %2774 = vdwg.mxu0
    %v2775 = vxor.u32 %v2728, 2147483648
    %v2776 = vxor.u32 %v2730, 2147483648
    %v2777 = vxor.u32 %v2769, 2147483648
    %v2778 = vxor.u32 %v2771, 2147483648
    %v2779 = vmul.f32 %v2775, 1.442695
    %v2780 = vpow.pop %v2779
    %v2781 = vmul.f32 %v2776, 1.442695
    %v2782 = vpow.pop %v2781
    %v2783 = vmul.f32 %v2777, 1.442695
    %v2784 = vpow.pop %v2783
    %v2785 = vmul.f32 %v2778, 1.442695
    %v2786 = vpow.pop %v2785
    %v2787 = vadd.f32 %v2780, 1.0
    %v2788 = vadd.f32 %v2782, 1.0
    %v2789 = vadd.f32 %v2784, 1.0
    %v2790 = vadd.f32 %v2786, 1.0
    %v2791 = vrcp.pop %v2787
    %v2792 = vmul.f32 1.0, %v2791
    %v2793 = vrcp.pop %v2788
    %v2794 = vmul.f32 1.0, %v2793
    %v2795 = vrcp.pop %v2789
    %v2796 = vmul.f32 1.0, %v2795
    %v2797 = vrcp.pop %v2790
    %v2798 = vmul.f32 1.0, %v2797
    %v2799 = vmul.f32 %v2796, 2.0
    %v2800 = vsub.f32 %v2799, 1.0
    %v2802 = vrot.slane %v2686, 2
    %v2804 = vmul.f32 %v2794, %v2802
    %v2805 = vmul.f32 %v2792, %v2800
    %v2806 = vadd.f32 %v2804, %v2805
    %v2807 = vtanh.pop %v2806
    %v2808 = vmul.f32 %v2798, %v2807
    %v2809 = vpack.c.bf16 %v2808, %v2808
    %s2810 = scalar_lea.vmem %s1, 1024
    %v2811 = vld [vmem:[%s2810] sm:$0xf]
    %v2812 = vld [vmem:[%s2810 + $0x10] sm:$0xf]
    %v2813 = vld [vmem:[%s2810 + $0x20] sm:$0xf]
    %v2814 = vld [vmem:[%s2810 + $0x30] sm:$0xf]
    %v2815 = vld [vmem:[%s2810 + $0x40] sm:$0xf]
    %v2816 = vld [vmem:[%s2810 + $0x50] sm:$0xf]
    %v2817 = vld [vmem:[%s2810 + $0x60] sm:$0xf]
    %v2818 = vld [vmem:[%s2810 + $0x70] sm:$0xf]
    %v2819 = vld [vmem:[%s2810 + $0x80] sm:$0xf]
    %v2820 = vld [vmem:[%s2810 + $0x90] sm:$0xf]
    %v2821 = vld [vmem:[%s2810 + $0xa0] sm:$0xf]
    %v2822 = vld [vmem:[%s2810 + $0xb0] sm:$0xf]
    %v2823 = vld [vmem:[%s2810 + $0xc0] sm:$0xf]
    %v2824 = vld [vmem:[%s2810 + $0xd0] sm:$0xf]
    %v2825 = vld [vmem:[%s2810 + $0xe0] sm:$0xf]
    %v2826 = vld [vmem:[%s2810 + $0xf0] sm:$0xf]
    %v2827 = vlaneseq
    %v2828 = vshrl.u32 %v2827, 7
    %v2829 = vsub.s32 2, %v2828
    %v2830 = vrot.slane %v16, %v2829
    %v2847 = vunpack.c.l.b16 %v2811
    %v2848 = vunpack.c.l.b16 %v2812
    %v2849 = vunpack.c.l.b16 %v2813
    %v2850 = vunpack.c.l.b16 %v2814
    %v2851 = vunpack.c.l.b16 %v2815
    %v2852 = vunpack.c.l.b16 %v2816
    %v2853 = vunpack.c.l.b16 %v2817
    %v2854 = vunpack.c.l.b16 %v2818
    %v2855 = vunpack.c.l.b16 %v2819
    %v2856 = vunpack.c.l.b16 %v2820
    %v2857 = vunpack.c.l.b16 %v2821
    %v2858 = vunpack.c.l.b16 %v2822
    %v2859 = vunpack.c.l.b16 %v2823
    %v2860 = vunpack.c.l.b16 %v2824
    %v2861 = vunpack.c.l.b16 %v2825
    %v2862 = vunpack.c.l.b16 %v2826
    %v2863 = vpack.c.b16 %v2848, %v2847
    %v2864 = vpack.c.b16 %v2850, %v2849
    %v2865 = vpack.c.b16 %v2852, %v2851
    %v2866 = vpack.c.b16 %v2854, %v2853
    %v2867 = vpack.c.b16 %v2856, %v2855
    %v2868 = vpack.c.b16 %v2858, %v2857
    %v2869 = vpack.c.b16 %v2860, %v2859
    %v2870 = vpack.c.b16 %v2862, %v2861
    %2879 = vmatprep.subr.bf16.mxu0 0
    %2880 = vmatpush1.bf16.msra.mxu0 %v2863
    %2881 = vmatprep.subr.bf16.mxu0 0
    %2882 = vmatpush1.bf16.msra.mxu0 %v2864
    %2883 = vmatprep.subr.bf16.mxu0 0
    %2884 = vmatpush1.bf16.msra.mxu0 %v2865
    %2885 = vmatprep.subr.bf16.mxu0 0
    %2886 = vmatpush1.bf16.msra.mxu0 %v2866
    %2887 = vmatprep.subr.bf16.mxu0 0
    %2888 = vmatpush1.bf16.msra.mxu0 %v2867
    %2889 = vmatprep.subr.bf16.mxu0 0
    %2890 = vmatpush1.bf16.msra.mxu0 %v2868
    %2891 = vmatprep.subr.bf16.mxu0 0
    %2892 = vmatpush1.bf16.msra.mxu0 %v2869
    %2893 = vmatprep.subr.bf16.mxu0 0
    %2894 = vmatpush1.bf16.msra.mxu0 %v2870
    %2895 = vmatprep.subr.bf16.mxu0 0
    %2896 = vmatpush1.bf16.msra.mxu0 0
    %2897 = vmatprep.subr.bf16.mxu0 0
    %2898 = vmatpush1.bf16.msra.mxu0 0
    %2899 = vmatprep.subr.bf16.mxu0 0
    %2900 = vmatpush1.bf16.msra.mxu0 0
    %2901 = vmatprep.subr.bf16.mxu0 0
    %2902 = vmatpush1.bf16.msra.mxu0 0
    %2903 = vmatprep.subr.bf16.mxu0 0
    %2904 = vmatpush1.bf16.msra.mxu0 0
    %2905 = vmatprep.subr.bf16.mxu0 0
    %2906 = vmatpush1.bf16.msra.mxu0 0
    %2907 = vmatprep.subr.bf16.mxu0 0
    %2908 = vmatpush1.bf16.msra.mxu0 0
    %2909 = vmatprep.subr.bf16.mxu0 0
    %2910 = vmatpush1.bf16.msra.mxu0 0
    %2911 = vmatprep.mubr.bf16.mxu0 0
    %2912 = vmatmul.mubr.bf16.gmra.mrb[0].mxu0 %v2809
    %v2913 = vpop.f32.mrb[0].mxu0
    %v2914 = vadd.f32 %v2830, %v2913
    %v2915 = vpop.f32.mrb[0].mxu0
    %v2916 = vpop.f32.mrb[0].mxu0
    %v2917 = vpop.f32.mrb[0].mxu0
    %2918 = vdwg.mxu0
    %2919 = vst [vmem:[#allocation2] sm:$0x3] %v2914
    // Predicated region
    $region14: #{forward.1} parent=1 // pred_check
      _
    $region15: #{forward.1} parent=1 // pred_check_branch
      %2921 = sbr.rel (0) target = $region17
    $region16: #{forward.1} parent=1 // pred_region
      %s2923 = ssub.s32 32, 32
      %2924 = vsyncadd [#allocation3], %s2923
      %s2926 = sshll.u32 [#allocation2], 4
      %s2927 = int_to_ptr.vmem [resolvable:$true] %s2926
      %2929 = dma.vmem_to_hbm [thread:$0]  %s2927, 32, %s3, [#allocation3]
    $region17: #{forward.1} parent=1 // pred_fallthru
      _
    // Predicated region
    $region18: #{forward.1} parent=1 // pred_check
      _
    $region19: #{forward.1} parent=1 // pred_check_branch
      %2931 = sbr.rel (0) target = $region21
    $region20: #{forward.1} parent=1 // pred_region
      %2932 = dma.done [#allocation3], 32
    $region21: #{forward.1} parent=1 // pred_fallthru
      _
    %2933 = vsyncpa [#allocation3], 1

</llo_original>
